<compile_context>
chip_gen: v5e
topology: v5e:2x2
jax: 0.10.0
libtpu: 0.0.40
codegen_flags: <defaults>
</compile_context>

<pallas_src>
import math

import jax
import jax.numpy as jnp
import numpy as np
from jax.experimental import pallas as pl
from jax.experimental.pallas import tpu as pltpu

# ---- configuration (small shapes consistent with the module) --------------
META_V_DIM = 8
META_V_EMB_DIM = 16
BASE_V_DIM = 16
OUTPUT_DIM = 8
HYPER_HIDDEN_DIM = 32
DYNAMIC_HIDDEN_DIM = 32
BATCH = 4

# (head name, head output dim) in the order they are consumed.
HEAD_SPECS = (
    ("input_w", DYNAMIC_HIDDEN_DIM * BASE_V_DIM),               # 512
    ("input_b", DYNAMIC_HIDDEN_DIM),                            # 32
    ("input_s", DYNAMIC_HIDDEN_DIM),                            # 32
    ("hidden_w", DYNAMIC_HIDDEN_DIM * DYNAMIC_HIDDEN_DIM),      # 1024
    ("hidden_b", DYNAMIC_HIDDEN_DIM),                           # 32
    ("hidden_s", DYNAMIC_HIDDEN_DIM),                           # 32
    ("last_w", OUTPUT_DIM * DYNAMIC_HIDDEN_DIM),                # 256
    ("last_b", OUTPUT_DIM),                                     # 8
    ("last_s", OUTPUT_DIM),                                     # 8
)
N_HEADS = len(HEAD_SPECS)

LANE = 128
OUT_PAD = LANE                                     # lane-dense kernel output


def _ceil_to(x, m):
    return ((x + m - 1) // m) * m


# Compacted hyper-hidden packing: head i occupies hid[:, i*32:(i+1)*32].
H_SLOT = HYPER_HIDDEN_DIM                          # 32
H_CAT = N_HEADS * H_SLOT                           # 288

# Per-head output segments in the packed/block-diag second layer (128-aligned).
SEG_PAD = tuple(_ceil_to(d, LANE) for _, d in HEAD_SPECS)
_offs, _acc = [], 0
for _p in SEG_PAD:
    _offs.append(_acc)
    _acc += _p
SEG_OFF = tuple(_offs)      # (0, 512, 640, 768, 1792, 1920, 2048, 2304, 2432)
SEG_TOTAL = _acc            # 2560


# ---------------------------------------------------------------------------
# Fused kernel: hyper-net (2 matmuls) + per-example dynamic 3-layer MLP
# (3 reduce matmuls), reshape/transpose free.
# ---------------------------------------------------------------------------
def fused_kernel(meta_ref, base_ref, w1_ref, b1_ref, w2_ref, b2_ref,
                 r1_ref, r2_ref, r3_ref, o_ref):
    f32 = jnp.float32
    D, K, O = DYNAMIC_HIDDEN_DIM, BASE_V_DIM, OUTPUT_DIM

    def lane_tile(v, n):
        # (PB, w) -> (PB, n*w): repeat the lane block n times (n = power of 2)
        # via log2(n) lane concatenations (vector copies only, no MXU/XLU).
        while n > 1:
            v = jnp.concatenate([v, v], axis=-1)
            n //= 2
        return v

    # ---- hyper layer 1 (embedding pre-folded host-side): (PB, H_CAT) -------
    hid = jnp.maximum(
        jnp.dot(meta_ref[...], w1_ref[...], preferred_element_type=f32)
        + b1_ref[...], 0.0)

    # ---- hyper layer 2: all 9 heads in ONE block-diagonal matmul ------------
    fc = jnp.dot(hid, w2_ref[...], preferred_element_type=f32) + b2_ref[...]

    # 128-aligned static slices of the lane-dense (PB, SEG_TOTAL) result.
    w1f = fc[:, SEG_OFF[0]:SEG_OFF[0] + D * K]          # (PB, 512)
    b1d = fc[:, SEG_OFF[1]:SEG_OFF[1] + D]              # (PB, 32)
    s1d = fc[:, SEG_OFF[2]:SEG_OFF[2] + D]              # (PB, 32)
    w2f = fc[:, SEG_OFF[3]:SEG_OFF[3] + D * D]          # (PB, 1024)
    b2d = fc[:, SEG_OFF[4]:SEG_OFF[4] + D]              # (PB, 32)
    s2d = fc[:, SEG_OFF[5]:SEG_OFF[5] + D]              # (PB, 32)
    w3f = fc[:, SEG_OFF[6]:SEG_OFF[6] + O * D]          # (PB, 256)
    b3d = fc[:, SEG_OFF[7]:SEG_OFF[7] + OUT_PAD]        # (PB, 128), pad lanes 0
    s3d = fc[:, SEG_OFF[8]:SEG_OFF[8] + OUT_PAD]        # (PB, 128), pad lanes 0

    # ---- dynamic per-example MLP -------------------------------------------
    # y[b, d] = sum_k w_flat[b, d*k_dim + k] * h[b, k]
    #         = ((w_flat * tile(h)) @ R)[b, d]   with R precomputed host-side.
    x = base_ref[...]                                                  # (PB, K)

    # layer 1: relu((W1 @ x) * (1 + s1) + b1)
    y1 = jnp.dot(w1f * lane_tile(x, D), r1_ref[...],
                 preferred_element_type=f32)                           # (PB, D)
    h1 = jnp.maximum(y1 * (1.0 + s1d) + b1d, 0.0)

    # layer 2: relu((W2 @ h1) * (1 + s2) + b2)
    y2 = jnp.dot(w2f * lane_tile(h1, D), r2_ref[...],
                 preferred_element_type=f32)                           # (PB, D)
    h2 = jnp.maximum(y2 * (1.0 + s2d) + b2d, 0.0)

    # layer 3: (W3 @ h2) * (1 + s3) + b3   (lanes >= O are exactly zero)
    y3 = jnp.dot(w3f * lane_tile(h2, O), r3_ref[...],
                 preferred_element_type=f32)                           # (PB, 128)
    o_ref[...] = y3 * (1.0 + s3d) + b3d


def _pallas_forward(meta_p, base_p, packed):
    pb = meta_p.shape[0]
    vmem = pl.BlockSpec(memory_space=pltpu.MemorySpace.VMEM)
    return pl.pallas_call(
        fused_kernel,
        out_shape=jax.ShapeDtypeStruct((pb, OUT_PAD), jnp.float32),
        in_specs=[vmem] * 9,
        out_specs=vmem,
    )(meta_p, base_p,
      packed["w1_fold"], packed["b1_fold"],
      packed["w2_bd"], packed["b2_cat"],
      packed["r1"], packed["r2"], packed["r3"])


@jax.jit
def hypernet_forward(meta_v, base_v, packed):
    B = meta_v.shape[0]
    pb = max(8, _ceil_to(B, 8))                    # pad batch to sublane multiple
    meta_p = jnp.pad(meta_v.astype(jnp.float32), ((0, pb - B), (0, 0)))
    base_p = jnp.pad(base_v.astype(jnp.float32), ((0, pb - B), (0, 0)))
    out = _pallas_forward(meta_p, base_p, packed)
    return out[:B, :OUTPUT_DIM]


# ---------------------------------------------------------------------------
# Host-side, one-time parameter packing.
# ---------------------------------------------------------------------------
def _reduce_mat(k_dim, n, n_cols):
    # (n*k_dim, n_cols): R[j, d] = 1 iff (j // k_dim) == d  (segment sum).
    j = np.arange(n * k_dim)[:, None]
    d = np.arange(n_cols)[None, :]
    return jnp.asarray((j // k_dim == d).astype(np.float32))


def pack_params(params):
    w1_cat = np.zeros((META_V_EMB_DIM, H_CAT), np.float32)
    b1_cat = np.zeros((1, H_CAT), np.float32)
    w2_bd = np.zeros((H_CAT, SEG_TOTAL), np.float32)      # block-diagonal
    b2_cat = np.zeros((1, SEG_TOTAL), np.float32)
    for i, (name, out_d) in enumerate(HEAD_SPECS):
        h0 = i * H_SLOT
        w1_cat[:, h0:h0 + HYPER_HIDDEN_DIM] = np.asarray(params[name + "_w1"])
        b1_cat[:, h0:h0 + HYPER_HIDDEN_DIM] = np.asarray(params[name + "_b1"])
        w2_bd[h0:h0 + HYPER_HIDDEN_DIM,
              SEG_OFF[i]:SEG_OFF[i] + out_d] = np.asarray(params[name + "_w2"])
        b2_cat[:, SEG_OFF[i]:SEG_OFF[i] + out_d] = np.asarray(params[name + "_b2"])

    # Exact fold of the (purely linear) embedding into hyper layer 1.
    # NOTE: only valid because clip_emb=False and pos_emb=None (module defaults).
    w_emb = np.asarray(params["w_emb"])
    b_emb = np.asarray(params["b_emb"])
    w1_fold = w_emb @ w1_cat                               # (META_V_DIM, H_CAT)
    b1_fold = b_emb @ w1_cat + b1_cat                      # (1, H_CAT)

    return {
        "w1_fold": jnp.asarray(w1_fold),
        "b1_fold": jnp.asarray(b1_fold),
        "w2_bd": jnp.asarray(w2_bd),
        "b2_cat": jnp.asarray(b2_cat),
        "r1": _reduce_mat(BASE_V_DIM, DYNAMIC_HIDDEN_DIM, DYNAMIC_HIDDEN_DIM),
        "r2": _reduce_mat(DYNAMIC_HIDDEN_DIM, DYNAMIC_HIDDEN_DIM,
                          DYNAMIC_HIDDEN_DIM),
        "r3": _reduce_mat(DYNAMIC_HIDDEN_DIM, OUTPUT_DIM, OUT_PAD),
    }


# ---------------------------------------------------------------------------
# Deterministic parameter init (mirrors the module's uniform(+-1/sqrt(2*fan_in))
# weight init and PyTorch's default uniform(+-1/sqrt(fan_in)) bias init).
# ---------------------------------------------------------------------------
def _uniform(key, shape, bound):
    return jax.random.uniform(key, shape, jnp.float32, -bound, bound)


def init_params(key):
    params = {}
    keys = iter(jax.random.split(key, 4 + 4 * N_HEADS))

    fan_in = META_V_DIM
    params["w_emb"] = _uniform(next(keys), (META_V_DIM, META_V_EMB_DIM),
                               1.0 / math.sqrt(fan_in))
    params["b_emb"] = _uniform(next(keys), (1, META_V_EMB_DIM),
                               1.0 / math.sqrt(fan_in))

    for name, out_dim in HEAD_SPECS:
        fi1 = META_V_EMB_DIM
        params[name + "_w1"] = _uniform(next(keys),
                                        (META_V_EMB_DIM, HYPER_HIDDEN_DIM),
                                        1.0 / math.sqrt(2 * fi1))
        params[name + "_b1"] = _uniform(next(keys), (1, HYPER_HIDDEN_DIM),
                                        1.0 / math.sqrt(fi1))
        fi2 = HYPER_HIDDEN_DIM
        params[name + "_w2"] = _uniform(next(keys),
                                        (HYPER_HIDDEN_DIM, out_dim),
                                        1.0 / math.sqrt(2 * fi2))
        params[name + "_b2"] = _uniform(next(keys), (1, out_dim),
                                        1.0 / math.sqrt(fi2))
    return params


# ---------------------------------------------------------------------------
# Pure-JAX reference (mirrors the PyTorch forward) for verification.
# Uses the UNPACKED params, so it also validates packing + folding.
# ---------------------------------------------------------------------------
def reference_forward(meta_v, base_v, params):
    emb = meta_v @ params["w_emb"] + params["b_emb"]

    def head(name):
        h = jnp.maximum(emb @ params[name + "_w1"] + params[name + "_b1"], 0.0)
        return h @ params[name + "_w2"] + params[name + "_b2"]

    B = meta_v.shape[0]
    D, Bd, O = DYNAMIC_HIDDEN_DIM, BASE_V_DIM, OUTPUT_DIM
    w1 = head("input_w").reshape(B, D, Bd)
    b1 = head("input_b").reshape(B, D, 1)
    s1 = 1.0 + head("input_s").reshape(B, D, 1)
    w2 = head("hidden_w").reshape(B, D, D)
    b2 = head("hidden_b").reshape(B, D, 1)
    s2 = 1.0 + head("hidden_s").reshape(B, D, 1)
    w3 = head("last_w").reshape(B, O, D)
    b3 = head("last_b").reshape(B, O, 1)
    s3 = 1.0 + head("last_s").reshape(B, O, 1)

    out = jnp.maximum(
        jnp.einsum("bdk,bk->bd", w1, base_v)[..., None] * s1 + b1, 0.0)
    out = jnp.maximum(jnp.einsum("bde,bel->bdl", w2, out) * s2 + b2, 0.0)
    out = jnp.einsum("bod,bdl->bol", w3, out) * s3 + b3
    return out[..., 0]


# TODO(synk): clip_emb=True (tanh) and pos_emb paths are not exercised by the
# module defaults and are not implemented (the embedding fold requires the
# embedding to stay purely linear).

if __name__ == "__main__":
    key = jax.random.PRNGKey(0)
    k_params, k_meta, k_base = jax.random.split(key, 3)

    params = init_params(k_params)
    packed = pack_params(params)
    meta_v = jax.random.normal(k_meta, (BATCH, META_V_DIM), jnp.float32)
    base_v = jax.random.normal(k_base, (BATCH, BASE_V_DIM), jnp.float32)

    out = jax.block_until_ready(hypernet_forward(meta_v, base_v, packed))
    ref = jax.block_until_ready(reference_forward(meta_v, base_v, params))

    np.testing.assert_allclose(np.asarray(out), np.asarray(ref),
                               rtol=1e-4, atol=1e-5)
    assert out.shape == (BATCH, OUTPUT_DIM)
    print("KERNEL_OK")
</pallas_src>

<mosaic_0001>
module attributes {stable_mosaic.version = 11 : i64} {
  func.func @fused_kernel(%arg0: memref<8x8xf32, #tpu.memory_space<vmem>>, %arg1: memref<8x16xf32, #tpu.memory_space<vmem>>, %arg2: memref<8x288xf32, #tpu.memory_space<vmem>>, %arg3: memref<1x288xf32, #tpu.memory_space<vmem>>, %arg4: memref<288x2560xf32, #tpu.memory_space<vmem>>, %arg5: memref<1x2560xf32, #tpu.memory_space<vmem>>, %arg6: memref<512x32xf32, #tpu.memory_space<vmem>>, %arg7: memref<1024x32xf32, #tpu.memory_space<vmem>>, %arg8: memref<256x128xf32, #tpu.memory_space<vmem>>, %arg9: memref<8x128xf32, #tpu.memory_space<vmem>>) attributes {dimension_semantics = [], scalar_prefetch = 0 : i64, scratch_operands = 0 : i64, tpu.core_type = #tpu.core_type<tc>} {
    %c0 = arith.constant 0 : index
    %c0_0 = arith.constant 0 : index
    %0 = vector.load %arg0[%c0, %c0_0] : memref<8x8xf32, #tpu.memory_space<vmem>>, vector<8x8xf32>
    %c0_1 = arith.constant 0 : index
    %c0_2 = arith.constant 0 : index
    %1 = vector.load %arg2[%c0_1, %c0_2] : memref<8x288xf32, #tpu.memory_space<vmem>>, vector<8x288xf32>
    %cst = arith.constant dense<0.000000e+00> : vector<8x288xf32>
    %2 = tpu.matmul %0, %1, %cst {dimension_numbers = #tpu.dot_dimension_numbers<[1], [0], [0], [1], [0, 0, 1, 1], [], []>} : vector<8x8xf32>, vector<8x288xf32>, vector<8x288xf32> -> vector<8x288xf32>
    %c0_3 = arith.constant 0 : index
    %c0_4 = arith.constant 0 : index
    %3 = vector.load %arg3[%c0_3, %c0_4] : memref<1x288xf32, #tpu.memory_space<vmem>>, vector<1x288xf32>
    %4 = vector.broadcast %3 : vector<1x288xf32> to vector<8x288xf32>
    %5 = arith.addf %2, %4 : vector<8x288xf32>
    %cst_5 = arith.constant 0.000000e+00 : f32
    %6 = vector.broadcast %cst_5 : f32 to vector<8x288xf32>
    %7 = arith.maximumf %5, %6 : vector<8x288xf32>
    %c0_6 = arith.constant 0 : index
    %c0_7 = arith.constant 0 : index
    %8 = vector.load %arg4[%c0_6, %c0_7] : memref<288x2560xf32, #tpu.memory_space<vmem>>, vector<288x2560xf32>
    %cst_8 = arith.constant dense<0.000000e+00> : vector<8x2560xf32>
    %9 = tpu.matmul %7, %8, %cst_8 {dimension_numbers = #tpu.dot_dimension_numbers<[1], [0], [0], [1], [0, 0, 1, 1], [], []>} : vector<8x288xf32>, vector<288x2560xf32>, vector<8x2560xf32> -> vector<8x2560xf32>
    %c0_9 = arith.constant 0 : index
    %c0_10 = arith.constant 0 : index
    %10 = vector.load %arg5[%c0_9, %c0_10] : memref<1x2560xf32, #tpu.memory_space<vmem>>, vector<1x2560xf32>
    %11 = vector.broadcast %10 : vector<1x2560xf32> to vector<8x2560xf32>
    %12 = arith.addf %9, %11 : vector<8x2560xf32>
    %13 = vector.extract_strided_slice %12 {offsets = [0, 0], sizes = [8, 512], strides = [1, 1]} : vector<8x2560xf32> to vector<8x512xf32>
    %14 = vector.extract_strided_slice %12 {offsets = [0, 512], sizes = [8, 32], strides = [1, 1]} : vector<8x2560xf32> to vector<8x32xf32>
    %15 = vector.extract_strided_slice %12 {offsets = [0, 640], sizes = [8, 32], strides = [1, 1]} : vector<8x2560xf32> to vector<8x32xf32>
    %16 = vector.extract_strided_slice %12 {offsets = [0, 768], sizes = [8, 1024], strides = [1, 1]} : vector<8x2560xf32> to vector<8x1024xf32>
    %17 = vector.extract_strided_slice %12 {offsets = [0, 1792], sizes = [8, 32], strides = [1, 1]} : vector<8x2560xf32> to vector<8x32xf32>
    %18 = vector.extract_strided_slice %12 {offsets = [0, 1920], sizes = [8, 32], strides = [1, 1]} : vector<8x2560xf32> to vector<8x32xf32>
    %19 = vector.extract_strided_slice %12 {offsets = [0, 2048], sizes = [8, 256], strides = [1, 1]} : vector<8x2560xf32> to vector<8x256xf32>
    %20 = vector.extract_strided_slice %12 {offsets = [0, 2304], sizes = [8, 128], strides = [1, 1]} : vector<8x2560xf32> to vector<8x128xf32>
    %21 = vector.extract_strided_slice %12 {offsets = [0, 2432], sizes = [8, 128], strides = [1, 1]} : vector<8x2560xf32> to vector<8x128xf32>
    %c0_11 = arith.constant 0 : index
    %c0_12 = arith.constant 0 : index
    %22 = vector.load %arg1[%c0_11, %c0_12] : memref<8x16xf32, #tpu.memory_space<vmem>>, vector<8x16xf32>
    %23 = tpu.concatenate %22, %22 in 1 : vector<8x16xf32>, vector<8x16xf32> -> vector<8x32xf32>
    %24 = tpu.concatenate %23, %23 in 1 : vector<8x32xf32>, vector<8x32xf32> -> vector<8x64xf32>
    %25 = tpu.concatenate %24, %24 in 1 : vector<8x64xf32>, vector<8x64xf32> -> vector<8x128xf32>
    %26 = tpu.concatenate %25, %25 in 1 : vector<8x128xf32>, vector<8x128xf32> -> vector<8x256xf32>
    %27 = tpu.concatenate %26, %26 in 1 : vector<8x256xf32>, vector<8x256xf32> -> vector<8x512xf32>
    %28 = arith.mulf %13, %27 : vector<8x512xf32>
    %c0_13 = arith.constant 0 : index
    %c0_14 = arith.constant 0 : index
    %29 = vector.load %arg6[%c0_13, %c0_14] : memref<512x32xf32, #tpu.memory_space<vmem>>, vector<512x32xf32>
    %cst_15 = arith.constant dense<0.000000e+00> : vector<8x32xf32>
    %30 = tpu.matmul %28, %29, %cst_15 {dimension_numbers = #tpu.dot_dimension_numbers<[1], [0], [0], [1], [0, 0, 1, 1], [], []>} : vector<8x512xf32>, vector<512x32xf32>, vector<8x32xf32> -> vector<8x32xf32>
    %cst_16 = arith.constant 1.000000e+00 : f32
    %31 = vector.broadcast %cst_16 : f32 to vector<8x32xf32>
    %32 = arith.addf %31, %15 : vector<8x32xf32>
    %33 = arith.mulf %30, %32 : vector<8x32xf32>
    %34 = arith.addf %33, %14 : vector<8x32xf32>
    %cst_17 = arith.constant 0.000000e+00 : f32
    %35 = vector.broadcast %cst_17 : f32 to vector<8x32xf32>
    %36 = arith.maximumf %34, %35 : vector<8x32xf32>
    %37 = tpu.concatenate %36, %36 in 1 : vector<8x32xf32>, vector<8x32xf32> -> vector<8x64xf32>
    %38 = tpu.concatenate %37, %37 in 1 : vector<8x64xf32>, vector<8x64xf32> -> vector<8x128xf32>
    %39 = tpu.concatenate %38, %38 in 1 : vector<8x128xf32>, vector<8x128xf32> -> vector<8x256xf32>
    %40 = tpu.concatenate %39, %39 in 1 : vector<8x256xf32>, vector<8x256xf32> -> vector<8x512xf32>
    %41 = tpu.concatenate %40, %40 in 1 : vector<8x512xf32>, vector<8x512xf32> -> vector<8x1024xf32>
    %42 = arith.mulf %16, %41 : vector<8x1024xf32>
    %c0_18 = arith.constant 0 : index
    %c0_19 = arith.constant 0 : index
    %43 = vector.load %arg7[%c0_18, %c0_19] : memref<1024x32xf32, #tpu.memory_space<vmem>>, vector<1024x32xf32>
    %cst_20 = arith.constant dense<0.000000e+00> : vector<8x32xf32>
    %44 = tpu.matmul %42, %43, %cst_20 {dimension_numbers = #tpu.dot_dimension_numbers<[1], [0], [0], [1], [0, 0, 1, 1], [], []>} : vector<8x1024xf32>, vector<1024x32xf32>, vector<8x32xf32> -> vector<8x32xf32>
    %cst_21 = arith.constant 1.000000e+00 : f32
    %45 = vector.broadcast %cst_21 : f32 to vector<8x32xf32>
    %46 = arith.addf %45, %18 : vector<8x32xf32>
    %47 = arith.mulf %44, %46 : vector<8x32xf32>
    %48 = arith.addf %47, %17 : vector<8x32xf32>
    %cst_22 = arith.constant 0.000000e+00 : f32
    %49 = vector.broadcast %cst_22 : f32 to vector<8x32xf32>
    %50 = arith.maximumf %48, %49 : vector<8x32xf32>
    %51 = tpu.concatenate %50, %50 in 1 : vector<8x32xf32>, vector<8x32xf32> -> vector<8x64xf32>
    %52 = tpu.concatenate %51, %51 in 1 : vector<8x64xf32>, vector<8x64xf32> -> vector<8x128xf32>
    %53 = tpu.concatenate %52, %52 in 1 : vector<8x128xf32>, vector<8x128xf32> -> vector<8x256xf32>
    %54 = arith.mulf %19, %53 : vector<8x256xf32>
    %c0_23 = arith.constant 0 : index
    %c0_24 = arith.constant 0 : index
    %55 = vector.load %arg8[%c0_23, %c0_24] : memref<256x128xf32, #tpu.memory_space<vmem>>, vector<256x128xf32>
    %cst_25 = arith.constant dense<0.000000e+00> : vector<8x128xf32>
    %56 = tpu.matmul %54, %55, %cst_25 {dimension_numbers = #tpu.dot_dimension_numbers<[1], [0], [0], [1], [0, 0, 1, 1], [], []>} : vector<8x256xf32>, vector<256x128xf32>, vector<8x128xf32> -> vector<8x128xf32>
    %cst_26 = arith.constant 1.000000e+00 : f32
    %57 = vector.broadcast %cst_26 : f32 to vector<8x128xf32>
    %58 = arith.addf %57, %21 : vector<8x128xf32>
    %59 = arith.mulf %56, %58 : vector<8x128xf32>
    %60 = arith.addf %59, %20 : vector<8x128xf32>
    %c0_27 = arith.constant 0 : index
    %c0_28 = arith.constant 0 : index
    %61 = vector.load %arg9[%c0_27, %c0_28] : memref<8x128xf32, #tpu.memory_space<vmem>>, vector<8x128xf32>
    tpu.vector_store %arg9[%c0_27, %c0_28], %60 {strides = array<i32>} : memref<8x128xf32, #tpu.memory_space<vmem>>, vector<8x128xf32>,
    return
  }
}

</mosaic_0001>

<llo_original>
// kernel: hypernet_forward.1
$region0: #{hypernet_forward.1}
  #allocation0 [shape = 'u32[]', space=smem, size = 0x4, offset = 0x4, fixed_abs, tag = 'smem constant byte address 0x4 - core index']
  #allocation1 [shape = 'u32[72,128]{1,0:T(1,128)}', space=vmem, size = 0x9000, scoped, tag = 'internal scratch']
  %s0 = inlined_call_operand.vmem [shape: f32[8,8], index: 0, kind: input, shape index: {}]
  %s1 = inlined_call_operand.vmem [shape: f32[8,16], index: 1, kind: input, shape index: {}]
  %s2 = inlined_call_operand.hbm [shape: f32[8,288], index: 2, kind: input, shape index: {}]
  %s3 = inlined_call_operand.hbm [shape: f32[1,288], index: 3, kind: input, shape index: {}]
  %s4 = inlined_call_operand.hbm [shape: f32[288,2560], index: 4, kind: input, shape index: {}]
  %s5 = inlined_call_operand.hbm [shape: f32[1,2560], index: 5, kind: input, shape index: {}]
  %s6 = inlined_call_operand.vmem [shape: f32[512,32], index: 6, kind: input, shape index: {}]
  %s7 = inlined_call_operand.vmem [shape: f32[1024,32], index: 7, kind: input, shape index: {}]
  %s8 = inlined_call_operand.hbm [shape: f32[256,128], index: 8, kind: input, shape index: {}]
  %s9 = inlined_call_operand.vmem [shape: f32[8,128], index: 9, kind: output, shape index: {}]
  %s10 = sld [smem:[#allocation0]]
  $region66: #{hypernet_forward.1} parent=0
    _
  %s12 = ssub.s32 1, %s10
  %s13 = scalar_select 0, %s12, %s10
  $region1: #{hypernet_forward.1} parent=0
    #allocation2 [shape = 'u8[12288]{0}', space=vmem, size = 0x3000, scoped, tag = 'input window, operand 2, single buffered']
    #allocation3 [shape = 's32[1]{0}', space=sflag, size = 0x4, scoped, tag = 'scoped memory for hypernet_forward.1']
    #allocation4 [shape = 'u8[1536]{0}', space=vmem, size = 0x800, scoped, tag = 'input window, operand 3, single buffered']
    #allocation5 [shape = 's32[1]{0}', space=sflag, size = 0x4, scoped, tag = 'scoped memory for hypernet_forward.1']
    #allocation6 [shape = 'u8[2949120]{0}', space=vmem, size = 0x2d0000, scoped, tag = 'input window, operand 4, single buffered']
    #allocation7 [shape = 'u8[10240]{0}', space=vmem, size = 0x2800, scoped, tag = 'input window, operand 5, single buffered']
    #allocation8 [shape = 's32[1]{0}', space=sflag, size = 0x4, scoped, tag = 'scoped memory for hypernet_forward.1']
    #allocation9 [shape = 'u8[131072]{0}', space=vmem, size = 0x20000, scoped, tag = 'input window, operand 8, single buffered']
    %14 = vsyncpa [#allocation3], 0
    %15 = vsyncpa [#allocation5], 0
    %16 = vsyncpa [#allocation8], 0
    // Predicated region
    $region2: #{hypernet_forward.1} parent=1 // pred_check
      _
    $region3: #{hypernet_forward.1} parent=1 // pred_check_branch
      %18 = sbr.rel (0) target = $region5
    $region4: #{hypernet_forward.1} parent=1 // pred_region
      _
    $region5: #{hypernet_forward.1} parent=1 // pred_fallthru
      _
    // Predicated region
    $region6: #{hypernet_forward.1} parent=1 // pred_check
      _
    $region7: #{hypernet_forward.1} parent=1 // pred_check_branch
      %20 = sbr.rel (0) target = $region9
    $region8: #{hypernet_forward.1} parent=1 // pred_region
      _
    $region9: #{hypernet_forward.1} parent=1 // pred_fallthru
      _
    // Predicated region
    $region10: #{hypernet_forward.1} parent=1 // pred_check
      _
    $region11: #{hypernet_forward.1} parent=1 // pred_check_branch
      %22 = sbr.rel (0) target = $region13
    $region12: #{hypernet_forward.1} parent=1 // pred_region
      %24 = vsyncadd [#allocation3], 0
      %s26 = sshll.u32 %s2, 4
      %s27 = int_to_ptr.hbm [resolvable:$true] %s26
      %s28 = sshll.u32 [#allocation2], 4
      %s29 = int_to_ptr.vmem [resolvable:$true] %s28
      %31 = dma.hbm_to_vmem [thread:$0]  %s27, 384, %s29, [#allocation3]
    $region13: #{hypernet_forward.1} parent=1 // pred_fallthru
      _
    // Predicated region
    $region14: #{hypernet_forward.1} parent=1 // pred_check
      _
    $region15: #{hypernet_forward.1} parent=1 // pred_check_branch
      %33 = sbr.rel (0) target = $region17
    $region16: #{hypernet_forward.1} parent=1 // pred_region
      %35 = vsyncadd [#allocation5], 0
      %s37 = sshll.u32 %s3, 4
      %s38 = int_to_ptr.hbm [resolvable:$true] %s37
      %s39 = sshll.u32 [#allocation4], 4
      %s40 = int_to_ptr.vmem [resolvable:$true] %s39
      %42 = dma.hbm_to_vmem [thread:$0]  %s38, 48, %s40, [#allocation5]
    $region17: #{hypernet_forward.1} parent=1 // pred_fallthru
      _
    // Predicated region
    $region18: #{hypernet_forward.1} parent=1 // pred_check
      _
    $region19: #{hypernet_forward.1} parent=1 // pred_check_branch
      %44 = sbr.rel (0) target = $region21
    $region20: #{hypernet_forward.1} parent=1 // pred_region
      %46 = vsyncadd [#allocation5], 0
      %s47 = sshll.u32 %s4, 4
      %s48 = int_to_ptr.hbm [resolvable:$true] %s47
      %s49 = sshll.u32 [#allocation6], 4
      %s50 = int_to_ptr.vmem [resolvable:$true] %s49
      %55 = dma.hbm_to_vmem [thread:$0]  %s48, 92160, %s50, [#allocation5], 2560, 2560, 160
    $region21: #{hypernet_forward.1} parent=1 // pred_fallthru
      _
    // Predicated region
    $region22: #{hypernet_forward.1} parent=1 // pred_check
      _
    $region23: #{hypernet_forward.1} parent=1 // pred_check_branch
      %57 = sbr.rel (0) target = $region25
    $region24: #{hypernet_forward.1} parent=1 // pred_region
      %59 = vsyncadd [#allocation8], 0
      %s61 = sshll.u32 %s5, 4
      %s62 = int_to_ptr.hbm [resolvable:$true] %s61
      %s63 = sshll.u32 [#allocation7], 4
      %s64 = int_to_ptr.vmem [resolvable:$true] %s63
      %66 = dma.hbm_to_vmem [thread:$0]  %s62, 320, %s64, [#allocation8]
    $region25: #{hypernet_forward.1} parent=1 // pred_fallthru
      _
    // Predicated region
    $region26: #{hypernet_forward.1} parent=1 // pred_check
      _
    $region27: #{hypernet_forward.1} parent=1 // pred_check_branch
      %68 = sbr.rel (0) target = $region29
    $region28: #{hypernet_forward.1} parent=1 // pred_region
      _
    $region29: #{hypernet_forward.1} parent=1 // pred_fallthru
      _
    // Predicated region
    $region30: #{hypernet_forward.1} parent=1 // pred_check
      _
    $region31: #{hypernet_forward.1} parent=1 // pred_check_branch
      %70 = sbr.rel (0) target = $region33
    $region32: #{hypernet_forward.1} parent=1 // pred_region
      _
    $region33: #{hypernet_forward.1} parent=1 // pred_fallthru
      _
    // Predicated region
    $region34: #{hypernet_forward.1} parent=1 // pred_check
      _
    $region35: #{hypernet_forward.1} parent=1 // pred_check_branch
      %72 = sbr.rel (0) target = $region37
    $region36: #{hypernet_forward.1} parent=1 // pred_region
      %74 = vsyncadd [#allocation8], 0
      %s75 = sshll.u32 %s8, 4
      %s76 = int_to_ptr.hbm [resolvable:$true] %s75
      %s77 = sshll.u32 [#allocation9], 4
      %s78 = int_to_ptr.vmem [resolvable:$true] %s77
      %83 = dma.hbm_to_vmem [thread:$0]  %s76, 4096, %s78, [#allocation8], 128, 128, 8
    $region37: #{hypernet_forward.1} parent=1 // pred_fallthru
      _
    // Predicated region
    $region38: #{hypernet_forward.1} parent=1 // pred_check
      _
    $region39: #{hypernet_forward.1} parent=1 // pred_check_branch
      %85 = sbr.rel (0) target = $region41
    $region40: #{hypernet_forward.1} parent=1 // pred_region
      %87 = dma.done [#allocation3], 384
    $region41: #{hypernet_forward.1} parent=1 // pred_fallthru
      _
    // Predicated region
    $region42: #{hypernet_forward.1} parent=1 // pred_check
      _
    $region43: #{hypernet_forward.1} parent=1 // pred_check_branch
      %89 = sbr.rel (0) target = $region45
    $region44: #{hypernet_forward.1} parent=1 // pred_region
      %91 = dma.done [#allocation5], 48
    $region45: #{hypernet_forward.1} parent=1 // pred_fallthru
      _
    // Predicated region
    $region46: #{hypernet_forward.1} parent=1 // pred_check
      _
    $region47: #{hypernet_forward.1} parent=1 // pred_check_branch
      %93 = sbr.rel (0) target = $region49
    $region48: #{hypernet_forward.1} parent=1 // pred_region
      %95 = dma.done [#allocation5], 92160
    $region49: #{hypernet_forward.1} parent=1 // pred_fallthru
      _
    // Predicated region
    $region50: #{hypernet_forward.1} parent=1 // pred_check
      _
    $region51: #{hypernet_forward.1} parent=1 // pred_check_branch
      %97 = sbr.rel (0) target = $region53
    $region52: #{hypernet_forward.1} parent=1 // pred_region
      %99 = dma.done [#allocation8], 320
    $region53: #{hypernet_forward.1} parent=1 // pred_fallthru
      _
    // Predicated region
    $region54: #{hypernet_forward.1} parent=1 // pred_check
      _
    $region55: #{hypernet_forward.1} parent=1 // pred_check_branch
      %101 = sbr.rel (0) target = $region57
    $region56: #{hypernet_forward.1} parent=1 // pred_region
      %103 = dma.done [#allocation8], 4096
    $region57: #{hypernet_forward.1} parent=1 // pred_fallthru
      _
    %v104 = vld [vmem:[%s0] sm:$0xff]
    %v105 = vld [vmem:[#allocation2] sm:$0xff]
    %v106 = vld [vmem:[#allocation2 + $0x8] sm:$0xff]
    %v107 = vld [vmem:[#allocation2 + $0x10] sm:$0xff]
    %v108 = vld [vmem:[#allocation4] sm:$0x7]
    %v110 = vperm.slane %v108, 0
    %v111 = vperm.slane %v108, 1
    %v112 = vperm.slane %v108, 2
    %vm116 = vcmask 64512
    %v118 = vsel %vm116, %v104, 0
    %120 = vmatpush.msra.mxu0 0.0
    %121 = vmatpush.msra.mxu0 0.0
    %122 = vmatpush.msra.mxu0 0.0
    %123 = vmatpush.msra.mxu0 0.0
    %124 = vmatpush.msra.mxu0 0.0
    %125 = vmatpush.msra.mxu0 0.0
    %126 = vmatpush.msra.mxu0 0.0
    %127 = vmatpush.msra.mxu0 0.0
    %128 = vmatpush.msra.mxu0 0.0
    %129 = vmatpush.msra.mxu0 0.0
    %130 = vmatpush.msra.mxu0 0.0
    %131 = vmatpush.msra.mxu0 0.0
    %132 = vmatpush.msra.mxu0 0.0
    %133 = vmatpush.msra.mxu0 0.0
    %134 = vmatpush.msra.mxu0 0.0
    %135 = vmatpush.msra.mxu0 %v105
    %136 = vmatmul.f32.gmra.mxu0 %v118
    %v137 = vpop.f32.mrf.mxu0
    %v138 = vadd.f32 %v110, %v137
    %139 = vdwg.mxu0
    %140 = vmatpush.msra.mxu0 0.0
    %141 = vmatpush.msra.mxu0 0.0
    %142 = vmatpush.msra.mxu0 0.0
    %143 = vmatpush.msra.mxu0 0.0
    %144 = vmatpush.msra.mxu0 0.0
    %145 = vmatpush.msra.mxu0 0.0
    %146 = vmatpush.msra.mxu0 0.0
    %147 = vmatpush.msra.mxu0 0.0
    %148 = vmatpush.msra.mxu0 0.0
    %149 = vmatpush.msra.mxu0 0.0
    %150 = vmatpush.msra.mxu0 0.0
    %151 = vmatpush.msra.mxu0 0.0
    %152 = vmatpush.msra.mxu0 0.0
    %153 = vmatpush.msra.mxu0 0.0
    %154 = vmatpush.msra.mxu0 0.0
    %155 = vmatpush.msra.mxu0 %v106
    %156 = vmatmul.f32.gmra.mxu0 %v118
    %v157 = vpop.f32.mrf.mxu0
    %v158 = vadd.f32 %v111, %v157
    %159 = vdwg.mxu0
    %160 = vmatpush.msra.mxu0 0.0
    %161 = vmatpush.msra.mxu0 0.0
    %162 = vmatpush.msra.mxu0 0.0
    %163 = vmatpush.msra.mxu0 0.0
    %164 = vmatpush.msra.mxu0 0.0
    %165 = vmatpush.msra.mxu0 0.0
    %166 = vmatpush.msra.mxu0 0.0
    %167 = vmatpush.msra.mxu0 0.0
    %168 = vmatpush.msra.mxu0 0.0
    %169 = vmatpush.msra.mxu0 0.0
    %170 = vmatpush.msra.mxu0 0.0
    %171 = vmatpush.msra.mxu0 0.0
    %172 = vmatpush.msra.mxu0 0.0
    %173 = vmatpush.msra.mxu0 0.0
    %174 = vmatpush.msra.mxu0 0.0
    %175 = vmatpush.msra.mxu0 %v107
    %176 = vmatmul.f32.gmra.mxu0 %v118
    %v177 = vpop.f32.mrf.mxu0
    %v178 = vadd.f32 %v112, %v177
    %179 = vdwg.mxu0
    %v180 = vmax.f32 %v138, 0.0
    %v181 = vmax.f32 %v158, 0.0
    %v182 = vmax.f32 %v178, 0.0
    %v183 = vld [vmem:[#allocation6] sm:$0xff]
    %v184 = vld [vmem:[#allocation6 + $0x8] sm:$0xff]
    %v185 = vld [vmem:[#allocation6 + $0x10] sm:$0xff]
    %v186 = vld [vmem:[#allocation6 + $0x18] sm:$0xff]
    %v187 = vld [vmem:[#allocation6 + $0x20] sm:$0xff]
    %v188 = vld [vmem:[#allocation6 + $0x28] sm:$0xff]
    %v189 = vld [vmem:[#allocation6 + $0x30] sm:$0xff]
    %v190 = vld [vmem:[#allocation6 + $0x38] sm:$0xff]
    %v191 = vld [vmem:[#allocation6 + $0x40] sm:$0xff]
    %v192 = vld [vmem:[#allocation6 + $0x48] sm:$0xff]
    %v193 = vld [vmem:[#allocation6 + $0x50] sm:$0xff]
    %v194 = vld [vmem:[#allocation6 + $0x58] sm:$0xff]
    %v195 = vld [vmem:[#allocation6 + $0x60] sm:$0xff]
    %v196 = vld [vmem:[#allocation6 + $0x68] sm:$0xff]
    %v197 = vld [vmem:[#allocation6 + $0x70] sm:$0xff]
    %v198 = vld [vmem:[#allocation6 + $0x78] sm:$0xff]
    %v199 = vld [vmem:[#allocation6 + $0x80] sm:$0xff]
    %v200 = vld [vmem:[#allocation6 + $0x88] sm:$0xff]
    %v201 = vld [vmem:[#allocation6 + $0x90] sm:$0xff]
    %v202 = vld [vmem:[#allocation6 + $0x98] sm:$0xff]
    %v203 = vld [vmem:[#allocation6 + $0xa0] sm:$0xff]
    %v204 = vld [vmem:[#allocation6 + $0xa8] sm:$0xff]
    %v205 = vld [vmem:[#allocation6 + $0xb0] sm:$0xff]
    %v206 = vld [vmem:[#allocation6 + $0xb8] sm:$0xff]
    %v207 = vld [vmem:[#allocation6 + $0xc0] sm:$0xff]
    %v208 = vld [vmem:[#allocation6 + $0xc8] sm:$0xff]
    %v209 = vld [vmem:[#allocation6 + $0xd0] sm:$0xff]
    %v210 = vld [vmem:[#allocation6 + $0xd8] sm:$0xff]
    %v211 = vld [vmem:[#allocation6 + $0xe0] sm:$0xff]
    %v212 = vld [vmem:[#allocation6 + $0xe8] sm:$0xff]
    %v213 = vld [vmem:[#allocation6 + $0xf0] sm:$0xff]
    %v214 = vld [vmem:[#allocation6 + $0xf8] sm:$0xff]
    %v215 = vld [vmem:[#allocation6 + $0x100] sm:$0xff]
    %v216 = vld [vmem:[#allocation6 + $0x108] sm:$0xff]
    %v217 = vld [vmem:[#allocation6 + $0x110] sm:$0xff]
    %v218 = vld [vmem:[#allocation6 + $0x118] sm:$0xff]
    %v219 = vld [vmem:[#allocation6 + $0x120] sm:$0xff]
    %v220 = vld [vmem:[#allocation6 + $0x128] sm:$0xff]
    %v221 = vld [vmem:[#allocation6 + $0x130] sm:$0xff]
    %v222 = vld [vmem:[#allocation6 + $0x138] sm:$0xff]
    %v223 = vld [vmem:[#allocation6 + $0x140] sm:$0xff]
    %v224 = vld [vmem:[#allocation6 + $0x148] sm:$0xff]
    %v225 = vld [vmem:[#allocation6 + $0x150] sm:$0xff]
    %v226 = vld [vmem:[#allocation6 + $0x158] sm:$0xff]
    %v227 = vld [vmem:[#allocation6 + $0x160] sm:$0xff]
    %v228 = vld [vmem:[#allocation6 + $0x168] sm:$0xff]
    %v229 = vld [vmem:[#allocation6 + $0x170] sm:$0xff]
    %v230 = vld [vmem:[#allocation6 + $0x178] sm:$0xff]
    %v231 = vld [vmem:[#allocation6 + $0x180] sm:$0xff]
    %v232 = vld [vmem:[#allocation6 + $0x188] sm:$0xff]
    %v233 = vld [vmem:[#allocation6 + $0x190] sm:$0xff]
    %v234 = vld [vmem:[#allocation6 + $0x198] sm:$0xff]
    %v235 = vld [vmem:[#allocation6 + $0x1a0] sm:$0xff]
    %v236 = vld [vmem:[#allocation6 + $0x1a8] sm:$0xff]
    %v237 = vld [vmem:[#allocation6 + $0x1b0] sm:$0xff]
    %v238 = vld [vmem:[#allocation6 + $0x1b8] sm:$0xff]
    %v239 = vld [vmem:[#allocation6 + $0x1c0] sm:$0xff]
    %v240 = vld [vmem:[#allocation6 + $0x1c8] sm:$0xff]
    %v241 = vld [vmem:[#allocation6 + $0x1d0] sm:$0xff]
    %v242 = vld [vmem:[#allocation6 + $0x1d8] sm:$0xff]
    %v243 = vld [vmem:[#allocation6 + $0x1e0] sm:$0xff]
    %v244 = vld [vmem:[#allocation6 + $0x1e8] sm:$0xff]
    %v245 = vld [vmem:[#allocation6 + $0x1f0] sm:$0xff]
    %v246 = vld [vmem:[#allocation6 + $0x1f8] sm:$0xff]
    %v247 = vld [vmem:[#allocation6 + $0x200] sm:$0xff]
    %v248 = vld [vmem:[#allocation6 + $0x208] sm:$0xff]
    %v249 = vld [vmem:[#allocation6 + $0x210] sm:$0xff]
    %v250 = vld [vmem:[#allocation6 + $0x218] sm:$0xff]
    %v251 = vld [vmem:[#allocation6 + $0x220] sm:$0xff]
    %v252 = vld [vmem:[#allocation6 + $0x228] sm:$0xff]
    %v253 = vld [vmem:[#allocation6 + $0x230] sm:$0xff]
    %v254 = vld [vmem:[#allocation6 + $0x238] sm:$0xff]
    %v255 = vld [vmem:[#allocation6 + $0x240] sm:$0xff]
    %v256 = vld [vmem:[#allocation6 + $0x248] sm:$0xff]
    %v257 = vld [vmem:[#allocation6 + $0x250] sm:$0xff]
    %v258 = vld [vmem:[#allocation6 + $0x258] sm:$0xff]
    %v259 = vld [vmem:[#allocation6 + $0x260] sm:$0xff]
    %v260 = vld [vmem:[#allocation6 + $0x268] sm:$0xff]
    %v261 = vld [vmem:[#allocation6 + $0x270] sm:$0xff]
    %v262 = vld [vmem:[#allocation6 + $0x278] sm:$0xff]
    %v263 = vld [vmem:[#allocation6 + $0x280] sm:$0xff]
    %v264 = vld [vmem:[#allocation6 + $0x288] sm:$0xff]
    %v265 = vld [vmem:[#allocation6 + $0x290] sm:$0xff]
    %v266 = vld [vmem:[#allocation6 + $0x298] sm:$0xff]
    %v267 = vld [vmem:[#allocation6 + $0x2a0] sm:$0xff]
    %v268 = vld [vmem:[#allocation6 + $0x2a8] sm:$0xff]
    %v269 = vld [vmem:[#allocation6 + $0x2b0] sm:$0xff]
    %v270 = vld [vmem:[#allocation6 + $0x2b8] sm:$0xff]
    %v271 = vld [vmem:[#allocation6 + $0x2c0] sm:$0xff]
    %v272 = vld [vmem:[#allocation6 + $0x2c8] sm:$0xff]
    %v273 = vld [vmem:[#allocation6 + $0x2d0] sm:$0xff]
    %v274 = vld [vmem:[#allocation6 + $0x2d8] sm:$0xff]
    %v275 = vld [vmem:[#allocation6 + $0x2e0] sm:$0xff]
    %v276 = vld [vmem:[#allocation6 + $0x2e8] sm:$0xff]
    %v277 = vld [vmem:[#allocation6 + $0x2f0] sm:$0xff]
    %v278 = vld [vmem:[#allocation6 + $0x2f8] sm:$0xff]
    %v279 = vld [vmem:[#allocation6 + $0x300] sm:$0xff]
    %v280 = vld [vmem:[#allocation6 + $0x308] sm:$0xff]
    %v281 = vld [vmem:[#allocation6 + $0x310] sm:$0xff]
    %v282 = vld [vmem:[#allocation6 + $0x318] sm:$0xff]
    %v283 = vld [vmem:[#allocation6 + $0x320] sm:$0xff]
    %v284 = vld [vmem:[#allocation6 + $0x328] sm:$0xff]
    %v285 = vld [vmem:[#allocation6 + $0x330] sm:$0xff]
    %v286 = vld [vmem:[#allocation6 + $0x338] sm:$0xff]
    %v287 = vld [vmem:[#allocation6 + $0x340] sm:$0xff]
    %v288 = vld [vmem:[#allocation6 + $0x348] sm:$0xff]
    %v289 = vld [vmem:[#allocation6 + $0x350] sm:$0xff]
    %v290 = vld [vmem:[#allocation6 + $0x358] sm:$0xff]
    %v291 = vld [vmem:[#allocation6 + $0x360] sm:$0xff]
    %v292 = vld [vmem:[#allocation6 + $0x368] sm:$0xff]
    %v293 = vld [vmem:[#allocation6 + $0x370] sm:$0xff]
    %v294 = vld [vmem:[#allocation6 + $0x378] sm:$0xff]
    %v295 = vld [vmem:[#allocation6 + $0x380] sm:$0xff]
    %v296 = vld [vmem:[#allocation6 + $0x388] sm:$0xff]
    %v297 = vld [vmem:[#allocation6 + $0x390] sm:$0xff]
    %v298 = vld [vmem:[#allocation6 + $0x398] sm:$0xff]
    %v299 = vld [vmem:[#allocation6 + $0x3a0] sm:$0xff]
    %v300 = vld [vmem:[#allocation6 + $0x3a8] sm:$0xff]
    %v301 = vld [vmem:[#allocation6 + $0x3b0] sm:$0xff]
    %v302 = vld [vmem:[#allocation6 + $0x3b8] sm:$0xff]
    %v303 = vld [vmem:[#allocation6 + $0x3c0] sm:$0xff]
    %v304 = vld [vmem:[#allocation6 + $0x3c8] sm:$0xff]
    %v305 = vld [vmem:[#allocation6 + $0x3d0] sm:$0xff]
    %v306 = vld [vmem:[#allocation6 + $0x3d8] sm:$0xff]
    %v307 = vld [vmem:[#allocation6 + $0x3e0] sm:$0xff]
    %v308 = vld [vmem:[#allocation6 + $0x3e8] sm:$0xff]
    %v309 = vld [vmem:[#allocation6 + $0x3f0] sm:$0xff]
    %v310 = vld [vmem:[#allocation6 + $0x3f8] sm:$0xff]
    %v311 = vld [vmem:[#allocation6 + $0x400] sm:$0xff]
    %v312 = vld [vmem:[#allocation6 + $0x408] sm:$0xff]
    %v313 = vld [vmem:[#allocation6 + $0x410] sm:$0xff]
    %v314 = vld [vmem:[#allocation6 + $0x418] sm:$0xff]
    %v315 = vld [vmem:[#allocation6 + $0x420] sm:$0xff]
    %v316 = vld [vmem:[#allocation6 + $0x428] sm:$0xff]
    %v317 = vld [vmem:[#allocation6 + $0x430] sm:$0xff]
    %v318 = vld [vmem:[#allocation6 + $0x438] sm:$0xff]
    %v319 = vld [vmem:[#allocation6 + $0x440] sm:$0xff]
    %v320 = vld [vmem:[#allocation6 + $0x448] sm:$0xff]
    %v321 = vld [vmem:[#allocation6 + $0x450] sm:$0xff]
    %v322 = vld [vmem:[#allocation6 + $0x458] sm:$0xff]
    %v323 = vld [vmem:[#allocation6 + $0x460] sm:$0xff]
    %v324 = vld [vmem:[#allocation6 + $0x468] sm:$0xff]
    %v325 = vld [vmem:[#allocation6 + $0x470] sm:$0xff]
    %v326 = vld [vmem:[#allocation6 + $0x478] sm:$0xff]
    %v327 = vld [vmem:[#allocation6 + $0x480] sm:$0xff]
    %v328 = vld [vmem:[#allocation6 + $0x488] sm:$0xff]
    %v329 = vld [vmem:[#allocation6 + $0x490] sm:$0xff]
    %v330 = vld [vmem:[#allocation6 + $0x498] sm:$0xff]
    %v331 = vld [vmem:[#allocation6 + $0x4a0] sm:$0xff]
    %v332 = vld [vmem:[#allocation6 + $0x4a8] sm:$0xff]
    %v333 = vld [vmem:[#allocation6 + $0x4b0] sm:$0xff]
    %v334 = vld [vmem:[#allocation6 + $0x4b8] sm:$0xff]
    %v335 = vld [vmem:[#allocation6 + $0x4c0] sm:$0xff]
    %v336 = vld [vmem:[#allocation6 + $0x4c8] sm:$0xff]
    %v337 = vld [vmem:[#allocation6 + $0x4d0] sm:$0xff]
    %v338 = vld [vmem:[#allocation6 + $0x4d8] sm:$0xff]
    %v339 = vld [vmem:[#allocation6 + $0x4e0] sm:$0xff]
    %v340 = vld [vmem:[#allocation6 + $0x4e8] sm:$0xff]
    %v341 = vld [vmem:[#allocation6 + $0x4f0] sm:$0xff]
    %v342 = vld [vmem:[#allocation6 + $0x4f8] sm:$0xff]
    %v343 = vld [vmem:[#allocation6 + $0x500] sm:$0xff]
    %v344 = vld [vmem:[#allocation6 + $0x508] sm:$0xff]
    %v345 = vld [vmem:[#allocation6 + $0x510] sm:$0xff]
    %v346 = vld [vmem:[#allocation6 + $0x518] sm:$0xff]
    %v347 = vld [vmem:[#allocation6 + $0x520] sm:$0xff]
    %v348 = vld [vmem:[#allocation6 + $0x528] sm:$0xff]
    %v349 = vld [vmem:[#allocation6 + $0x530] sm:$0xff]
    %v350 = vld [vmem:[#allocation6 + $0x538] sm:$0xff]
    %v351 = vld [vmem:[#allocation6 + $0x540] sm:$0xff]
    %v352 = vld [vmem:[#allocation6 + $0x548] sm:$0xff]
    %v353 = vld [vmem:[#allocation6 + $0x550] sm:$0xff]
    %v354 = vld [vmem:[#allocation6 + $0x558] sm:$0xff]
    %v355 = vld [vmem:[#allocation6 + $0x560] sm:$0xff]
    %v356 = vld [vmem:[#allocation6 + $0x568] sm:$0xff]
    %v357 = vld [vmem:[#allocation6 + $0x570] sm:$0xff]
    %v358 = vld [vmem:[#allocation6 + $0x578] sm:$0xff]
    %v359 = vld [vmem:[#allocation6 + $0x580] sm:$0xff]
    %v360 = vld [vmem:[#allocation6 + $0x588] sm:$0xff]
    %v361 = vld [vmem:[#allocation6 + $0x590] sm:$0xff]
    %v362 = vld [vmem:[#allocation6 + $0x598] sm:$0xff]
    %v363 = vld [vmem:[#allocation6 + $0x5a0] sm:$0xff]
    %v364 = vld [vmem:[#allocation6 + $0x5a8] sm:$0xff]
    %v365 = vld [vmem:[#allocation6 + $0x5b0] sm:$0xff]
    %v366 = vld [vmem:[#allocation6 + $0x5b8] sm:$0xff]
    %v367 = vld [vmem:[#allocation6 + $0x5c0] sm:$0xff]
    %v368 = vld [vmem:[#allocation6 + $0x5c8] sm:$0xff]
    %v369 = vld [vmem:[#allocation6 + $0x5d0] sm:$0xff]
    %v370 = vld [vmem:[#allocation6 + $0x5d8] sm:$0xff]
    %v371 = vld [vmem:[#allocation6 + $0x5e0] sm:$0xff]
    %v372 = vld [vmem:[#allocation6 + $0x5e8] sm:$0xff]
    %v373 = vld [vmem:[#allocation6 + $0x5f0] sm:$0xff]
    %v374 = vld [vmem:[#allocation6 + $0x5f8] sm:$0xff]
    %v375 = vld [vmem:[#allocation6 + $0x600] sm:$0xff]
    %v376 = vld [vmem:[#allocation6 + $0x608] sm:$0xff]
    %v377 = vld [vmem:[#allocation6 + $0x610] sm:$0xff]
    %v378 = vld [vmem:[#allocation6 + $0x618] sm:$0xff]
    %v379 = vld [vmem:[#allocation6 + $0x620] sm:$0xff]
    %v380 = vld [vmem:[#allocation6 + $0x628] sm:$0xff]
    %v381 = vld [vmem:[#allocation6 + $0x630] sm:$0xff]
    %v382 = vld [vmem:[#allocation6 + $0x638] sm:$0xff]
    %v383 = vld [vmem:[#allocation6 + $0x640] sm:$0xff]
    %v384 = vld [vmem:[#allocation6 + $0x648] sm:$0xff]
    %v385 = vld [vmem:[#allocation6 + $0x650] sm:$0xff]
    %v386 = vld [vmem:[#allocation6 + $0x658] sm:$0xff]
    %v387 = vld [vmem:[#allocation6 + $0x660] sm:$0xff]
    %v388 = vld [vmem:[#allocation6 + $0x668] sm:$0xff]
    %v389 = vld [vmem:[#allocation6 + $0x670] sm:$0xff]
    %v390 = vld [vmem:[#allocation6 + $0x678] sm:$0xff]
    %v391 = vld [vmem:[#allocation6 + $0x680] sm:$0xff]
    %v392 = vld [vmem:[#allocation6 + $0x688] sm:$0xff]
    %v393 = vld [vmem:[#allocation6 + $0x690] sm:$0xff]
    %v394 = vld [vmem:[#allocation6 + $0x698] sm:$0xff]
    %v395 = vld [vmem:[#allocation6 + $0x6a0] sm:$0xff]
    %v396 = vld [vmem:[#allocation6 + $0x6a8] sm:$0xff]
    %v397 = vld [vmem:[#allocation6 + $0x6b0] sm:$0xff]
    %v398 = vld [vmem:[#allocation6 + $0x6b8] sm:$0xff]
    %v399 = vld [vmem:[#allocation6 + $0x6c0] sm:$0xff]
    %v400 = vld [vmem:[#allocation6 + $0x6c8] sm:$0xff]
    %v401 = vld [vmem:[#allocation6 + $0x6d0] sm:$0xff]
    %v402 = vld [vmem:[#allocation6 + $0x6d8] sm:$0xff]
    %v403 = vld [vmem:[#allocation6 + $0x6e0] sm:$0xff]
    %v404 = vld [vmem:[#allocation6 + $0x6e8] sm:$0xff]
    %v405 = vld [vmem:[#allocation6 + $0x6f0] sm:$0xff]
    %v406 = vld [vmem:[#allocation6 + $0x6f8] sm:$0xff]
    %v407 = vld [vmem:[#allocation6 + $0x700] sm:$0xff]
    %v408 = vld [vmem:[#allocation6 + $0x708] sm:$0xff]
    %v409 = vld [vmem:[#allocation6 + $0x710] sm:$0xff]
    %v410 = vld [vmem:[#allocation6 + $0x718] sm:$0xff]
    %v411 = vld [vmem:[#allocation6 + $0x720] sm:$0xff]
    %v412 = vld [vmem:[#allocation6 + $0x728] sm:$0xff]
    %v413 = vld [vmem:[#allocation6 + $0x730] sm:$0xff]
    %v414 = vld [vmem:[#allocation6 + $0x738] sm:$0xff]
    %v415 = vld [vmem:[#allocation6 + $0x740] sm:$0xff]
    %v416 = vld [vmem:[#allocation6 + $0x748] sm:$0xff]
    %v417 = vld [vmem:[#allocation6 + $0x750] sm:$0xff]
    %v418 = vld [vmem:[#allocation6 + $0x758] sm:$0xff]
    %v419 = vld [vmem:[#allocation6 + $0x760] sm:$0xff]
    %v420 = vld [vmem:[#allocation6 + $0x768] sm:$0xff]
    %v421 = vld [vmem:[#allocation6 + $0x770] sm:$0xff]
    %v422 = vld [vmem:[#allocation6 + $0x778] sm:$0xff]
    %v423 = vld [vmem:[#allocation6 + $0x780] sm:$0xff]
    %v424 = vld [vmem:[#allocation6 + $0x788] sm:$0xff]
    %v425 = vld [vmem:[#allocation6 + $0x790] sm:$0xff]
    %v426 = vld [vmem:[#allocation6 + $0x798] sm:$0xff]
    %v427 = vld [vmem:[#allocation6 + $0x7a0] sm:$0xff]
    %v428 = vld [vmem:[#allocation6 + $0x7a8] sm:$0xff]
    %v429 = vld [vmem:[#allocation6 + $0x7b0] sm:$0xff]
    %v430 = vld [vmem:[#allocation6 + $0x7b8] sm:$0xff]
    %v431 = vld [vmem:[#allocation6 + $0x7c0] sm:$0xff]
    %v432 = vld [vmem:[#allocation6 + $0x7c8] sm:$0xff]
    %v433 = vld [vmem:[#allocation6 + $0x7d0] sm:$0xff]
    %v434 = vld [vmem:[#allocation6 + $0x7d8] sm:$0xff]
    %v435 = vld [vmem:[#allocation6 + $0x7e0] sm:$0xff]
    %v436 = vld [vmem:[#allocation6 + $0x7e8] sm:$0xff]
    %v437 = vld [vmem:[#allocation6 + $0x7f0] sm:$0xff]
    %v438 = vld [vmem:[#allocation6 + $0x7f8] sm:$0xff]
    %v439 = vld [vmem:[#allocation6 + $0x800] sm:$0xff]
    %v440 = vld [vmem:[#allocation6 + $0x808] sm:$0xff]
    %v441 = vld [vmem:[#allocation6 + $0x810] sm:$0xff]
    %v442 = vld [vmem:[#allocation6 + $0x818] sm:$0xff]
    %v443 = vld [vmem:[#allocation6 + $0x820] sm:$0xff]
    %v444 = vld [vmem:[#allocation6 + $0x828] sm:$0xff]
    %v445 = vld [vmem:[#allocation6 + $0x830] sm:$0xff]
    %v446 = vld [vmem:[#allocation6 + $0x838] sm:$0xff]
    %v447 = vld [vmem:[#allocation6 + $0x840] sm:$0xff]
    %v448 = vld [vmem:[#allocation6 + $0x848] sm:$0xff]
    %v449 = vld [vmem:[#allocation6 + $0x850] sm:$0xff]
    %v450 = vld [vmem:[#allocation6 + $0x858] sm:$0xff]
    %v451 = vld [vmem:[#allocation6 + $0x860] sm:$0xff]
    %v452 = vld [vmem:[#allocation6 + $0x868] sm:$0xff]
    %v453 = vld [vmem:[#allocation6 + $0x870] sm:$0xff]
    %v454 = vld [vmem:[#allocation6 + $0x878] sm:$0xff]
    %v455 = vld [vmem:[#allocation6 + $0x880] sm:$0xff]
    %v456 = vld [vmem:[#allocation6 + $0x888] sm:$0xff]
    %v457 = vld [vmem:[#allocation6 + $0x890] sm:$0xff]
    %v458 = vld [vmem:[#allocation6 + $0x898] sm:$0xff]
    %v459 = vld [vmem:[#allocation6 + $0x8a0] sm:$0xff]
    %v460 = vld [vmem:[#allocation6 + $0x8a8] sm:$0xff]
    %v461 = vld [vmem:[#allocation6 + $0x8b0] sm:$0xff]
    %v462 = vld [vmem:[#allocation6 + $0x8b8] sm:$0xff]
    %v463 = vld [vmem:[#allocation6 + $0x8c0] sm:$0xff]
    %v464 = vld [vmem:[#allocation6 + $0x8c8] sm:$0xff]
    %v465 = vld [vmem:[#allocation6 + $0x8d0] sm:$0xff]
    %v466 = vld [vmem:[#allocation6 + $0x8d8] sm:$0xff]
    %v467 = vld [vmem:[#allocation6 + $0x8e0] sm:$0xff]
    %v468 = vld [vmem:[#allocation6 + $0x8e8] sm:$0xff]
    %v469 = vld [vmem:[#allocation6 + $0x8f0] sm:$0xff]
    %v470 = vld [vmem:[#allocation6 + $0x8f8] sm:$0xff]
    %v471 = vld [vmem:[#allocation6 + $0x900] sm:$0xff]
    %v472 = vld [vmem:[#allocation6 + $0x908] sm:$0xff]
    %v473 = vld [vmem:[#allocation6 + $0x910] sm:$0xff]
    %v474 = vld [vmem:[#allocation6 + $0x918] sm:$0xff]
    %v475 = vld [vmem:[#allocation6 + $0x920] sm:$0xff]
    %v476 = vld [vmem:[#allocation6 + $0x928] sm:$0xff]
    %v477 = vld [vmem:[#allocation6 + $0x930] sm:$0xff]
    %v478 = vld [vmem:[#allocation6 + $0x938] sm:$0xff]
    %v479 = vld [vmem:[#allocation6 + $0x940] sm:$0xff]
    %v480 = vld [vmem:[#allocation6 + $0x948] sm:$0xff]
    %v481 = vld [vmem:[#allocation6 + $0x950] sm:$0xff]
    %v482 = vld [vmem:[#allocation6 + $0x958] sm:$0xff]
    %v483 = vld [vmem:[#allocation6 + $0x960] sm:$0xff]
    %v484 = vld [vmem:[#allocation6 + $0x968] sm:$0xff]
    %v485 = vld [vmem:[#allocation6 + $0x970] sm:$0xff]
    %v486 = vld [vmem:[#allocation6 + $0x978] sm:$0xff]
    %v487 = vld [vmem:[#allocation6 + $0x980] sm:$0xff]
    %v488 = vld [vmem:[#allocation6 + $0x988] sm:$0xff]
    %v489 = vld [vmem:[#allocation6 + $0x990] sm:$0xff]
    %v490 = vld [vmem:[#allocation6 + $0x998] sm:$0xff]
    %v491 = vld [vmem:[#allocation6 + $0x9a0] sm:$0xff]
    %v492 = vld [vmem:[#allocation6 + $0x9a8] sm:$0xff]
    %v493 = vld [vmem:[#allocation6 + $0x9b0] sm:$0xff]
    %v494 = vld [vmem:[#allocation6 + $0x9b8] sm:$0xff]
    %v495 = vld [vmem:[#allocation6 + $0x9c0] sm:$0xff]
    %v496 = vld [vmem:[#allocation6 + $0x9c8] sm:$0xff]
    %v497 = vld [vmem:[#allocation6 + $0x9d0] sm:$0xff]
    %v498 = vld [vmem:[#allocation6 + $0x9d8] sm:$0xff]
    %v499 = vld [vmem:[#allocation6 + $0x9e0] sm:$0xff]
    %v500 = vld [vmem:[#allocation6 + $0x9e8] sm:$0xff]
    %v501 = vld [vmem:[#allocation6 + $0x9f0] sm:$0xff]
    %v502 = vld [vmem:[#allocation6 + $0x9f8] sm:$0xff]
    %v503 = vld [vmem:[#allocation6 + $0xa00] sm:$0xff]
    %v504 = vld [vmem:[#allocation6 + $0xa08] sm:$0xff]
    %v505 = vld [vmem:[#allocation6 + $0xa10] sm:$0xff]
    %v506 = vld [vmem:[#allocation6 + $0xa18] sm:$0xff]
    %v507 = vld [vmem:[#allocation6 + $0xa20] sm:$0xff]
    %v508 = vld [vmem:[#allocation6 + $0xa28] sm:$0xff]
    %v509 = vld [vmem:[#allocation6 + $0xa30] sm:$0xff]
    %v510 = vld [vmem:[#allocation6 + $0xa38] sm:$0xff]
    %v511 = vld [vmem:[#allocation6 + $0xa40] sm:$0xff]
    %v512 = vld [vmem:[#allocation6 + $0xa48] sm:$0xff]
    %v513 = vld [vmem:[#allocation6 + $0xa50] sm:$0xff]
    %v514 = vld [vmem:[#allocation6 + $0xa58] sm:$0xff]
    %v515 = vld [vmem:[#allocation6 + $0xa60] sm:$0xff]
    %v516 = vld [vmem:[#allocation6 + $0xa68] sm:$0xff]
    %v517 = vld [vmem:[#allocation6 + $0xa70] sm:$0xff]
    %v518 = vld [vmem:[#allocation6 + $0xa78] sm:$0xff]
    %v519 = vld [vmem:[#allocation6 + $0xa80] sm:$0xff]
    %v520 = vld [vmem:[#allocation6 + $0xa88] sm:$0xff]
    %v521 = vld [vmem:[#allocation6 + $0xa90] sm:$0xff]
    %v522 = vld [vmem:[#allocation6 + $0xa98] sm:$0xff]
    %v523 = vld [vmem:[#allocation6 + $0xaa0] sm:$0xff]
    %v524 = vld [vmem:[#allocation6 + $0xaa8] sm:$0xff]
    %v525 = vld [vmem:[#allocation6 + $0xab0] sm:$0xff]
    %v526 = vld [vmem:[#allocation6 + $0xab8] sm:$0xff]
    %v527 = vld [vmem:[#allocation6 + $0xac0] sm:$0xff]
    %v528 = vld [vmem:[#allocation6 + $0xac8] sm:$0xff]
    %v529 = vld [vmem:[#allocation6 + $0xad0] sm:$0xff]
    %v530 = vld [vmem:[#allocation6 + $0xad8] sm:$0xff]
    %v531 = vld [vmem:[#allocation6 + $0xae0] sm:$0xff]
    %v532 = vld [vmem:[#allocation6 + $0xae8] sm:$0xff]
    %v533 = vld [vmem:[#allocation6 + $0xaf0] sm:$0xff]
    %v534 = vld [vmem:[#allocation6 + $0xaf8] sm:$0xff]
    %v535 = vld [vmem:[#allocation6 + $0xb00] sm:$0xff]
    %v536 = vld [vmem:[#allocation6 + $0xb08] sm:$0xff]
    %v537 = vld [vmem:[#allocation6 + $0xb10] sm:$0xff]
    %v538 = vld [vmem:[#allocation6 + $0xb18] sm:$0xff]
    %v539 = vld [vmem:[#allocation6 + $0xb20] sm:$0xff]
    %v540 = vld [vmem:[#allocation6 + $0xb28] sm:$0xff]
    %v541 = vld [vmem:[#allocation6 + $0xb30] sm:$0xff]
    %v542 = vld [vmem:[#allocation6 + $0xb38] sm:$0xff]
    %v543 = vld [vmem:[#allocation6 + $0xb40] sm:$0xff]
    %v544 = vld [vmem:[#allocation6 + $0xb48] sm:$0xff]
    %v545 = vld [vmem:[#allocation6 + $0xb50] sm:$0xff]
    %v546 = vld [vmem:[#allocation6 + $0xb58] sm:$0xff]
    %v547 = vld [vmem:[#allocation6 + $0xb60] sm:$0xff]
    %v548 = vld [vmem:[#allocation6 + $0xb68] sm:$0xff]
    %v549 = vld [vmem:[#allocation6 + $0xb70] sm:$0xff]
    %v550 = vld [vmem:[#allocation6 + $0xb78] sm:$0xff]
    %v551 = vld [vmem:[#allocation6 + $0xb80] sm:$0xff]
    %v552 = vld [vmem:[#allocation6 + $0xb88] sm:$0xff]
    %v553 = vld [vmem:[#allocation6 + $0xb90] sm:$0xff]
    %v554 = vld [vmem:[#allocation6 + $0xb98] sm:$0xff]
    %v555 = vld [vmem:[#allocation6 + $0xba0] sm:$0xff]
    %v556 = vld [vmem:[#allocation6 + $0xba8] sm:$0xff]
    %v557 = vld [vmem:[#allocation6 + $0xbb0] sm:$0xff]
    %v558 = vld [vmem:[#allocation6 + $0xbb8] sm:$0xff]
    %v559 = vld [vmem:[#allocation6 + $0xbc0] sm:$0xff]
    %v560 = vld [vmem:[#allocation6 + $0xbc8] sm:$0xff]
    %v561 = vld [vmem:[#allocation6 + $0xbd0] sm:$0xff]
    %v562 = vld [vmem:[#allocation6 + $0xbd8] sm:$0xff]
    %v563 = vld [vmem:[#allocation6 + $0xbe0] sm:$0xff]
    %v564 = vld [vmem:[#allocation6 + $0xbe8] sm:$0xff]
    %v565 = vld [vmem:[#allocation6 + $0xbf0] sm:$0xff]
    %v566 = vld [vmem:[#allocation6 + $0xbf8] sm:$0xff]
    %v567 = vld [vmem:[#allocation6 + $0xc00] sm:$0xff]
    %v568 = vld [vmem:[#allocation6 + $0xc08] sm:$0xff]
    %v569 = vld [vmem:[#allocation6 + $0xc10] sm:$0xff]
    %v570 = vld [vmem:[#allocation6 + $0xc18] sm:$0xff]
    %v571 = vld [vmem:[#allocation6 + $0xc20] sm:$0xff]
    %v572 = vld [vmem:[#allocation6 + $0xc28] sm:$0xff]
    %v573 = vld [vmem:[#allocation6 + $0xc30] sm:$0xff]
    %v574 = vld [vmem:[#allocation6 + $0xc38] sm:$0xff]
    %v575 = vld [vmem:[#allocation6 + $0xc40] sm:$0xff]
    %v576 = vld [vmem:[#allocation6 + $0xc48] sm:$0xff]
    %v577 = vld [vmem:[#allocation6 + $0xc50] sm:$0xff]
    %v578 = vld [vmem:[#allocation6 + $0xc58] sm:$0xff]
    %v579 = vld [vmem:[#allocation6 + $0xc60] sm:$0xff]
    %v580 = vld [vmem:[#allocation6 + $0xc68] sm:$0xff]
    %v581 = vld [vmem:[#allocation6 + $0xc70] sm:$0xff]
    %v582 = vld [vmem:[#allocation6 + $0xc78] sm:$0xff]
    %v583 = vld [vmem:[#allocation6 + $0xc80] sm:$0xff]
    %v584 = vld [vmem:[#allocation6 + $0xc88] sm:$0xff]
    %v585 = vld [vmem:[#allocation6 + $0xc90] sm:$0xff]
    %v586 = vld [vmem:[#allocation6 + $0xc98] sm:$0xff]
    %v587 = vld [vmem:[#allocation6 + $0xca0] sm:$0xff]
    %v588 = vld [vmem:[#allocation6 + $0xca8] sm:$0xff]
    %v589 = vld [vmem:[#allocation6 + $0xcb0] sm:$0xff]
    %v590 = vld [vmem:[#allocation6 + $0xcb8] sm:$0xff]
    %v591 = vld [vmem:[#allocation6 + $0xcc0] sm:$0xff]
    %v592 = vld [vmem:[#allocation6 + $0xcc8] sm:$0xff]
    %v593 = vld [vmem:[#allocation6 + $0xcd0] sm:$0xff]
    %v594 = vld [vmem:[#allocation6 + $0xcd8] sm:$0xff]
    %v595 = vld [vmem:[#allocation6 + $0xce0] sm:$0xff]
    %v596 = vld [vmem:[#allocation6 + $0xce8] sm:$0xff]
    %v597 = vld [vmem:[#allocation6 + $0xcf0] sm:$0xff]
    %v598 = vld [vmem:[#allocation6 + $0xcf8] sm:$0xff]
    %v599 = vld [vmem:[#allocation6 + $0xd00] sm:$0xff]
    %v600 = vld [vmem:[#allocation6 + $0xd08] sm:$0xff]
    %v601 = vld [vmem:[#allocation6 + $0xd10] sm:$0xff]
    %v602 = vld [vmem:[#allocation6 + $0xd18] sm:$0xff]
    %v603 = vld [vmem:[#allocation6 + $0xd20] sm:$0xff]
    %v604 = vld [vmem:[#allocation6 + $0xd28] sm:$0xff]
    %v605 = vld [vmem:[#allocation6 + $0xd30] sm:$0xff]
    %v606 = vld [vmem:[#allocation6 + $0xd38] sm:$0xff]
    %v607 = vld [vmem:[#allocation6 + $0xd40] sm:$0xff]
    %v608 = vld [vmem:[#allocation6 + $0xd48] sm:$0xff]
    %v609 = vld [vmem:[#allocation6 + $0xd50] sm:$0xff]
    %v610 = vld [vmem:[#allocation6 + $0xd58] sm:$0xff]
    %v611 = vld [vmem:[#allocation6 + $0xd60] sm:$0xff]
    %v612 = vld [vmem:[#allocation6 + $0xd68] sm:$0xff]
    %v613 = vld [vmem:[#allocation6 + $0xd70] sm:$0xff]
    %v614 = vld [vmem:[#allocation6 + $0xd78] sm:$0xff]
    %v615 = vld [vmem:[#allocation6 + $0xd80] sm:$0xff]
    %v616 = vld [vmem:[#allocation6 + $0xd88] sm:$0xff]
    %v617 = vld [vmem:[#allocation6 + $0xd90] sm:$0xff]
    %v618 = vld [vmem:[#allocation6 + $0xd98] sm:$0xff]
    %v619 = vld [vmem:[#allocation6 + $0xda0] sm:$0xff]
    %v620 = vld [vmem:[#allocation6 + $0xda8] sm:$0xff]
    %v621 = vld [vmem:[#allocation6 + $0xdb0] sm:$0xff]
    %v622 = vld [vmem:[#allocation6 + $0xdb8] sm:$0xff]
    %v623 = vld [vmem:[#allocation6 + $0xdc0] sm:$0xff]
    %v624 = vld [vmem:[#allocation6 + $0xdc8] sm:$0xff]
    %v625 = vld [vmem:[#allocation6 + $0xdd0] sm:$0xff]
    %v626 = vld [vmem:[#allocation6 + $0xdd8] sm:$0xff]
    %v627 = vld [vmem:[#allocation6 + $0xde0] sm:$0xff]
    %v628 = vld [vmem:[#allocation6 + $0xde8] sm:$0xff]
    %v629 = vld [vmem:[#allocation6 + $0xdf0] sm:$0xff]
    %v630 = vld [vmem:[#allocation6 + $0xdf8] sm:$0xff]
    %v631 = vld [vmem:[#allocation6 + $0xe00] sm:$0xff]
    %v632 = vld [vmem:[#allocation6 + $0xe08] sm:$0xff]
    %v633 = vld [vmem:[#allocation6 + $0xe10] sm:$0xff]
    %v634 = vld [vmem:[#allocation6 + $0xe18] sm:$0xff]
    %v635 = vld [vmem:[#allocation6 + $0xe20] sm:$0xff]
    %v636 = vld [vmem:[#allocation6 + $0xe28] sm:$0xff]
    %v637 = vld [vmem:[#allocation6 + $0xe30] sm:$0xff]
    %v638 = vld [vmem:[#allocation6 + $0xe38] sm:$0xff]
    %v639 = vld [vmem:[#allocation6 + $0xe40] sm:$0xff]
    %v640 = vld [vmem:[#allocation6 + $0xe48] sm:$0xff]
    %v641 = vld [vmem:[#allocation6 + $0xe50] sm:$0xff]
    %v642 = vld [vmem:[#allocation6 + $0xe58] sm:$0xff]
    %v643 = vld [vmem:[#allocation6 + $0xe60] sm:$0xff]
    %v644 = vld [vmem:[#allocation6 + $0xe68] sm:$0xff]
    %v645 = vld [vmem:[#allocation6 + $0xe70] sm:$0xff]
    %v646 = vld [vmem:[#allocation6 + $0xe78] sm:$0xff]
    %v647 = vld [vmem:[#allocation6 + $0xe80] sm:$0xff]
    %v648 = vld [vmem:[#allocation6 + $0xe88] sm:$0xff]
    %v649 = vld [vmem:[#allocation6 + $0xe90] sm:$0xff]
    %v650 = vld [vmem:[#allocation6 + $0xe98] sm:$0xff]
    %v651 = vld [vmem:[#allocation6 + $0xea0] sm:$0xff]
    %v652 = vld [vmem:[#allocation6 + $0xea8] sm:$0xff]
    %v653 = vld [vmem:[#allocation6 + $0xeb0] sm:$0xff]
    %v654 = vld [vmem:[#allocation6 + $0xeb8] sm:$0xff]
    %v655 = vld [vmem:[#allocation6 + $0xec0] sm:$0xff]
    %v656 = vld [vmem:[#allocation6 + $0xec8] sm:$0xff]
    %v657 = vld [vmem:[#allocation6 + $0xed0] sm:$0xff]
    %v658 = vld [vmem:[#allocation6 + $0xed8] sm:$0xff]
    %v659 = vld [vmem:[#allocation6 + $0xee0] sm:$0xff]
    %v660 = vld [vmem:[#allocation6 + $0xee8] sm:$0xff]
    %v661 = vld [vmem:[#allocation6 + $0xef0] sm:$0xff]
    %v662 = vld [vmem:[#allocation6 + $0xef8] sm:$0xff]
    %v663 = vld [vmem:[#allocation6 + $0xf00] sm:$0xff]
    %v664 = vld [vmem:[#allocation6 + $0xf08] sm:$0xff]
    %v665 = vld [vmem:[#allocation6 + $0xf10] sm:$0xff]
    %v666 = vld [vmem:[#allocation6 + $0xf18] sm:$0xff]
    %v667 = vld [vmem:[#allocation6 + $0xf20] sm:$0xff]
    %v668 = vld [vmem:[#allocation6 + $0xf28] sm:$0xff]
    %v669 = vld [vmem:[#allocation6 + $0xf30] sm:$0xff]
    %v670 = vld [vmem:[#allocation6 + $0xf38] sm:$0xff]
    %v671 = vld [vmem:[#allocation6 + $0xf40] sm:$0xff]
    %v672 = vld [vmem:[#allocation6 + $0xf48] sm:$0xff]
    %v673 = vld [vmem:[#allocation6 + $0xf50] sm:$0xff]
    %v674 = vld [vmem:[#allocation6 + $0xf58] sm:$0xff]
    %v675 = vld [vmem:[#allocation6 + $0xf60] sm:$0xff]
    %v676 = vld [vmem:[#allocation6 + $0xf68] sm:$0xff]
    %v677 = vld [vmem:[#allocation6 + $0xf70] sm:$0xff]
    %v678 = vld [vmem:[#allocation6 + $0xf78] sm:$0xff]
    %v679 = vld [vmem:[#allocation6 + $0xf80] sm:$0xff]
    %v680 = vld [vmem:[#allocation6 + $0xf88] sm:$0xff]
    %v681 = vld [vmem:[#allocation6 + $0xf90] sm:$0xff]
    %v682 = vld [vmem:[#allocation6 + $0xf98] sm:$0xff]
    %v683 = vld [vmem:[#allocation6 + $0xfa0] sm:$0xff]
    %v684 = vld [vmem:[#allocation6 + $0xfa8] sm:$0xff]
    %v685 = vld [vmem:[#allocation6 + $0xfb0] sm:$0xff]
    %v686 = vld [vmem:[#allocation6 + $0xfb8] sm:$0xff]
    %v687 = vld [vmem:[#allocation6 + $0xfc0] sm:$0xff]
    %v688 = vld [vmem:[#allocation6 + $0xfc8] sm:$0xff]
    %v689 = vld [vmem:[#allocation6 + $0xfd0] sm:$0xff]
    %v690 = vld [vmem:[#allocation6 + $0xfd8] sm:$0xff]
    %v691 = vld [vmem:[#allocation6 + $0xfe0] sm:$0xff]
    %v692 = vld [vmem:[#allocation6 + $0xfe8] sm:$0xff]
    %v693 = vld [vmem:[#allocation6 + $0xff0] sm:$0xff]
    %v694 = vld [vmem:[#allocation6 + $0xff8] sm:$0xff]
    %v695 = vld [vmem:[#allocation6 + $0x1000] sm:$0xff]
    %v696 = vld [vmem:[#allocation6 + $0x1008] sm:$0xff]
    %v697 = vld [vmem:[#allocation6 + $0x1010] sm:$0xff]
    %v698 = vld [vmem:[#allocation6 + $0x1018] sm:$0xff]
    %v699 = vld [vmem:[#allocation6 + $0x1020] sm:$0xff]
    %v700 = vld [vmem:[#allocation6 + $0x1028] sm:$0xff]
    %v701 = vld [vmem:[#allocation6 + $0x1030] sm:$0xff]
    %v702 = vld [vmem:[#allocation6 + $0x1038] sm:$0xff]
    %v703 = vld [vmem:[#allocation6 + $0x1040] sm:$0xff]
    %v704 = vld [vmem:[#allocation6 + $0x1048] sm:$0xff]
    %v705 = vld [vmem:[#allocation6 + $0x1050] sm:$0xff]
    %v706 = vld [vmem:[#allocation6 + $0x1058] sm:$0xff]
    %v707 = vld [vmem:[#allocation6 + $0x1060] sm:$0xff]
    %v708 = vld [vmem:[#allocation6 + $0x1068] sm:$0xff]
    %v709 = vld [vmem:[#allocation6 + $0x1070] sm:$0xff]
    %v710 = vld [vmem:[#allocation6 + $0x1078] sm:$0xff]
    %v711 = vld [vmem:[#allocation6 + $0x1080] sm:$0xff]
    %v712 = vld [vmem:[#allocation6 + $0x1088] sm:$0xff]
    %v713 = vld [vmem:[#allocation6 + $0x1090] sm:$0xff]
    %v714 = vld [vmem:[#allocation6 + $0x1098] sm:$0xff]
    %v715 = vld [vmem:[#allocation6 + $0x10a0] sm:$0xff]
    %v716 = vld [vmem:[#allocation6 + $0x10a8] sm:$0xff]
    %v717 = vld [vmem:[#allocation6 + $0x10b0] sm:$0xff]
    %v718 = vld [vmem:[#allocation6 + $0x10b8] sm:$0xff]
    %v719 = vld [vmem:[#allocation6 + $0x10c0] sm:$0xff]
    %v720 = vld [vmem:[#allocation6 + $0x10c8] sm:$0xff]
    %v721 = vld [vmem:[#allocation6 + $0x10d0] sm:$0xff]
    %v722 = vld [vmem:[#allocation6 + $0x10d8] sm:$0xff]
    %v723 = vld [vmem:[#allocation6 + $0x10e0] sm:$0xff]
    %v724 = vld [vmem:[#allocation6 + $0x10e8] sm:$0xff]
    %v725 = vld [vmem:[#allocation6 + $0x10f0] sm:$0xff]
    %v726 = vld [vmem:[#allocation6 + $0x10f8] sm:$0xff]
    %v727 = vld [vmem:[#allocation6 + $0x1100] sm:$0xff]
    %v728 = vld [vmem:[#allocation6 + $0x1108] sm:$0xff]
    %v729 = vld [vmem:[#allocation6 + $0x1110] sm:$0xff]
    %v730 = vld [vmem:[#allocation6 + $0x1118] sm:$0xff]
    %v731 = vld [vmem:[#allocation6 + $0x1120] sm:$0xff]
    %v732 = vld [vmem:[#allocation6 + $0x1128] sm:$0xff]
    %v733 = vld [vmem:[#allocation6 + $0x1130] sm:$0xff]
    %v734 = vld [vmem:[#allocation6 + $0x1138] sm:$0xff]
    %v735 = vld [vmem:[#allocation6 + $0x1140] sm:$0xff]
    %v736 = vld [vmem:[#allocation6 + $0x1148] sm:$0xff]
    %v737 = vld [vmem:[#allocation6 + $0x1150] sm:$0xff]
    %v738 = vld [vmem:[#allocation6 + $0x1158] sm:$0xff]
    %v739 = vld [vmem:[#allocation6 + $0x1160] sm:$0xff]
    %v740 = vld [vmem:[#allocation6 + $0x1168] sm:$0xff]
    %v741 = vld [vmem:[#allocation6 + $0x1170] sm:$0xff]
    %v742 = vld [vmem:[#allocation6 + $0x1178] sm:$0xff]
    %v743 = vld [vmem:[#allocation6 + $0x1180] sm:$0xff]
    %v744 = vld [vmem:[#allocation6 + $0x1188] sm:$0xff]
    %v745 = vld [vmem:[#allocation6 + $0x1190] sm:$0xff]
    %v746 = vld [vmem:[#allocation6 + $0x1198] sm:$0xff]
    %v747 = vld [vmem:[#allocation6 + $0x11a0] sm:$0xff]
    %v748 = vld [vmem:[#allocation6 + $0x11a8] sm:$0xff]
    %v749 = vld [vmem:[#allocation6 + $0x11b0] sm:$0xff]
    %v750 = vld [vmem:[#allocation6 + $0x11b8] sm:$0xff]
    %v751 = vld [vmem:[#allocation6 + $0x11c0] sm:$0xff]
    %v752 = vld [vmem:[#allocation6 + $0x11c8] sm:$0xff]
    %v753 = vld [vmem:[#allocation6 + $0x11d0] sm:$0xff]
    %v754 = vld [vmem:[#allocation6 + $0x11d8] sm:$0xff]
    %v755 = vld [vmem:[#allocation6 + $0x11e0] sm:$0xff]
    %v756 = vld [vmem:[#allocation6 + $0x11e8] sm:$0xff]
    %v757 = vld [vmem:[#allocation6 + $0x11f0] sm:$0xff]
    %v758 = vld [vmem:[#allocation6 + $0x11f8] sm:$0xff]
    %v759 = vld [vmem:[#allocation6 + $0x1200] sm:$0xff]
    %v760 = vld [vmem:[#allocation6 + $0x1208] sm:$0xff]
    %v761 = vld [vmem:[#allocation6 + $0x1210] sm:$0xff]
    %v762 = vld [vmem:[#allocation6 + $0x1218] sm:$0xff]
    %v763 = vld [vmem:[#allocation6 + $0x1220] sm:$0xff]
    %v764 = vld [vmem:[#allocation6 + $0x1228] sm:$0xff]
    %v765 = vld [vmem:[#allocation6 + $0x1230] sm:$0xff]
    %v766 = vld [vmem:[#allocation6 + $0x1238] sm:$0xff]
    %v767 = vld [vmem:[#allocation6 + $0x1240] sm:$0xff]
    %v768 = vld [vmem:[#allocation6 + $0x1248] sm:$0xff]
    %v769 = vld [vmem:[#allocation6 + $0x1250] sm:$0xff]
    %v770 = vld [vmem:[#allocation6 + $0x1258] sm:$0xff]
    %v771 = vld [vmem:[#allocation6 + $0x1260] sm:$0xff]
    %v772 = vld [vmem:[#allocation6 + $0x1268] sm:$0xff]
    %v773 = vld [vmem:[#allocation6 + $0x1270] sm:$0xff]
    %v774 = vld [vmem:[#allocation6 + $0x1278] sm:$0xff]
    %v775 = vld [vmem:[#allocation6 + $0x1280] sm:$0xff]
    %v776 = vld [vmem:[#allocation6 + $0x1288] sm:$0xff]
    %v777 = vld [vmem:[#allocation6 + $0x1290] sm:$0xff]
    %v778 = vld [vmem:[#allocation6 + $0x1298] sm:$0xff]
    %v779 = vld [vmem:[#allocation6 + $0x12a0] sm:$0xff]
    %v780 = vld [vmem:[#allocation6 + $0x12a8] sm:$0xff]
    %v781 = vld [vmem:[#allocation6 + $0x12b0] sm:$0xff]
    %v782 = vld [vmem:[#allocation6 + $0x12b8] sm:$0xff]
    %v783 = vld [vmem:[#allocation6 + $0x12c0] sm:$0xff]
    %v784 = vld [vmem:[#allocation6 + $0x12c8] sm:$0xff]
    %v785 = vld [vmem:[#allocation6 + $0x12d0] sm:$0xff]
    %v786 = vld [vmem:[#allocation6 + $0x12d8] sm:$0xff]
    %v787 = vld [vmem:[#allocation6 + $0x12e0] sm:$0xff]
    %v788 = vld [vmem:[#allocation6 + $0x12e8] sm:$0xff]
    %v789 = vld [vmem:[#allocation6 + $0x12f0] sm:$0xff]
    %v790 = vld [vmem:[#allocation6 + $0x12f8] sm:$0xff]
    %v791 = vld [vmem:[#allocation6 + $0x1300] sm:$0xff]
    %v792 = vld [vmem:[#allocation6 + $0x1308] sm:$0xff]
    %v793 = vld [vmem:[#allocation6 + $0x1310] sm:$0xff]
    %v794 = vld [vmem:[#allocation6 + $0x1318] sm:$0xff]
    %v795 = vld [vmem:[#allocation6 + $0x1320] sm:$0xff]
    %v796 = vld [vmem:[#allocation6 + $0x1328] sm:$0xff]
    %v797 = vld [vmem:[#allocation6 + $0x1330] sm:$0xff]
    %v798 = vld [vmem:[#allocation6 + $0x1338] sm:$0xff]
    %v799 = vld [vmem:[#allocation6 + $0x1340] sm:$0xff]
    %v800 = vld [vmem:[#allocation6 + $0x1348] sm:$0xff]
    %v801 = vld [vmem:[#allocation6 + $0x1350] sm:$0xff]
    %v802 = vld [vmem:[#allocation6 + $0x1358] sm:$0xff]
    %v803 = vld [vmem:[#allocation6 + $0x1360] sm:$0xff]
    %v804 = vld [vmem:[#allocation6 + $0x1368] sm:$0xff]
    %v805 = vld [vmem:[#allocation6 + $0x1370] sm:$0xff]
    %v806 = vld [vmem:[#allocation6 + $0x1378] sm:$0xff]
    %v807 = vld [vmem:[#allocation6 + $0x1380] sm:$0xff]
    %v808 = vld [vmem:[#allocation6 + $0x1388] sm:$0xff]
    %v809 = vld [vmem:[#allocation6 + $0x1390] sm:$0xff]
    %v810 = vld [vmem:[#allocation6 + $0x1398] sm:$0xff]
    %v811 = vld [vmem:[#allocation6 + $0x13a0] sm:$0xff]
    %v812 = vld [vmem:[#allocation6 + $0x13a8] sm:$0xff]
    %v813 = vld [vmem:[#allocation6 + $0x13b0] sm:$0xff]
    %v814 = vld [vmem:[#allocation6 + $0x13b8] sm:$0xff]
    %v815 = vld [vmem:[#allocation6 + $0x13c0] sm:$0xff]
    %v816 = vld [vmem:[#allocation6 + $0x13c8] sm:$0xff]
    %v817 = vld [vmem:[#allocation6 + $0x13d0] sm:$0xff]
    %v818 = vld [vmem:[#allocation6 + $0x13d8] sm:$0xff]
    %v819 = vld [vmem:[#allocation6 + $0x13e0] sm:$0xff]
    %v820 = vld [vmem:[#allocation6 + $0x13e8] sm:$0xff]
    %v821 = vld [vmem:[#allocation6 + $0x13f0] sm:$0xff]
    %v822 = vld [vmem:[#allocation6 + $0x13f8] sm:$0xff]
    %v823 = vld [vmem:[#allocation6 + $0x1400] sm:$0xff]
    %v824 = vld [vmem:[#allocation6 + $0x1408] sm:$0xff]
    %v825 = vld [vmem:[#allocation6 + $0x1410] sm:$0xff]
    %v826 = vld [vmem:[#allocation6 + $0x1418] sm:$0xff]
    %v827 = vld [vmem:[#allocation6 + $0x1420] sm:$0xff]
    %v828 = vld [vmem:[#allocation6 + $0x1428] sm:$0xff]
    %v829 = vld [vmem:[#allocation6 + $0x1430] sm:$0xff]
    %v830 = vld [vmem:[#allocation6 + $0x1438] sm:$0xff]
    %v831 = vld [vmem:[#allocation6 + $0x1440] sm:$0xff]
    %v832 = vld [vmem:[#allocation6 + $0x1448] sm:$0xff]
    %v833 = vld [vmem:[#allocation6 + $0x1450] sm:$0xff]
    %v834 = vld [vmem:[#allocation6 + $0x1458] sm:$0xff]
    %v835 = vld [vmem:[#allocation6 + $0x1460] sm:$0xff]
    %v836 = vld [vmem:[#allocation6 + $0x1468] sm:$0xff]
    %v837 = vld [vmem:[#allocation6 + $0x1470] sm:$0xff]
    %v838 = vld [vmem:[#allocation6 + $0x1478] sm:$0xff]
    %v839 = vld [vmem:[#allocation6 + $0x1480] sm:$0xff]
    %v840 = vld [vmem:[#allocation6 + $0x1488] sm:$0xff]
    %v841 = vld [vmem:[#allocation6 + $0x1490] sm:$0xff]
    %v842 = vld [vmem:[#allocation6 + $0x1498] sm:$0xff]
    %v843 = vld [vmem:[#allocation6 + $0x14a0] sm:$0xff]
    %v844 = vld [vmem:[#allocation6 + $0x14a8] sm:$0xff]
    %v845 = vld [vmem:[#allocation6 + $0x14b0] sm:$0xff]
    %v846 = vld [vmem:[#allocation6 + $0x14b8] sm:$0xff]
    %v847 = vld [vmem:[#allocation6 + $0x14c0] sm:$0xff]
    %v848 = vld [vmem:[#allocation6 + $0x14c8] sm:$0xff]
    %v849 = vld [vmem:[#allocation6 + $0x14d0] sm:$0xff]
    %v850 = vld [vmem:[#allocation6 + $0x14d8] sm:$0xff]
    %v851 = vld [vmem:[#allocation6 + $0x14e0] sm:$0xff]
    %v852 = vld [vmem:[#allocation6 + $0x14e8] sm:$0xff]
    %v853 = vld [vmem:[#allocation6 + $0x14f0] sm:$0xff]
    %v854 = vld [vmem:[#allocation6 + $0x14f8] sm:$0xff]
    %v855 = vld [vmem:[#allocation6 + $0x1500] sm:$0xff]
    %v856 = vld [vmem:[#allocation6 + $0x1508] sm:$0xff]
    %v857 = vld [vmem:[#allocation6 + $0x1510] sm:$0xff]
    %v858 = vld [vmem:[#allocation6 + $0x1518] sm:$0xff]
    %v859 = vld [vmem:[#allocation6 + $0x1520] sm:$0xff]
    %v860 = vld [vmem:[#allocation6 + $0x1528] sm:$0xff]
    %v861 = vld [vmem:[#allocation6 + $0x1530] sm:$0xff]
    %v862 = vld [vmem:[#allocation6 + $0x1538] sm:$0xff]
    %v863 = vld [vmem:[#allocation6 + $0x1540] sm:$0xff]
    %v864 = vld [vmem:[#allocation6 + $0x1548] sm:$0xff]
    %v865 = vld [vmem:[#allocation6 + $0x1550] sm:$0xff]
    %v866 = vld [vmem:[#allocation6 + $0x1558] sm:$0xff]
    %v867 = vld [vmem:[#allocation6 + $0x1560] sm:$0xff]
    %v868 = vld [vmem:[#allocation6 + $0x1568] sm:$0xff]
    %v869 = vld [vmem:[#allocation6 + $0x1570] sm:$0xff]
    %v870 = vld [vmem:[#allocation6 + $0x1578] sm:$0xff]
    %v871 = vld [vmem:[#allocation6 + $0x1580] sm:$0xff]
    %v872 = vld [vmem:[#allocation6 + $0x1588] sm:$0xff]
    %v873 = vld [vmem:[#allocation6 + $0x1590] sm:$0xff]
    %v874 = vld [vmem:[#allocation6 + $0x1598] sm:$0xff]
    %v875 = vld [vmem:[#allocation6 + $0x15a0] sm:$0xff]
    %v876 = vld [vmem:[#allocation6 + $0x15a8] sm:$0xff]
    %v877 = vld [vmem:[#allocation6 + $0x15b0] sm:$0xff]
    %v878 = vld [vmem:[#allocation6 + $0x15b8] sm:$0xff]
    %v879 = vld [vmem:[#allocation6 + $0x15c0] sm:$0xff]
    %v880 = vld [vmem:[#allocation6 + $0x15c8] sm:$0xff]
    %v881 = vld [vmem:[#allocation6 + $0x15d0] sm:$0xff]
    %v882 = vld [vmem:[#allocation6 + $0x15d8] sm:$0xff]
    %v883 = vld [vmem:[#allocation6 + $0x15e0] sm:$0xff]
    %v884 = vld [vmem:[#allocation6 + $0x15e8] sm:$0xff]
    %v885 = vld [vmem:[#allocation6 + $0x15f0] sm:$0xff]
    %v886 = vld [vmem:[#allocation6 + $0x15f8] sm:$0xff]
    %v887 = vld [vmem:[#allocation6 + $0x1600] sm:$0xff]
    %v888 = vld [vmem:[#allocation6 + $0x1608] sm:$0xff]
    %v889 = vld [vmem:[#allocation6 + $0x1610] sm:$0xff]
    %v890 = vld [vmem:[#allocation6 + $0x1618] sm:$0xff]
    %v891 = vld [vmem:[#allocation6 + $0x1620] sm:$0xff]
    %v892 = vld [vmem:[#allocation6 + $0x1628] sm:$0xff]
    %v893 = vld [vmem:[#allocation6 + $0x1630] sm:$0xff]
    %v894 = vld [vmem:[#allocation6 + $0x1638] sm:$0xff]
    %v895 = vld [vmem:[#allocation6 + $0x1640] sm:$0xff]
    %v896 = vld [vmem:[#allocation6 + $0x1648] sm:$0xff]
    %v897 = vld [vmem:[#allocation6 + $0x1650] sm:$0xff]
    %v898 = vld [vmem:[#allocation6 + $0x1658] sm:$0xff]
    %v899 = vld [vmem:[#allocation6 + $0x1660] sm:$0xff]
    %v900 = vld [vmem:[#allocation6 + $0x1668] sm:$0xff]
    %v901 = vld [vmem:[#allocation6 + $0x1670] sm:$0xff]
    %v902 = vld [vmem:[#allocation6 + $0x1678] sm:$0xff]
    %v903 = vld [vmem:[#allocation7] sm:$0xff]
    %v904 = vld [vmem:[#allocation7 + $0x8] sm:$0xff]
    %v905 = vld [vmem:[#allocation7 + $0x10] sm:$0xf]
    %v909 = vperm.slane %v903, 0
    %v910 = vperm.slane %v903, 1
    %v911 = vperm.slane %v903, 2
    %v912 = vperm.slane %v903, 3
    %v913 = vperm.slane %v903, 4
    %v914 = vperm.slane %v903, 5
    %v915 = vperm.slane %v903, 6
    %v916 = vperm.slane %v903, 7
    %v917 = vperm.slane %v904, 0
    %v918 = vperm.slane %v904, 1
    %v919 = vperm.slane %v904, 2
    %v920 = vperm.slane %v904, 3
    %v921 = vperm.slane %v904, 4
    %v922 = vperm.slane %v904, 5
    %v923 = vperm.slane %v904, 6
    %v924 = vperm.slane %v904, 7
    %v925 = vperm.slane %v905, 0
    %v926 = vperm.slane %v905, 1
    %v927 = vperm.slane %v905, 2
    %v928 = vperm.slane %v905, 3
    %vm949 = vcmask 261120
    %v951 = vsel %vm949, %v182, 0
    %953 = vmatpush.msra.mxu0 %v483
    %954 = vmatpush.msra.mxu0 %v463
    %955 = vmatpush.msra.mxu0 %v443
    %956 = vmatpush.msra.mxu0 %v423
    %957 = vmatpush.msra.mxu0 %v403
    %958 = vmatpush.msra.mxu0 %v383
    %959 = vmatpush.msra.mxu0 %v363
    %960 = vmatpush.msra.mxu0 %v343
    %961 = vmatpush.msra.mxu0 %v323
    %962 = vmatpush.msra.mxu0 %v303
    %963 = vmatpush.msra.mxu0 %v283
    %964 = vmatpush.msra.mxu0 %v263
    %965 = vmatpush.msra.mxu0 %v243
    %966 = vmatpush.msra.mxu0 %v223
    %967 = vmatpush.msra.mxu0 %v203
    %968 = vmatpush.msra.mxu0 %v183
    %969 = vmatmul.f32.gmra.mxu0 %v180
    %v970 = vpop.f32.mrf.mxu0
    %v971 = vadd.f32 %v909, %v970
    %972 = vdwg.mxu0
    %973 = vmatpush.msra.mxu0 %v803
    %974 = vmatpush.msra.mxu0 %v783
    %975 = vmatpush.msra.mxu0 %v763
    %976 = vmatpush.msra.mxu0 %v743
    %977 = vmatpush.msra.mxu0 %v723
    %978 = vmatpush.msra.mxu0 %v703
    %979 = vmatpush.msra.mxu0 %v683
    %980 = vmatpush.msra.mxu0 %v663
    %981 = vmatpush.msra.mxu0 %v643
    %982 = vmatpush.msra.mxu0 %v623
    %983 = vmatpush.msra.mxu0 %v603
    %984 = vmatpush.msra.mxu0 %v583
    %985 = vmatpush.msra.mxu0 %v563
    %986 = vmatpush.msra.mxu0 %v543
    %987 = vmatpush.msra.mxu0 %v523
    %988 = vmatpush.msra.mxu0 %v503
    %989 = vmatmul.f32.gmra.mxu0 %v181
    %v990 = vpop.f32.mrf.mxu0
    %v991 = vadd.f32 %v971, %v990
    %992 = vdwg.mxu0
    %993 = vmatpush.msra.mxu0 0.0
    %994 = vmatpush.msra.mxu0 0.0
    %995 = vmatpush.msra.mxu0 0.0
    %996 = vmatpush.msra.mxu0 0.0
    %997 = vmatpush.msra.mxu0 0.0
    %998 = vmatpush.msra.mxu0 0.0
    %999 = vmatpush.msra.mxu0 0.0
    %1000 = vmatpush.msra.mxu0 0.0
    %1001 = vmatpush.msra.mxu0 0.0
    %1002 = vmatpush.msra.mxu0 0.0
    %1003 = vmatpush.msra.mxu0 0.0
    %1004 = vmatpush.msra.mxu0 0.0
    %1005 = vmatpush.msra.mxu0 %v883
    %1006 = vmatpush.msra.mxu0 %v863
    %1007 = vmatpush.msra.mxu0 %v843
    %1008 = vmatpush.msra.mxu0 %v823
    %1009 = vmatmul.f32.gmra.mxu0 %v951
    %v1010 = vpop.f32.mrf.mxu0
    %v1011 = vadd.f32 %v991, %v1010
    %1012 = vdwg.mxu0
    %1013 = vmatpush.msra.mxu0 %v484
    %1014 = vmatpush.msra.mxu0 %v464
    %1015 = vmatpush.msra.mxu0 %v444
    %1016 = vmatpush.msra.mxu0 %v424
    %1017 = vmatpush.msra.mxu0 %v404
    %1018 = vmatpush.msra.mxu0 %v384
    %1019 = vmatpush.msra.mxu0 %v364
    %1020 = vmatpush.msra.mxu0 %v344
    %1021 = vmatpush.msra.mxu0 %v324
    %1022 = vmatpush.msra.mxu0 %v304
    %1023 = vmatpush.msra.mxu0 %v284
    %1024 = vmatpush.msra.mxu0 %v264
    %1025 = vmatpush.msra.mxu0 %v244
    %1026 = vmatpush.msra.mxu0 %v224
    %1027 = vmatpush.msra.mxu0 %v204
    %1028 = vmatpush.msra.mxu0 %v184
    %1029 = vmatmul.f32.gmra.mxu0 %v180
    %v1030 = vpop.f32.mrf.mxu0
    %v1031 = vadd.f32 %v910, %v1030
    %1032 = vdwg.mxu0
    %1033 = vmatpush.msra.mxu0 %v804
    %1034 = vmatpush.msra.mxu0 %v784
    %1035 = vmatpush.msra.mxu0 %v764
    %1036 = vmatpush.msra.mxu0 %v744
    %1037 = vmatpush.msra.mxu0 %v724
    %1038 = vmatpush.msra.mxu0 %v704
    %1039 = vmatpush.msra.mxu0 %v684
    %1040 = vmatpush.msra.mxu0 %v664
    %1041 = vmatpush.msra.mxu0 %v644
    %1042 = vmatpush.msra.mxu0 %v624
    %1043 = vmatpush.msra.mxu0 %v604
    %1044 = vmatpush.msra.mxu0 %v584
    %1045 = vmatpush.msra.mxu0 %v564
    %1046 = vmatpush.msra.mxu0 %v544
    %1047 = vmatpush.msra.mxu0 %v524
    %1048 = vmatpush.msra.mxu0 %v504
    %1049 = vmatmul.f32.gmra.mxu0 %v181
    %v1050 = vpop.f32.mrf.mxu0
    %v1051 = vadd.f32 %v1031, %v1050
    %1052 = vdwg.mxu0
    %1053 = vmatpush.msra.mxu0 0.0
    %1054 = vmatpush.msra.mxu0 0.0
    %1055 = vmatpush.msra.mxu0 0.0
    %1056 = vmatpush.msra.mxu0 0.0
    %1057 = vmatpush.msra.mxu0 0.0
    %1058 = vmatpush.msra.mxu0 0.0
    %1059 = vmatpush.msra.mxu0 0.0
    %1060 = vmatpush.msra.mxu0 0.0
    %1061 = vmatpush.msra.mxu0 0.0
    %1062 = vmatpush.msra.mxu0 0.0
    %1063 = vmatpush.msra.mxu0 0.0
    %1064 = vmatpush.msra.mxu0 0.0
    %1065 = vmatpush.msra.mxu0 %v884
    %1066 = vmatpush.msra.mxu0 %v864
    %1067 = vmatpush.msra.mxu0 %v844
    %1068 = vmatpush.msra.mxu0 %v824
    %1069 = vmatmul.f32.gmra.mxu0 %v951
    %v1070 = vpop.f32.mrf.mxu0
    %v1071 = vadd.f32 %v1051, %v1070
    %1072 = vdwg.mxu0
    %1073 = vmatpush.msra.mxu0 %v485
    %1074 = vmatpush.msra.mxu0 %v465
    %1075 = vmatpush.msra.mxu0 %v445
    %1076 = vmatpush.msra.mxu0 %v425
    %1077 = vmatpush.msra.mxu0 %v405
    %1078 = vmatpush.msra.mxu0 %v385
    %1079 = vmatpush.msra.mxu0 %v365
    %1080 = vmatpush.msra.mxu0 %v345
    %1081 = vmatpush.msra.mxu0 %v325
    %1082 = vmatpush.msra.mxu0 %v305
    %1083 = vmatpush.msra.mxu0 %v285
    %1084 = vmatpush.msra.mxu0 %v265
    %1085 = vmatpush.msra.mxu0 %v245
    %1086 = vmatpush.msra.mxu0 %v225
    %1087 = vmatpush.msra.mxu0 %v205
    %1088 = vmatpush.msra.mxu0 %v185
    %1089 = vmatmul.f32.gmra.mxu0 %v180
    %v1090 = vpop.f32.mrf.mxu0
    %v1091 = vadd.f32 %v911, %v1090
    %1092 = vdwg.mxu0
    %1093 = vmatpush.msra.mxu0 %v805
    %1094 = vmatpush.msra.mxu0 %v785
    %1095 = vmatpush.msra.mxu0 %v765
    %1096 = vmatpush.msra.mxu0 %v745
    %1097 = vmatpush.msra.mxu0 %v725
    %1098 = vmatpush.msra.mxu0 %v705
    %1099 = vmatpush.msra.mxu0 %v685
    %1100 = vmatpush.msra.mxu0 %v665
    %1101 = vmatpush.msra.mxu0 %v645
    %1102 = vmatpush.msra.mxu0 %v625
    %1103 = vmatpush.msra.mxu0 %v605
    %1104 = vmatpush.msra.mxu0 %v585
    %1105 = vmatpush.msra.mxu0 %v565
    %1106 = vmatpush.msra.mxu0 %v545
    %1107 = vmatpush.msra.mxu0 %v525
    %1108 = vmatpush.msra.mxu0 %v505
    %1109 = vmatmul.f32.gmra.mxu0 %v181
    %v1110 = vpop.f32.mrf.mxu0
    %v1111 = vadd.f32 %v1091, %v1110
    %1112 = vdwg.mxu0
    %1113 = vmatpush.msra.mxu0 0.0
    %1114 = vmatpush.msra.mxu0 0.0
    %1115 = vmatpush.msra.mxu0 0.0
    %1116 = vmatpush.msra.mxu0 0.0
    %1117 = vmatpush.msra.mxu0 0.0
    %1118 = vmatpush.msra.mxu0 0.0
    %1119 = vmatpush.msra.mxu0 0.0
    %1120 = vmatpush.msra.mxu0 0.0
    %1121 = vmatpush.msra.mxu0 0.0
    %1122 = vmatpush.msra.mxu0 0.0
    %1123 = vmatpush.msra.mxu0 0.0
    %1124 = vmatpush.msra.mxu0 0.0
    %1125 = vmatpush.msra.mxu0 %v885
    %1126 = vmatpush.msra.mxu0 %v865
    %1127 = vmatpush.msra.mxu0 %v845
    %1128 = vmatpush.msra.mxu0 %v825
    %1129 = vmatmul.f32.gmra.mxu0 %v951
    %v1130 = vpop.f32.mrf.mxu0
    %v1131 = vadd.f32 %v1111, %v1130
    %1132 = vdwg.mxu0
    %1133 = vmatpush.msra.mxu0 %v486
    %1134 = vmatpush.msra.mxu0 %v466
    %1135 = vmatpush.msra.mxu0 %v446
    %1136 = vmatpush.msra.mxu0 %v426
    %1137 = vmatpush.msra.mxu0 %v406
    %1138 = vmatpush.msra.mxu0 %v386
    %1139 = vmatpush.msra.mxu0 %v366
    %1140 = vmatpush.msra.mxu0 %v346
    %1141 = vmatpush.msra.mxu0 %v326
    %1142 = vmatpush.msra.mxu0 %v306
    %1143 = vmatpush.msra.mxu0 %v286
    %1144 = vmatpush.msra.mxu0 %v266
    %1145 = vmatpush.msra.mxu0 %v246
    %1146 = vmatpush.msra.mxu0 %v226
    %1147 = vmatpush.msra.mxu0 %v206
    %1148 = vmatpush.msra.mxu0 %v186
    %1149 = vmatmul.f32.gmra.mxu0 %v180
    %v1150 = vpop.f32.mrf.mxu0
    %v1151 = vadd.f32 %v912, %v1150
    %1152 = vdwg.mxu0
    %1153 = vmatpush.msra.mxu0 %v806
    %1154 = vmatpush.msra.mxu0 %v786
    %1155 = vmatpush.msra.mxu0 %v766
    %1156 = vmatpush.msra.mxu0 %v746
    %1157 = vmatpush.msra.mxu0 %v726
    %1158 = vmatpush.msra.mxu0 %v706
    %1159 = vmatpush.msra.mxu0 %v686
    %1160 = vmatpush.msra.mxu0 %v666
    %1161 = vmatpush.msra.mxu0 %v646
    %1162 = vmatpush.msra.mxu0 %v626
    %1163 = vmatpush.msra.mxu0 %v606
    %1164 = vmatpush.msra.mxu0 %v586
    %1165 = vmatpush.msra.mxu0 %v566
    %1166 = vmatpush.msra.mxu0 %v546
    %1167 = vmatpush.msra.mxu0 %v526
    %1168 = vmatpush.msra.mxu0 %v506
    %1169 = vmatmul.f32.gmra.mxu0 %v181
    %v1170 = vpop.f32.mrf.mxu0
    %v1171 = vadd.f32 %v1151, %v1170
    %1172 = vdwg.mxu0
    %1173 = vmatpush.msra.mxu0 0.0
    %1174 = vmatpush.msra.mxu0 0.0
    %1175 = vmatpush.msra.mxu0 0.0
    %1176 = vmatpush.msra.mxu0 0.0
    %1177 = vmatpush.msra.mxu0 0.0
    %1178 = vmatpush.msra.mxu0 0.0
    %1179 = vmatpush.msra.mxu0 0.0
    %1180 = vmatpush.msra.mxu0 0.0
    %1181 = vmatpush.msra.mxu0 0.0
    %1182 = vmatpush.msra.mxu0 0.0
    %1183 = vmatpush.msra.mxu0 0.0
    %1184 = vmatpush.msra.mxu0 0.0
    %1185 = vmatpush.msra.mxu0 %v886
    %1186 = vmatpush.msra.mxu0 %v866
    %1187 = vmatpush.msra.mxu0 %v846
    %1188 = vmatpush.msra.mxu0 %v826
    %1189 = vmatmul.f32.gmra.mxu0 %v951
    %v1190 = vpop.f32.mrf.mxu0
    %v1191 = vadd.f32 %v1171, %v1190
    %1192 = vdwg.mxu0
    %1193 = vmatpush.msra.mxu0 %v487
    %1194 = vmatpush.msra.mxu0 %v467
    %1195 = vmatpush.msra.mxu0 %v447
    %1196 = vmatpush.msra.mxu0 %v427
    %1197 = vmatpush.msra.mxu0 %v407
    %1198 = vmatpush.msra.mxu0 %v387
    %1199 = vmatpush.msra.mxu0 %v367
    %1200 = vmatpush.msra.mxu0 %v347
    %1201 = vmatpush.msra.mxu0 %v327
    %1202 = vmatpush.msra.mxu0 %v307
    %1203 = vmatpush.msra.mxu0 %v287
    %1204 = vmatpush.msra.mxu0 %v267
    %1205 = vmatpush.msra.mxu0 %v247
    %1206 = vmatpush.msra.mxu0 %v227
    %1207 = vmatpush.msra.mxu0 %v207
    %1208 = vmatpush.msra.mxu0 %v187
    %1209 = vmatmul.f32.gmra.mxu0 %v180
    %v1210 = vpop.f32.mrf.mxu0
    %v1211 = vadd.f32 %v913, %v1210
    %1212 = vdwg.mxu0
    %1213 = vmatpush.msra.mxu0 %v807
    %1214 = vmatpush.msra.mxu0 %v787
    %1215 = vmatpush.msra.mxu0 %v767
    %1216 = vmatpush.msra.mxu0 %v747
    %1217 = vmatpush.msra.mxu0 %v727
    %1218 = vmatpush.msra.mxu0 %v707
    %1219 = vmatpush.msra.mxu0 %v687
    %1220 = vmatpush.msra.mxu0 %v667
    %1221 = vmatpush.msra.mxu0 %v647
    %1222 = vmatpush.msra.mxu0 %v627
    %1223 = vmatpush.msra.mxu0 %v607
    %1224 = vmatpush.msra.mxu0 %v587
    %1225 = vmatpush.msra.mxu0 %v567
    %1226 = vmatpush.msra.mxu0 %v547
    %1227 = vmatpush.msra.mxu0 %v527
    %1228 = vmatpush.msra.mxu0 %v507
    %1229 = vmatmul.f32.gmra.mxu0 %v181
    %v1230 = vpop.f32.mrf.mxu0
    %v1231 = vadd.f32 %v1211, %v1230
    %1232 = vdwg.mxu0
    %1233 = vmatpush.msra.mxu0 0.0
    %1234 = vmatpush.msra.mxu0 0.0
    %1235 = vmatpush.msra.mxu0 0.0
    %1236 = vmatpush.msra.mxu0 0.0
    %1237 = vmatpush.msra.mxu0 0.0
    %1238 = vmatpush.msra.mxu0 0.0
    %1239 = vmatpush.msra.mxu0 0.0
    %1240 = vmatpush.msra.mxu0 0.0
    %1241 = vmatpush.msra.mxu0 0.0
    %1242 = vmatpush.msra.mxu0 0.0
    %1243 = vmatpush.msra.mxu0 0.0
    %1244 = vmatpush.msra.mxu0 0.0
    %1245 = vmatpush.msra.mxu0 %v887
    %1246 = vmatpush.msra.mxu0 %v867
    %1247 = vmatpush.msra.mxu0 %v847
    %1248 = vmatpush.msra.mxu0 %v827
    %1249 = vmatmul.f32.gmra.mxu0 %v951
    %v1250 = vpop.f32.mrf.mxu0
    %v1251 = vadd.f32 %v1231, %v1250
    %1252 = vdwg.mxu0
    %1253 = vmatpush.msra.mxu0 %v488
    %1254 = vmatpush.msra.mxu0 %v468
    %1255 = vmatpush.msra.mxu0 %v448
    %1256 = vmatpush.msra.mxu0 %v428
    %1257 = vmatpush.msra.mxu0 %v408
    %1258 = vmatpush.msra.mxu0 %v388
    %1259 = vmatpush.msra.mxu0 %v368
    %1260 = vmatpush.msra.mxu0 %v348
    %1261 = vmatpush.msra.mxu0 %v328
    %1262 = vmatpush.msra.mxu0 %v308
    %1263 = vmatpush.msra.mxu0 %v288
    %1264 = vmatpush.msra.mxu0 %v268
    %1265 = vmatpush.msra.mxu0 %v248
    %1266 = vmatpush.msra.mxu0 %v228
    %1267 = vmatpush.msra.mxu0 %v208
    %1268 = vmatpush.msra.mxu0 %v188
    %1269 = vmatmul.f32.gmra.mxu0 %v180
    %v1270 = vpop.f32.mrf.mxu0
    %v1271 = vadd.f32 %v914, %v1270
    %1272 = vdwg.mxu0
    %1273 = vmatpush.msra.mxu0 %v808
    %1274 = vmatpush.msra.mxu0 %v788
    %1275 = vmatpush.msra.mxu0 %v768
    %1276 = vmatpush.msra.mxu0 %v748
    %1277 = vmatpush.msra.mxu0 %v728
    %1278 = vmatpush.msra.mxu0 %v708
    %1279 = vmatpush.msra.mxu0 %v688
    %1280 = vmatpush.msra.mxu0 %v668
    %1281 = vmatpush.msra.mxu0 %v648
    %1282 = vmatpush.msra.mxu0 %v628
    %1283 = vmatpush.msra.mxu0 %v608
    %1284 = vmatpush.msra.mxu0 %v588
    %1285 = vmatpush.msra.mxu0 %v568
    %1286 = vmatpush.msra.mxu0 %v548
    %1287 = vmatpush.msra.mxu0 %v528
    %1288 = vmatpush.msra.mxu0 %v508
    %1289 = vmatmul.f32.gmra.mxu0 %v181
    %v1290 = vpop.f32.mrf.mxu0
    %v1291 = vadd.f32 %v1271, %v1290
    %1292 = vdwg.mxu0
    %1293 = vmatpush.msra.mxu0 0.0
    %1294 = vmatpush.msra.mxu0 0.0
    %1295 = vmatpush.msra.mxu0 0.0
    %1296 = vmatpush.msra.mxu0 0.0
    %1297 = vmatpush.msra.mxu0 0.0
    %1298 = vmatpush.msra.mxu0 0.0
    %1299 = vmatpush.msra.mxu0 0.0
    %1300 = vmatpush.msra.mxu0 0.0
    %1301 = vmatpush.msra.mxu0 0.0
    %1302 = vmatpush.msra.mxu0 0.0
    %1303 = vmatpush.msra.mxu0 0.0
    %1304 = vmatpush.msra.mxu0 0.0
    %1305 = vmatpush.msra.mxu0 %v888
    %1306 = vmatpush.msra.mxu0 %v868
    %1307 = vmatpush.msra.mxu0 %v848
    %1308 = vmatpush.msra.mxu0 %v828
    %1309 = vmatmul.f32.gmra.mxu0 %v951
    %v1310 = vpop.f32.mrf.mxu0
    %v1311 = vadd.f32 %v1291, %v1310
    %1312 = vdwg.mxu0
    %1313 = vmatpush.msra.mxu0 %v489
    %1314 = vmatpush.msra.mxu0 %v469
    %1315 = vmatpush.msra.mxu0 %v449
    %1316 = vmatpush.msra.mxu0 %v429
    %1317 = vmatpush.msra.mxu0 %v409
    %1318 = vmatpush.msra.mxu0 %v389
    %1319 = vmatpush.msra.mxu0 %v369
    %1320 = vmatpush.msra.mxu0 %v349
    %1321 = vmatpush.msra.mxu0 %v329
    %1322 = vmatpush.msra.mxu0 %v309
    %1323 = vmatpush.msra.mxu0 %v289
    %1324 = vmatpush.msra.mxu0 %v269
    %1325 = vmatpush.msra.mxu0 %v249
    %1326 = vmatpush.msra.mxu0 %v229
    %1327 = vmatpush.msra.mxu0 %v209
    %1328 = vmatpush.msra.mxu0 %v189
    %1329 = vmatmul.f32.gmra.mxu0 %v180
    %v1330 = vpop.f32.mrf.mxu0
    %v1331 = vadd.f32 %v915, %v1330
    %1332 = vdwg.mxu0
    %1333 = vmatpush.msra.mxu0 %v809
    %1334 = vmatpush.msra.mxu0 %v789
    %1335 = vmatpush.msra.mxu0 %v769
    %1336 = vmatpush.msra.mxu0 %v749
    %1337 = vmatpush.msra.mxu0 %v729
    %1338 = vmatpush.msra.mxu0 %v709
    %1339 = vmatpush.msra.mxu0 %v689
    %1340 = vmatpush.msra.mxu0 %v669
    %1341 = vmatpush.msra.mxu0 %v649
    %1342 = vmatpush.msra.mxu0 %v629
    %1343 = vmatpush.msra.mxu0 %v609
    %1344 = vmatpush.msra.mxu0 %v589
    %1345 = vmatpush.msra.mxu0 %v569
    %1346 = vmatpush.msra.mxu0 %v549
    %1347 = vmatpush.msra.mxu0 %v529
    %1348 = vmatpush.msra.mxu0 %v509
    %1349 = vmatmul.f32.gmra.mxu0 %v181
    %v1350 = vpop.f32.mrf.mxu0
    %v1351 = vadd.f32 %v1331, %v1350
    %1352 = vdwg.mxu0
    %1353 = vmatpush.msra.mxu0 0.0
    %1354 = vmatpush.msra.mxu0 0.0
    %1355 = vmatpush.msra.mxu0 0.0
    %1356 = vmatpush.msra.mxu0 0.0
    %1357 = vmatpush.msra.mxu0 0.0
    %1358 = vmatpush.msra.mxu0 0.0
    %1359 = vmatpush.msra.mxu0 0.0
    %1360 = vmatpush.msra.mxu0 0.0
    %1361 = vmatpush.msra.mxu0 0.0
    %1362 = vmatpush.msra.mxu0 0.0
    %1363 = vmatpush.msra.mxu0 0.0
    %1364 = vmatpush.msra.mxu0 0.0
    %1365 = vmatpush.msra.mxu0 %v889
    %1366 = vmatpush.msra.mxu0 %v869
    %1367 = vmatpush.msra.mxu0 %v849
    %1368 = vmatpush.msra.mxu0 %v829
    %1369 = vmatmul.f32.gmra.mxu0 %v951
    %v1370 = vpop.f32.mrf.mxu0
    %v1371 = vadd.f32 %v1351, %v1370
    %1372 = vdwg.mxu0
    %1373 = vmatpush.msra.mxu0 %v490
    %1374 = vmatpush.msra.mxu0 %v470
    %1375 = vmatpush.msra.mxu0 %v450
    %1376 = vmatpush.msra.mxu0 %v430
    %1377 = vmatpush.msra.mxu0 %v410
    %1378 = vmatpush.msra.mxu0 %v390
    %1379 = vmatpush.msra.mxu0 %v370
    %1380 = vmatpush.msra.mxu0 %v350
    %1381 = vmatpush.msra.mxu0 %v330
    %1382 = vmatpush.msra.mxu0 %v310
    %1383 = vmatpush.msra.mxu0 %v290
    %1384 = vmatpush.msra.mxu0 %v270
    %1385 = vmatpush.msra.mxu0 %v250
    %1386 = vmatpush.msra.mxu0 %v230
    %1387 = vmatpush.msra.mxu0 %v210
    %1388 = vmatpush.msra.mxu0 %v190
    %1389 = vmatmul.f32.gmra.mxu0 %v180
    %v1390 = vpop.f32.mrf.mxu0
    %v1391 = vadd.f32 %v916, %v1390
    %1392 = vdwg.mxu0
    %1393 = vmatpush.msra.mxu0 %v810
    %1394 = vmatpush.msra.mxu0 %v790
    %1395 = vmatpush.msra.mxu0 %v770
    %1396 = vmatpush.msra.mxu0 %v750
    %1397 = vmatpush.msra.mxu0 %v730
    %1398 = vmatpush.msra.mxu0 %v710
    %1399 = vmatpush.msra.mxu0 %v690
    %1400 = vmatpush.msra.mxu0 %v670
    %1401 = vmatpush.msra.mxu0 %v650
    %1402 = vmatpush.msra.mxu0 %v630
    %1403 = vmatpush.msra.mxu0 %v610
    %1404 = vmatpush.msra.mxu0 %v590
    %1405 = vmatpush.msra.mxu0 %v570
    %1406 = vmatpush.msra.mxu0 %v550
    %1407 = vmatpush.msra.mxu0 %v530
    %1408 = vmatpush.msra.mxu0 %v510
    %1409 = vmatmul.f32.gmra.mxu0 %v181
    %v1410 = vpop.f32.mrf.mxu0
    %v1411 = vadd.f32 %v1391, %v1410
    %1412 = vdwg.mxu0
    %1413 = vmatpush.msra.mxu0 0.0
    %1414 = vmatpush.msra.mxu0 0.0
    %1415 = vmatpush.msra.mxu0 0.0
    %1416 = vmatpush.msra.mxu0 0.0
    %1417 = vmatpush.msra.mxu0 0.0
    %1418 = vmatpush.msra.mxu0 0.0
    %1419 = vmatpush.msra.mxu0 0.0
    %1420 = vmatpush.msra.mxu0 0.0
    %1421 = vmatpush.msra.mxu0 0.0
    %1422 = vmatpush.msra.mxu0 0.0
    %1423 = vmatpush.msra.mxu0 0.0
    %1424 = vmatpush.msra.mxu0 0.0
    %1425 = vmatpush.msra.mxu0 %v890
    %1426 = vmatpush.msra.mxu0 %v870
    %1427 = vmatpush.msra.mxu0 %v850
    %1428 = vmatpush.msra.mxu0 %v830
    %1429 = vmatmul.f32.gmra.mxu0 %v951
    %v1430 = vpop.f32.mrf.mxu0
    %v1431 = vadd.f32 %v1411, %v1430
    %1432 = vdwg.mxu0
    %1433 = vmatpush.msra.mxu0 %v491
    %1434 = vmatpush.msra.mxu0 %v471
    %1435 = vmatpush.msra.mxu0 %v451
    %1436 = vmatpush.msra.mxu0 %v431
    %1437 = vmatpush.msra.mxu0 %v411
    %1438 = vmatpush.msra.mxu0 %v391
    %1439 = vmatpush.msra.mxu0 %v371
    %1440 = vmatpush.msra.mxu0 %v351
    %1441 = vmatpush.msra.mxu0 %v331
    %1442 = vmatpush.msra.mxu0 %v311
    %1443 = vmatpush.msra.mxu0 %v291
    %1444 = vmatpush.msra.mxu0 %v271
    %1445 = vmatpush.msra.mxu0 %v251
    %1446 = vmatpush.msra.mxu0 %v231
    %1447 = vmatpush.msra.mxu0 %v211
    %1448 = vmatpush.msra.mxu0 %v191
    %1449 = vmatmul.f32.gmra.mxu0 %v180
    %v1450 = vpop.f32.mrf.mxu0
    %v1451 = vadd.f32 %v917, %v1450
    %1452 = vdwg.mxu0
    %1453 = vmatpush.msra.mxu0 %v811
    %1454 = vmatpush.msra.mxu0 %v791
    %1455 = vmatpush.msra.mxu0 %v771
    %1456 = vmatpush.msra.mxu0 %v751
    %1457 = vmatpush.msra.mxu0 %v731
    %1458 = vmatpush.msra.mxu0 %v711
    %1459 = vmatpush.msra.mxu0 %v691
    %1460 = vmatpush.msra.mxu0 %v671
    %1461 = vmatpush.msra.mxu0 %v651
    %1462 = vmatpush.msra.mxu0 %v631
    %1463 = vmatpush.msra.mxu0 %v611
    %1464 = vmatpush.msra.mxu0 %v591
    %1465 = vmatpush.msra.mxu0 %v571
    %1466 = vmatpush.msra.mxu0 %v551
    %1467 = vmatpush.msra.mxu0 %v531
    %1468 = vmatpush.msra.mxu0 %v511
    %1469 = vmatmul.f32.gmra.mxu0 %v181
    %v1470 = vpop.f32.mrf.mxu0
    %v1471 = vadd.f32 %v1451, %v1470
    %1472 = vdwg.mxu0
    %1473 = vmatpush.msra.mxu0 0.0
    %1474 = vmatpush.msra.mxu0 0.0
    %1475 = vmatpush.msra.mxu0 0.0
    %1476 = vmatpush.msra.mxu0 0.0
    %1477 = vmatpush.msra.mxu0 0.0
    %1478 = vmatpush.msra.mxu0 0.0
    %1479 = vmatpush.msra.mxu0 0.0
    %1480 = vmatpush.msra.mxu0 0.0
    %1481 = vmatpush.msra.mxu0 0.0
    %1482 = vmatpush.msra.mxu0 0.0
    %1483 = vmatpush.msra.mxu0 0.0
    %1484 = vmatpush.msra.mxu0 0.0
    %1485 = vmatpush.msra.mxu0 %v891
    %1486 = vmatpush.msra.mxu0 %v871
    %1487 = vmatpush.msra.mxu0 %v851
    %1488 = vmatpush.msra.mxu0 %v831
    %1489 = vmatmul.f32.gmra.mxu0 %v951
    %v1490 = vpop.f32.mrf.mxu0
    %v1491 = vadd.f32 %v1471, %v1490
    %1492 = vdwg.mxu0
    %1493 = vmatpush.msra.mxu0 %v492
    %1494 = vmatpush.msra.mxu0 %v472
    %1495 = vmatpush.msra.mxu0 %v452
    %1496 = vmatpush.msra.mxu0 %v432
    %1497 = vmatpush.msra.mxu0 %v412
    %1498 = vmatpush.msra.mxu0 %v392
    %1499 = vmatpush.msra.mxu0 %v372
    %1500 = vmatpush.msra.mxu0 %v352
    %1501 = vmatpush.msra.mxu0 %v332
    %1502 = vmatpush.msra.mxu0 %v312
    %1503 = vmatpush.msra.mxu0 %v292
    %1504 = vmatpush.msra.mxu0 %v272
    %1505 = vmatpush.msra.mxu0 %v252
    %1506 = vmatpush.msra.mxu0 %v232
    %1507 = vmatpush.msra.mxu0 %v212
    %1508 = vmatpush.msra.mxu0 %v192
    %1509 = vmatmul.f32.gmra.mxu0 %v180
    %v1510 = vpop.f32.mrf.mxu0
    %v1511 = vadd.f32 %v918, %v1510
    %1512 = vdwg.mxu0
    %1513 = vmatpush.msra.mxu0 %v812
    %1514 = vmatpush.msra.mxu0 %v792
    %1515 = vmatpush.msra.mxu0 %v772
    %1516 = vmatpush.msra.mxu0 %v752
    %1517 = vmatpush.msra.mxu0 %v732
    %1518 = vmatpush.msra.mxu0 %v712
    %1519 = vmatpush.msra.mxu0 %v692
    %1520 = vmatpush.msra.mxu0 %v672
    %1521 = vmatpush.msra.mxu0 %v652
    %1522 = vmatpush.msra.mxu0 %v632
    %1523 = vmatpush.msra.mxu0 %v612
    %1524 = vmatpush.msra.mxu0 %v592
    %1525 = vmatpush.msra.mxu0 %v572
    %1526 = vmatpush.msra.mxu0 %v552
    %1527 = vmatpush.msra.mxu0 %v532
    %1528 = vmatpush.msra.mxu0 %v512
    %1529 = vmatmul.f32.gmra.mxu0 %v181
    %v1530 = vpop.f32.mrf.mxu0
    %v1531 = vadd.f32 %v1511, %v1530
    %1532 = vdwg.mxu0
    %1533 = vmatpush.msra.mxu0 0.0
    %1534 = vmatpush.msra.mxu0 0.0
    %1535 = vmatpush.msra.mxu0 0.0
    %1536 = vmatpush.msra.mxu0 0.0
    %1537 = vmatpush.msra.mxu0 0.0
    %1538 = vmatpush.msra.mxu0 0.0
    %1539 = vmatpush.msra.mxu0 0.0
    %1540 = vmatpush.msra.mxu0 0.0
    %1541 = vmatpush.msra.mxu0 0.0
    %1542 = vmatpush.msra.mxu0 0.0
    %1543 = vmatpush.msra.mxu0 0.0
    %1544 = vmatpush.msra.mxu0 0.0
    %1545 = vmatpush.msra.mxu0 %v892
    %1546 = vmatpush.msra.mxu0 %v872
    %1547 = vmatpush.msra.mxu0 %v852
    %1548 = vmatpush.msra.mxu0 %v832
    %1549 = vmatmul.f32.gmra.mxu0 %v951
    %v1550 = vpop.f32.mrf.mxu0
    %v1551 = vadd.f32 %v1531, %v1550
    %1552 = vdwg.mxu0
    %1553 = vmatpush.msra.mxu0 %v493
    %1554 = vmatpush.msra.mxu0 %v473
    %1555 = vmatpush.msra.mxu0 %v453
    %1556 = vmatpush.msra.mxu0 %v433
    %1557 = vmatpush.msra.mxu0 %v413
    %1558 = vmatpush.msra.mxu0 %v393
    %1559 = vmatpush.msra.mxu0 %v373
    %1560 = vmatpush.msra.mxu0 %v353
    %1561 = vmatpush.msra.mxu0 %v333
    %1562 = vmatpush.msra.mxu0 %v313
    %1563 = vmatpush.msra.mxu0 %v293
    %1564 = vmatpush.msra.mxu0 %v273
    %1565 = vmatpush.msra.mxu0 %v253
    %1566 = vmatpush.msra.mxu0 %v233
    %1567 = vmatpush.msra.mxu0 %v213
    %1568 = vmatpush.msra.mxu0 %v193
    %1569 = vmatmul.f32.gmra.mxu0 %v180
    %v1570 = vpop.f32.mrf.mxu0
    %v1571 = vadd.f32 %v919, %v1570
    %1572 = vdwg.mxu0
    %1573 = vmatpush.msra.mxu0 %v813
    %1574 = vmatpush.msra.mxu0 %v793
    %1575 = vmatpush.msra.mxu0 %v773
    %1576 = vmatpush.msra.mxu0 %v753
    %1577 = vmatpush.msra.mxu0 %v733
    %1578 = vmatpush.msra.mxu0 %v713
    %1579 = vmatpush.msra.mxu0 %v693
    %1580 = vmatpush.msra.mxu0 %v673
    %1581 = vmatpush.msra.mxu0 %v653
    %1582 = vmatpush.msra.mxu0 %v633
    %1583 = vmatpush.msra.mxu0 %v613
    %1584 = vmatpush.msra.mxu0 %v593
    %1585 = vmatpush.msra.mxu0 %v573
    %1586 = vmatpush.msra.mxu0 %v553
    %1587 = vmatpush.msra.mxu0 %v533
    %1588 = vmatpush.msra.mxu0 %v513
    %1589 = vmatmul.f32.gmra.mxu0 %v181
    %v1590 = vpop.f32.mrf.mxu0
    %v1591 = vadd.f32 %v1571, %v1590
    %1592 = vdwg.mxu0
    %1593 = vmatpush.msra.mxu0 0.0
    %1594 = vmatpush.msra.mxu0 0.0
    %1595 = vmatpush.msra.mxu0 0.0
    %1596 = vmatpush.msra.mxu0 0.0
    %1597 = vmatpush.msra.mxu0 0.0
    %1598 = vmatpush.msra.mxu0 0.0
    %1599 = vmatpush.msra.mxu0 0.0
    %1600 = vmatpush.msra.mxu0 0.0
    %1601 = vmatpush.msra.mxu0 0.0
    %1602 = vmatpush.msra.mxu0 0.0
    %1603 = vmatpush.msra.mxu0 0.0
    %1604 = vmatpush.msra.mxu0 0.0
    %1605 = vmatpush.msra.mxu0 %v893
    %1606 = vmatpush.msra.mxu0 %v873
    %1607 = vmatpush.msra.mxu0 %v853
    %1608 = vmatpush.msra.mxu0 %v833
    %1609 = vmatmul.f32.gmra.mxu0 %v951
    %v1610 = vpop.f32.mrf.mxu0
    %v1611 = vadd.f32 %v1591, %v1610
    %1612 = vdwg.mxu0
    %1613 = vmatpush.msra.mxu0 %v494
    %1614 = vmatpush.msra.mxu0 %v474
    %1615 = vmatpush.msra.mxu0 %v454
    %1616 = vmatpush.msra.mxu0 %v434
    %1617 = vmatpush.msra.mxu0 %v414
    %1618 = vmatpush.msra.mxu0 %v394
    %1619 = vmatpush.msra.mxu0 %v374
    %1620 = vmatpush.msra.mxu0 %v354
    %1621 = vmatpush.msra.mxu0 %v334
    %1622 = vmatpush.msra.mxu0 %v314
    %1623 = vmatpush.msra.mxu0 %v294
    %1624 = vmatpush.msra.mxu0 %v274
    %1625 = vmatpush.msra.mxu0 %v254
    %1626 = vmatpush.msra.mxu0 %v234
    %1627 = vmatpush.msra.mxu0 %v214
    %1628 = vmatpush.msra.mxu0 %v194
    %1629 = vmatmul.f32.gmra.mxu0 %v180
    %v1630 = vpop.f32.mrf.mxu0
    %v1631 = vadd.f32 %v920, %v1630
    %1632 = vdwg.mxu0
    %1633 = vmatpush.msra.mxu0 %v814
    %1634 = vmatpush.msra.mxu0 %v794
    %1635 = vmatpush.msra.mxu0 %v774
    %1636 = vmatpush.msra.mxu0 %v754
    %1637 = vmatpush.msra.mxu0 %v734
    %1638 = vmatpush.msra.mxu0 %v714
    %1639 = vmatpush.msra.mxu0 %v694
    %1640 = vmatpush.msra.mxu0 %v674
    %1641 = vmatpush.msra.mxu0 %v654
    %1642 = vmatpush.msra.mxu0 %v634
    %1643 = vmatpush.msra.mxu0 %v614
    %1644 = vmatpush.msra.mxu0 %v594
    %1645 = vmatpush.msra.mxu0 %v574
    %1646 = vmatpush.msra.mxu0 %v554
    %1647 = vmatpush.msra.mxu0 %v534
    %1648 = vmatpush.msra.mxu0 %v514
    %1649 = vmatmul.f32.gmra.mxu0 %v181
    %v1650 = vpop.f32.mrf.mxu0
    %v1651 = vadd.f32 %v1631, %v1650
    %1652 = vdwg.mxu0
    %1653 = vmatpush.msra.mxu0 0.0
    %1654 = vmatpush.msra.mxu0 0.0
    %1655 = vmatpush.msra.mxu0 0.0
    %1656 = vmatpush.msra.mxu0 0.0
    %1657 = vmatpush.msra.mxu0 0.0
    %1658 = vmatpush.msra.mxu0 0.0
    %1659 = vmatpush.msra.mxu0 0.0
    %1660 = vmatpush.msra.mxu0 0.0
    %1661 = vmatpush.msra.mxu0 0.0
    %1662 = vmatpush.msra.mxu0 0.0
    %1663 = vmatpush.msra.mxu0 0.0
    %1664 = vmatpush.msra.mxu0 0.0
    %1665 = vmatpush.msra.mxu0 %v894
    %1666 = vmatpush.msra.mxu0 %v874
    %1667 = vmatpush.msra.mxu0 %v854
    %1668 = vmatpush.msra.mxu0 %v834
    %1669 = vmatmul.f32.gmra.mxu0 %v951
    %v1670 = vpop.f32.mrf.mxu0
    %v1671 = vadd.f32 %v1651, %v1670
    %1672 = vdwg.mxu0
    %1673 = vmatpush.msra.mxu0 %v495
    %1674 = vmatpush.msra.mxu0 %v475
    %1675 = vmatpush.msra.mxu0 %v455
    %1676 = vmatpush.msra.mxu0 %v435
    %1677 = vmatpush.msra.mxu0 %v415
    %1678 = vmatpush.msra.mxu0 %v395
    %1679 = vmatpush.msra.mxu0 %v375
    %1680 = vmatpush.msra.mxu0 %v355
    %1681 = vmatpush.msra.mxu0 %v335
    %1682 = vmatpush.msra.mxu0 %v315
    %1683 = vmatpush.msra.mxu0 %v295
    %1684 = vmatpush.msra.mxu0 %v275
    %1685 = vmatpush.msra.mxu0 %v255
    %1686 = vmatpush.msra.mxu0 %v235
    %1687 = vmatpush.msra.mxu0 %v215
    %1688 = vmatpush.msra.mxu0 %v195
    %1689 = vmatmul.f32.gmra.mxu0 %v180
    %v1690 = vpop.f32.mrf.mxu0
    %v1691 = vadd.f32 %v921, %v1690
    %1692 = vdwg.mxu0
    %1693 = vmatpush.msra.mxu0 %v815
    %1694 = vmatpush.msra.mxu0 %v795
    %1695 = vmatpush.msra.mxu0 %v775
    %1696 = vmatpush.msra.mxu0 %v755
    %1697 = vmatpush.msra.mxu0 %v735
    %1698 = vmatpush.msra.mxu0 %v715
    %1699 = vmatpush.msra.mxu0 %v695
    %1700 = vmatpush.msra.mxu0 %v675
    %1701 = vmatpush.msra.mxu0 %v655
    %1702 = vmatpush.msra.mxu0 %v635
    %1703 = vmatpush.msra.mxu0 %v615
    %1704 = vmatpush.msra.mxu0 %v595
    %1705 = vmatpush.msra.mxu0 %v575
    %1706 = vmatpush.msra.mxu0 %v555
    %1707 = vmatpush.msra.mxu0 %v535
    %1708 = vmatpush.msra.mxu0 %v515
    %1709 = vmatmul.f32.gmra.mxu0 %v181
    %v1710 = vpop.f32.mrf.mxu0
    %v1711 = vadd.f32 %v1691, %v1710
    %1712 = vdwg.mxu0
    %1713 = vmatpush.msra.mxu0 0.0
    %1714 = vmatpush.msra.mxu0 0.0
    %1715 = vmatpush.msra.mxu0 0.0
    %1716 = vmatpush.msra.mxu0 0.0
    %1717 = vmatpush.msra.mxu0 0.0
    %1718 = vmatpush.msra.mxu0 0.0
    %1719 = vmatpush.msra.mxu0 0.0
    %1720 = vmatpush.msra.mxu0 0.0
    %1721 = vmatpush.msra.mxu0 0.0
    %1722 = vmatpush.msra.mxu0 0.0
    %1723 = vmatpush.msra.mxu0 0.0
    %1724 = vmatpush.msra.mxu0 0.0
    %1725 = vmatpush.msra.mxu0 %v895
    %1726 = vmatpush.msra.mxu0 %v875
    %1727 = vmatpush.msra.mxu0 %v855
    %1728 = vmatpush.msra.mxu0 %v835
    %1729 = vmatmul.f32.gmra.mxu0 %v951
    %v1730 = vpop.f32.mrf.mxu0
    %v1731 = vadd.f32 %v1711, %v1730
    %1732 = vdwg.mxu0
    %1733 = vmatpush.msra.mxu0 %v496
    %1734 = vmatpush.msra.mxu0 %v476
    %1735 = vmatpush.msra.mxu0 %v456
    %1736 = vmatpush.msra.mxu0 %v436
    %1737 = vmatpush.msra.mxu0 %v416
    %1738 = vmatpush.msra.mxu0 %v396
    %1739 = vmatpush.msra.mxu0 %v376
    %1740 = vmatpush.msra.mxu0 %v356
    %1741 = vmatpush.msra.mxu0 %v336
    %1742 = vmatpush.msra.mxu0 %v316
    %1743 = vmatpush.msra.mxu0 %v296
    %1744 = vmatpush.msra.mxu0 %v276
    %1745 = vmatpush.msra.mxu0 %v256
    %1746 = vmatpush.msra.mxu0 %v236
    %1747 = vmatpush.msra.mxu0 %v216
    %1748 = vmatpush.msra.mxu0 %v196
    %1749 = vmatmul.f32.gmra.mxu0 %v180
    %v1750 = vpop.f32.mrf.mxu0
    %v1751 = vadd.f32 %v922, %v1750
    %1752 = vdwg.mxu0
    %1753 = vmatpush.msra.mxu0 %v816
    %1754 = vmatpush.msra.mxu0 %v796
    %1755 = vmatpush.msra.mxu0 %v776
    %1756 = vmatpush.msra.mxu0 %v756
    %1757 = vmatpush.msra.mxu0 %v736
    %1758 = vmatpush.msra.mxu0 %v716
    %1759 = vmatpush.msra.mxu0 %v696
    %1760 = vmatpush.msra.mxu0 %v676
    %1761 = vmatpush.msra.mxu0 %v656
    %1762 = vmatpush.msra.mxu0 %v636
    %1763 = vmatpush.msra.mxu0 %v616
    %1764 = vmatpush.msra.mxu0 %v596
    %1765 = vmatpush.msra.mxu0 %v576
    %1766 = vmatpush.msra.mxu0 %v556
    %1767 = vmatpush.msra.mxu0 %v536
    %1768 = vmatpush.msra.mxu0 %v516
    %1769 = vmatmul.f32.gmra.mxu0 %v181
    %v1770 = vpop.f32.mrf.mxu0
    %v1771 = vadd.f32 %v1751, %v1770
    %1772 = vdwg.mxu0
    %1773 = vmatpush.msra.mxu0 0.0
    %1774 = vmatpush.msra.mxu0 0.0
    %1775 = vmatpush.msra.mxu0 0.0
    %1776 = vmatpush.msra.mxu0 0.0
    %1777 = vmatpush.msra.mxu0 0.0
    %1778 = vmatpush.msra.mxu0 0.0
    %1779 = vmatpush.msra.mxu0 0.0
    %1780 = vmatpush.msra.mxu0 0.0
    %1781 = vmatpush.msra.mxu0 0.0
    %1782 = vmatpush.msra.mxu0 0.0
    %1783 = vmatpush.msra.mxu0 0.0
    %1784 = vmatpush.msra.mxu0 0.0
    %1785 = vmatpush.msra.mxu0 %v896
    %1786 = vmatpush.msra.mxu0 %v876
    %1787 = vmatpush.msra.mxu0 %v856
    %1788 = vmatpush.msra.mxu0 %v836
    %1789 = vmatmul.f32.gmra.mxu0 %v951
    %v1790 = vpop.f32.mrf.mxu0
    %v1791 = vadd.f32 %v1771, %v1790
    %1792 = vdwg.mxu0
    %1793 = vmatpush.msra.mxu0 %v497
    %1794 = vmatpush.msra.mxu0 %v477
    %1795 = vmatpush.msra.mxu0 %v457
    %1796 = vmatpush.msra.mxu0 %v437
    %1797 = vmatpush.msra.mxu0 %v417
    %1798 = vmatpush.msra.mxu0 %v397
    %1799 = vmatpush.msra.mxu0 %v377
    %1800 = vmatpush.msra.mxu0 %v357
    %1801 = vmatpush.msra.mxu0 %v337
    %1802 = vmatpush.msra.mxu0 %v317
    %1803 = vmatpush.msra.mxu0 %v297
    %1804 = vmatpush.msra.mxu0 %v277
    %1805 = vmatpush.msra.mxu0 %v257
    %1806 = vmatpush.msra.mxu0 %v237
    %1807 = vmatpush.msra.mxu0 %v217
    %1808 = vmatpush.msra.mxu0 %v197
    %1809 = vmatmul.f32.gmra.mxu0 %v180
    %v1810 = vpop.f32.mrf.mxu0
    %v1811 = vadd.f32 %v923, %v1810
    %1812 = vdwg.mxu0
    %1813 = vmatpush.msra.mxu0 %v817
    %1814 = vmatpush.msra.mxu0 %v797
    %1815 = vmatpush.msra.mxu0 %v777
    %1816 = vmatpush.msra.mxu0 %v757
    %1817 = vmatpush.msra.mxu0 %v737
    %1818 = vmatpush.msra.mxu0 %v717
    %1819 = vmatpush.msra.mxu0 %v697
    %1820 = vmatpush.msra.mxu0 %v677
    %1821 = vmatpush.msra.mxu0 %v657
    %1822 = vmatpush.msra.mxu0 %v637
    %1823 = vmatpush.msra.mxu0 %v617
    %1824 = vmatpush.msra.mxu0 %v597
    %1825 = vmatpush.msra.mxu0 %v577
    %1826 = vmatpush.msra.mxu0 %v557
    %1827 = vmatpush.msra.mxu0 %v537
    %1828 = vmatpush.msra.mxu0 %v517
    %1829 = vmatmul.f32.gmra.mxu0 %v181
    %v1830 = vpop.f32.mrf.mxu0
    %v1831 = vadd.f32 %v1811, %v1830
    %1832 = vdwg.mxu0
    %1833 = vmatpush.msra.mxu0 0.0
    %1834 = vmatpush.msra.mxu0 0.0
    %1835 = vmatpush.msra.mxu0 0.0
    %1836 = vmatpush.msra.mxu0 0.0
    %1837 = vmatpush.msra.mxu0 0.0
    %1838 = vmatpush.msra.mxu0 0.0
    %1839 = vmatpush.msra.mxu0 0.0
    %1840 = vmatpush.msra.mxu0 0.0
    %1841 = vmatpush.msra.mxu0 0.0
    %1842 = vmatpush.msra.mxu0 0.0
    %1843 = vmatpush.msra.mxu0 0.0
    %1844 = vmatpush.msra.mxu0 0.0
    %1845 = vmatpush.msra.mxu0 %v897
    %1846 = vmatpush.msra.mxu0 %v877
    %1847 = vmatpush.msra.mxu0 %v857
    %1848 = vmatpush.msra.mxu0 %v837
    %1849 = vmatmul.f32.gmra.mxu0 %v951
    %v1850 = vpop.f32.mrf.mxu0
    %v1851 = vadd.f32 %v1831, %v1850
    %1852 = vdwg.mxu0
    %1853 = vmatpush.msra.mxu0 %v498
    %1854 = vmatpush.msra.mxu0 %v478
    %1855 = vmatpush.msra.mxu0 %v458
    %1856 = vmatpush.msra.mxu0 %v438
    %1857 = vmatpush.msra.mxu0 %v418
    %1858 = vmatpush.msra.mxu0 %v398
    %1859 = vmatpush.msra.mxu0 %v378
    %1860 = vmatpush.msra.mxu0 %v358
    %1861 = vmatpush.msra.mxu0 %v338
    %1862 = vmatpush.msra.mxu0 %v318
    %1863 = vmatpush.msra.mxu0 %v298
    %1864 = vmatpush.msra.mxu0 %v278
    %1865 = vmatpush.msra.mxu0 %v258
    %1866 = vmatpush.msra.mxu0 %v238
    %1867 = vmatpush.msra.mxu0 %v218
    %1868 = vmatpush.msra.mxu0 %v198
    %1869 = vmatmul.f32.gmra.mxu0 %v180
    %v1870 = vpop.f32.mrf.mxu0
    %v1871 = vadd.f32 %v924, %v1870
    %1872 = vdwg.mxu0
    %1873 = vmatpush.msra.mxu0 %v818
    %1874 = vmatpush.msra.mxu0 %v798
    %1875 = vmatpush.msra.mxu0 %v778
    %1876 = vmatpush.msra.mxu0 %v758
    %1877 = vmatpush.msra.mxu0 %v738
    %1878 = vmatpush.msra.mxu0 %v718
    %1879 = vmatpush.msra.mxu0 %v698
    %1880 = vmatpush.msra.mxu0 %v678
    %1881 = vmatpush.msra.mxu0 %v658
    %1882 = vmatpush.msra.mxu0 %v638
    %1883 = vmatpush.msra.mxu0 %v618
    %1884 = vmatpush.msra.mxu0 %v598
    %1885 = vmatpush.msra.mxu0 %v578
    %1886 = vmatpush.msra.mxu0 %v558
    %1887 = vmatpush.msra.mxu0 %v538
    %1888 = vmatpush.msra.mxu0 %v518
    %1889 = vmatmul.f32.gmra.mxu0 %v181
    %v1890 = vpop.f32.mrf.mxu0
    %v1891 = vadd.f32 %v1871, %v1890
    %1892 = vdwg.mxu0
    %1893 = vmatpush.msra.mxu0 0.0
    %1894 = vmatpush.msra.mxu0 0.0
    %1895 = vmatpush.msra.mxu0 0.0
    %1896 = vmatpush.msra.mxu0 0.0
    %1897 = vmatpush.msra.mxu0 0.0
    %1898 = vmatpush.msra.mxu0 0.0
    %1899 = vmatpush.msra.mxu0 0.0
    %1900 = vmatpush.msra.mxu0 0.0
    %1901 = vmatpush.msra.mxu0 0.0
    %1902 = vmatpush.msra.mxu0 0.0
    %1903 = vmatpush.msra.mxu0 0.0
    %1904 = vmatpush.msra.mxu0 0.0
    %1905 = vmatpush.msra.mxu0 %v898
    %1906 = vmatpush.msra.mxu0 %v878
    %1907 = vmatpush.msra.mxu0 %v858
    %1908 = vmatpush.msra.mxu0 %v838
    %1909 = vmatmul.f32.gmra.mxu0 %v951
    %v1910 = vpop.f32.mrf.mxu0
    %v1911 = vadd.f32 %v1891, %v1910
    %1912 = vdwg.mxu0
    %1913 = vmatpush.msra.mxu0 %v499
    %1914 = vmatpush.msra.mxu0 %v479
    %1915 = vmatpush.msra.mxu0 %v459
    %1916 = vmatpush.msra.mxu0 %v439
    %1917 = vmatpush.msra.mxu0 %v419
    %1918 = vmatpush.msra.mxu0 %v399
    %1919 = vmatpush.msra.mxu0 %v379
    %1920 = vmatpush.msra.mxu0 %v359
    %1921 = vmatpush.msra.mxu0 %v339
    %1922 = vmatpush.msra.mxu0 %v319
    %1923 = vmatpush.msra.mxu0 %v299
    %1924 = vmatpush.msra.mxu0 %v279
    %1925 = vmatpush.msra.mxu0 %v259
    %1926 = vmatpush.msra.mxu0 %v239
    %1927 = vmatpush.msra.mxu0 %v219
    %1928 = vmatpush.msra.mxu0 %v199
    %1929 = vmatmul.f32.gmra.mxu0 %v180
    %v1930 = vpop.f32.mrf.mxu0
    %v1931 = vadd.f32 %v925, %v1930
    %1932 = vdwg.mxu0
    %1933 = vmatpush.msra.mxu0 %v819
    %1934 = vmatpush.msra.mxu0 %v799
    %1935 = vmatpush.msra.mxu0 %v779
    %1936 = vmatpush.msra.mxu0 %v759
    %1937 = vmatpush.msra.mxu0 %v739
    %1938 = vmatpush.msra.mxu0 %v719
    %1939 = vmatpush.msra.mxu0 %v699
    %1940 = vmatpush.msra.mxu0 %v679
    %1941 = vmatpush.msra.mxu0 %v659
    %1942 = vmatpush.msra.mxu0 %v639
    %1943 = vmatpush.msra.mxu0 %v619
    %1944 = vmatpush.msra.mxu0 %v599
    %1945 = vmatpush.msra.mxu0 %v579
    %1946 = vmatpush.msra.mxu0 %v559
    %1947 = vmatpush.msra.mxu0 %v539
    %1948 = vmatpush.msra.mxu0 %v519
    %1949 = vmatmul.f32.gmra.mxu0 %v181
    %v1950 = vpop.f32.mrf.mxu0
    %v1951 = vadd.f32 %v1931, %v1950
    %1952 = vdwg.mxu0
    %1953 = vmatpush.msra.mxu0 0.0
    %1954 = vmatpush.msra.mxu0 0.0
    %1955 = vmatpush.msra.mxu0 0.0
    %1956 = vmatpush.msra.mxu0 0.0
    %1957 = vmatpush.msra.mxu0 0.0
    %1958 = vmatpush.msra.mxu0 0.0
    %1959 = vmatpush.msra.mxu0 0.0
    %1960 = vmatpush.msra.mxu0 0.0
    %1961 = vmatpush.msra.mxu0 0.0
    %1962 = vmatpush.msra.mxu0 0.0
    %1963 = vmatpush.msra.mxu0 0.0
    %1964 = vmatpush.msra.mxu0 0.0
    %1965 = vmatpush.msra.mxu0 %v899
    %1966 = vmatpush.msra.mxu0 %v879
    %1967 = vmatpush.msra.mxu0 %v859
    %1968 = vmatpush.msra.mxu0 %v839
    %1969 = vmatmul.f32.gmra.mxu0 %v951
    %v1970 = vpop.f32.mrf.mxu0
    %v1971 = vadd.f32 %v1951, %v1970
    %1972 = vdwg.mxu0
    %1973 = vmatpush.msra.mxu0 %v500
    %1974 = vmatpush.msra.mxu0 %v480
    %1975 = vmatpush.msra.mxu0 %v460
    %1976 = vmatpush.msra.mxu0 %v440
    %1977 = vmatpush.msra.mxu0 %v420
    %1978 = vmatpush.msra.mxu0 %v400
    %1979 = vmatpush.msra.mxu0 %v380
    %1980 = vmatpush.msra.mxu0 %v360
    %1981 = vmatpush.msra.mxu0 %v340
    %1982 = vmatpush.msra.mxu0 %v320
    %1983 = vmatpush.msra.mxu0 %v300
    %1984 = vmatpush.msra.mxu0 %v280
    %1985 = vmatpush.msra.mxu0 %v260
    %1986 = vmatpush.msra.mxu0 %v240
    %1987 = vmatpush.msra.mxu0 %v220
    %1988 = vmatpush.msra.mxu0 %v200
    %1989 = vmatmul.f32.gmra.mxu0 %v180
    %v1990 = vpop.f32.mrf.mxu0
    %v1991 = vadd.f32 %v926, %v1990
    %1992 = vdwg.mxu0
    %1993 = vmatpush.msra.mxu0 %v820
    %1994 = vmatpush.msra.mxu0 %v800
    %1995 = vmatpush.msra.mxu0 %v780
    %1996 = vmatpush.msra.mxu0 %v760
    %1997 = vmatpush.msra.mxu0 %v740
    %1998 = vmatpush.msra.mxu0 %v720
    %1999 = vmatpush.msra.mxu0 %v700
    %2000 = vmatpush.msra.mxu0 %v680
    %2001 = vmatpush.msra.mxu0 %v660
    %2002 = vmatpush.msra.mxu0 %v640
    %2003 = vmatpush.msra.mxu0 %v620
    %2004 = vmatpush.msra.mxu0 %v600
    %2005 = vmatpush.msra.mxu0 %v580
    %2006 = vmatpush.msra.mxu0 %v560
    %2007 = vmatpush.msra.mxu0 %v540
    %2008 = vmatpush.msra.mxu0 %v520
    %2009 = vmatmul.f32.gmra.mxu0 %v181
    %v2010 = vpop.f32.mrf.mxu0
    %v2011 = vadd.f32 %v1991, %v2010
    %2012 = vdwg.mxu0
    %2013 = vmatpush.msra.mxu0 0.0
    %2014 = vmatpush.msra.mxu0 0.0
    %2015 = vmatpush.msra.mxu0 0.0
    %2016 = vmatpush.msra.mxu0 0.0
    %2017 = vmatpush.msra.mxu0 0.0
    %2018 = vmatpush.msra.mxu0 0.0
    %2019 = vmatpush.msra.mxu0 0.0
    %2020 = vmatpush.msra.mxu0 0.0
    %2021 = vmatpush.msra.mxu0 0.0
    %2022 = vmatpush.msra.mxu0 0.0
    %2023 = vmatpush.msra.mxu0 0.0
    %2024 = vmatpush.msra.mxu0 0.0
    %2025 = vmatpush.msra.mxu0 %v900
    %2026 = vmatpush.msra.mxu0 %v880
    %2027 = vmatpush.msra.mxu0 %v860
    %2028 = vmatpush.msra.mxu0 %v840
    %2029 = vmatmul.f32.gmra.mxu0 %v951
    %v2030 = vpop.f32.mrf.mxu0
    %v2031 = vadd.f32 %v2011, %v2030
    %2032 = vdwg.mxu0
    %2033 = vmatpush.msra.mxu0 %v501
    %2034 = vmatpush.msra.mxu0 %v481
    %2035 = vmatpush.msra.mxu0 %v461
    %2036 = vmatpush.msra.mxu0 %v441
    %2037 = vmatpush.msra.mxu0 %v421
    %2038 = vmatpush.msra.mxu0 %v401
    %2039 = vmatpush.msra.mxu0 %v381
    %2040 = vmatpush.msra.mxu0 %v361
    %2041 = vmatpush.msra.mxu0 %v341
    %2042 = vmatpush.msra.mxu0 %v321
    %2043 = vmatpush.msra.mxu0 %v301
    %2044 = vmatpush.msra.mxu0 %v281
    %2045 = vmatpush.msra.mxu0 %v261
    %2046 = vmatpush.msra.mxu0 %v241
    %2047 = vmatpush.msra.mxu0 %v221
    %2048 = vmatpush.msra.mxu0 %v201
    %2049 = vmatmul.f32.gmra.mxu0 %v180
    %v2050 = vpop.f32.mrf.mxu0
    %v2051 = vadd.f32 %v927, %v2050
    %2052 = vdwg.mxu0
    %2053 = vmatpush.msra.mxu0 %v821
    %2054 = vmatpush.msra.mxu0 %v801
    %2055 = vmatpush.msra.mxu0 %v781
    %2056 = vmatpush.msra.mxu0 %v761
    %2057 = vmatpush.msra.mxu0 %v741
    %2058 = vmatpush.msra.mxu0 %v721
    %2059 = vmatpush.msra.mxu0 %v701
    %2060 = vmatpush.msra.mxu0 %v681
    %2061 = vmatpush.msra.mxu0 %v661
    %2062 = vmatpush.msra.mxu0 %v641
    %2063 = vmatpush.msra.mxu0 %v621
    %2064 = vmatpush.msra.mxu0 %v601
    %2065 = vmatpush.msra.mxu0 %v581
    %2066 = vmatpush.msra.mxu0 %v561
    %2067 = vmatpush.msra.mxu0 %v541
    %2068 = vmatpush.msra.mxu0 %v521
    %2069 = vmatmul.f32.gmra.mxu0 %v181
    %v2070 = vpop.f32.mrf.mxu0
    %v2071 = vadd.f32 %v2051, %v2070
    %2072 = vdwg.mxu0
    %2073 = vmatpush.msra.mxu0 0.0
    %2074 = vmatpush.msra.mxu0 0.0
    %2075 = vmatpush.msra.mxu0 0.0
    %2076 = vmatpush.msra.mxu0 0.0
    %2077 = vmatpush.msra.mxu0 0.0
    %2078 = vmatpush.msra.mxu0 0.0
    %2079 = vmatpush.msra.mxu0 0.0
    %2080 = vmatpush.msra.mxu0 0.0
    %2081 = vmatpush.msra.mxu0 0.0
    %2082 = vmatpush.msra.mxu0 0.0
    %2083 = vmatpush.msra.mxu0 0.0
    %2084 = vmatpush.msra.mxu0 0.0
    %2085 = vmatpush.msra.mxu0 %v901
    %2086 = vmatpush.msra.mxu0 %v881
    %2087 = vmatpush.msra.mxu0 %v861
    %2088 = vmatpush.msra.mxu0 %v841
    %2089 = vmatmul.f32.gmra.mxu0 %v951
    %v2090 = vpop.f32.mrf.mxu0
    %v2091 = vadd.f32 %v2071, %v2090
    %2092 = vdwg.mxu0
    %2093 = vmatpush.msra.mxu0 %v502
    %2094 = vmatpush.msra.mxu0 %v482
    %2095 = vmatpush.msra.mxu0 %v462
    %2096 = vmatpush.msra.mxu0 %v442
    %2097 = vmatpush.msra.mxu0 %v422
    %2098 = vmatpush.msra.mxu0 %v402
    %2099 = vmatpush.msra.mxu0 %v382
    %2100 = vmatpush.msra.mxu0 %v362
    %2101 = vmatpush.msra.mxu0 %v342
    %2102 = vmatpush.msra.mxu0 %v322
    %2103 = vmatpush.msra.mxu0 %v302
    %2104 = vmatpush.msra.mxu0 %v282
    %2105 = vmatpush.msra.mxu0 %v262
    %2106 = vmatpush.msra.mxu0 %v242
    %2107 = vmatpush.msra.mxu0 %v222
    %2108 = vmatpush.msra.mxu0 %v202
    %2109 = vmatmul.f32.gmra.mxu0 %v180
    %v2110 = vpop.f32.mrf.mxu0
    %v2111 = vadd.f32 %v928, %v2110
    %2112 = vdwg.mxu0
    %2113 = vmatpush.msra.mxu0 %v822
    %2114 = vmatpush.msra.mxu0 %v802
    %2115 = vmatpush.msra.mxu0 %v782
    %2116 = vmatpush.msra.mxu0 %v762
    %2117 = vmatpush.msra.mxu0 %v742
    %2118 = vmatpush.msra.mxu0 %v722
    %2119 = vmatpush.msra.mxu0 %v702
    %2120 = vmatpush.msra.mxu0 %v682
    %2121 = vmatpush.msra.mxu0 %v662
    %2122 = vmatpush.msra.mxu0 %v642
    %2123 = vmatpush.msra.mxu0 %v622
    %2124 = vmatpush.msra.mxu0 %v602
    %2125 = vmatpush.msra.mxu0 %v582
    %2126 = vmatpush.msra.mxu0 %v562
    %2127 = vmatpush.msra.mxu0 %v542
    %2128 = vmatpush.msra.mxu0 %v522
    %2129 = vmatmul.f32.gmra.mxu0 %v181
    %v2130 = vpop.f32.mrf.mxu0
    %v2131 = vadd.f32 %v2111, %v2130
    %2132 = vdwg.mxu0
    %2133 = vmatpush.msra.mxu0 0.0
    %2134 = vmatpush.msra.mxu0 0.0
    %2135 = vmatpush.msra.mxu0 0.0
    %2136 = vmatpush.msra.mxu0 0.0
    %2137 = vmatpush.msra.mxu0 0.0
    %2138 = vmatpush.msra.mxu0 0.0
    %2139 = vmatpush.msra.mxu0 0.0
    %2140 = vmatpush.msra.mxu0 0.0
    %2141 = vmatpush.msra.mxu0 0.0
    %2142 = vmatpush.msra.mxu0 0.0
    %2143 = vmatpush.msra.mxu0 0.0
    %2144 = vmatpush.msra.mxu0 0.0
    %2145 = vmatpush.msra.mxu0 %v902
    %2146 = vmatpush.msra.mxu0 %v882
    %2147 = vmatpush.msra.mxu0 %v862
    %2148 = vmatpush.msra.mxu0 %v842
    %2149 = vmatmul.f32.gmra.mxu0 %v951
    %v2150 = vpop.f32.mrf.mxu0
    %v2151 = vadd.f32 %v2131, %v2150
    %2152 = vdwg.mxu0
    %v2153 = vld [vmem:[%s1] sm:$0xff]
    %2155 = vrot.lane.b32.xlu0 %v2153, 16
    %v2156 = vpop.permute.xlu0 %2155
    %vm2158 = vcmask 130048
    %v2159 = vsel %vm2158, %v2153, %v2156
    %2161 = vrot.lane.b32.xlu0 %v2159, 32
    %v2162 = vpop.permute.xlu0 %2161
    %v2164 = vsel %vm949, %v2159, %v2162
    %2166 = vrot.lane.b32.xlu0 %v2164, 64
    %v2167 = vpop.permute.xlu0 %2166
    %vm2169 = vcmask 523264
    %v2170 = vsel %vm2169, %v2164, %v2167
    %v2171 = vmul.f32 %v1011, %v2170
    %v2172 = vmul.f32 %v1071, %v2170
    %v2173 = vmul.f32 %v1131, %v2170
    %v2174 = vmul.f32 %v1191, %v2170
    %v2175 = vld [vmem:[%s6] sm:$0xff]
    %v2176 = vld [vmem:[%s6 + $0x8] sm:$0xff]
    %v2177 = vld [vmem:[%s6 + $0x10] sm:$0xff]
    %v2178 = vld [vmem:[%s6 + $0x18] sm:$0xff]
    %v2179 = vld [vmem:[%s6 + $0x20] sm:$0xff]
    %v2180 = vld [vmem:[%s6 + $0x28] sm:$0xff]
    %v2181 = vld [vmem:[%s6 + $0x30] sm:$0xff]
    %v2182 = vld [vmem:[%s6 + $0x38] sm:$0xff]
    %v2183 = vld [vmem:[%s6 + $0x40] sm:$0xff]
    %v2184 = vld [vmem:[%s6 + $0x48] sm:$0xff]
    %v2185 = vld [vmem:[%s6 + $0x50] sm:$0xff]
    %v2186 = vld [vmem:[%s6 + $0x58] sm:$0xff]
    %v2187 = vld [vmem:[%s6 + $0x60] sm:$0xff]
    %v2188 = vld [vmem:[%s6 + $0x68] sm:$0xff]
    %v2189 = vld [vmem:[%s6 + $0x70] sm:$0xff]
    %v2190 = vld [vmem:[%s6 + $0x78] sm:$0xff]
    %v2191 = vld [vmem:[%s6 + $0x80] sm:$0xff]
    %v2192 = vld [vmem:[%s6 + $0x88] sm:$0xff]
    %v2193 = vld [vmem:[%s6 + $0x90] sm:$0xff]
    %v2194 = vld [vmem:[%s6 + $0x98] sm:$0xff]
    %v2195 = vld [vmem:[%s6 + $0xa0] sm:$0xff]
    %v2196 = vld [vmem:[%s6 + $0xa8] sm:$0xff]
    %v2197 = vld [vmem:[%s6 + $0xb0] sm:$0xff]
    %v2198 = vld [vmem:[%s6 + $0xb8] sm:$0xff]
    %v2199 = vld [vmem:[%s6 + $0xc0] sm:$0xff]
    %v2200 = vld [vmem:[%s6 + $0xc8] sm:$0xff]
    %v2201 = vld [vmem:[%s6 + $0xd0] sm:$0xff]
    %v2202 = vld [vmem:[%s6 + $0xd8] sm:$0xff]
    %v2203 = vld [vmem:[%s6 + $0xe0] sm:$0xff]
    %v2204 = vld [vmem:[%s6 + $0xe8] sm:$0xff]
    %v2205 = vld [vmem:[%s6 + $0xf0] sm:$0xff]
    %v2206 = vld [vmem:[%s6 + $0xf8] sm:$0xff]
    %v2207 = vld [vmem:[%s6 + $0x100] sm:$0xff]
    %v2208 = vld [vmem:[%s6 + $0x108] sm:$0xff]
    %v2209 = vld [vmem:[%s6 + $0x110] sm:$0xff]
    %v2210 = vld [vmem:[%s6 + $0x118] sm:$0xff]
    %v2211 = vld [vmem:[%s6 + $0x120] sm:$0xff]
    %v2212 = vld [vmem:[%s6 + $0x128] sm:$0xff]
    %v2213 = vld [vmem:[%s6 + $0x130] sm:$0xff]
    %v2214 = vld [vmem:[%s6 + $0x138] sm:$0xff]
    %v2215 = vld [vmem:[%s6 + $0x140] sm:$0xff]
    %v2216 = vld [vmem:[%s6 + $0x148] sm:$0xff]
    %v2217 = vld [vmem:[%s6 + $0x150] sm:$0xff]
    %v2218 = vld [vmem:[%s6 + $0x158] sm:$0xff]
    %v2219 = vld [vmem:[%s6 + $0x160] sm:$0xff]
    %v2220 = vld [vmem:[%s6 + $0x168] sm:$0xff]
    %v2221 = vld [vmem:[%s6 + $0x170] sm:$0xff]
    %v2222 = vld [vmem:[%s6 + $0x178] sm:$0xff]
    %v2223 = vld [vmem:[%s6 + $0x180] sm:$0xff]
    %v2224 = vld [vmem:[%s6 + $0x188] sm:$0xff]
    %v2225 = vld [vmem:[%s6 + $0x190] sm:$0xff]
    %v2226 = vld [vmem:[%s6 + $0x198] sm:$0xff]
    %v2227 = vld [vmem:[%s6 + $0x1a0] sm:$0xff]
    %v2228 = vld [vmem:[%s6 + $0x1a8] sm:$0xff]
    %v2229 = vld [vmem:[%s6 + $0x1b0] sm:$0xff]
    %v2230 = vld [vmem:[%s6 + $0x1b8] sm:$0xff]
    %v2231 = vld [vmem:[%s6 + $0x1c0] sm:$0xff]
    %v2232 = vld [vmem:[%s6 + $0x1c8] sm:$0xff]
    %v2233 = vld [vmem:[%s6 + $0x1d0] sm:$0xff]
    %v2234 = vld [vmem:[%s6 + $0x1d8] sm:$0xff]
    %v2235 = vld [vmem:[%s6 + $0x1e0] sm:$0xff]
    %v2236 = vld [vmem:[%s6 + $0x1e8] sm:$0xff]
    %v2237 = vld [vmem:[%s6 + $0x1f0] sm:$0xff]
    %v2238 = vld [vmem:[%s6 + $0x1f8] sm:$0xff]
    %2239 = vmatpush.msra.mxu0 %v2190
    %2240 = vmatpush.msra.mxu0 %v2189
    %2241 = vmatpush.msra.mxu0 %v2188
    %2242 = vmatpush.msra.mxu0 %v2187
    %2243 = vmatpush.msra.mxu0 %v2186
    %2244 = vmatpush.msra.mxu0 %v2185
    %2245 = vmatpush.msra.mxu0 %v2184
    %2246 = vmatpush.msra.mxu0 %v2183
    %2247 = vmatpush.msra.mxu0 %v2182
    %2248 = vmatpush.msra.mxu0 %v2181
    %2249 = vmatpush.msra.mxu0 %v2180
    %2250 = vmatpush.msra.mxu0 %v2179
    %2251 = vmatpush.msra.mxu0 %v2178
    %2252 = vmatpush.msra.mxu0 %v2177
    %2253 = vmatpush.msra.mxu0 %v2176
    %2254 = vmatpush.msra.mxu0 %v2175
    %2255 = vmatmul.f32.gmra.mxu0 %v2171
    %v2256 = vpop.f32.mrf.mxu0
    %v2257 = vadd.f32 0.0, %v2256
    %2258 = vdwg.mxu0
    %2259 = vmatpush.msra.mxu0 %v2206
    %2260 = vmatpush.msra.mxu0 %v2205
    %2261 = vmatpush.msra.mxu0 %v2204
    %2262 = vmatpush.msra.mxu0 %v2203
    %2263 = vmatpush.msra.mxu0 %v2202
    %2264 = vmatpush.msra.mxu0 %v2201
    %2265 = vmatpush.msra.mxu0 %v2200
    %2266 = vmatpush.msra.mxu0 %v2199
    %2267 = vmatpush.msra.mxu0 %v2198
    %2268 = vmatpush.msra.mxu0 %v2197
    %2269 = vmatpush.msra.mxu0 %v2196
    %2270 = vmatpush.msra.mxu0 %v2195
    %2271 = vmatpush.msra.mxu0 %v2194
    %2272 = vmatpush.msra.mxu0 %v2193
    %2273 = vmatpush.msra.mxu0 %v2192
    %2274 = vmatpush.msra.mxu0 %v2191
    %2275 = vmatmul.f32.gmra.mxu0 %v2172
    %v2276 = vpop.f32.mrf.mxu0
    %v2277 = vadd.f32 %v2257, %v2276
    %2278 = vdwg.mxu0
    %2279 = vmatpush.msra.mxu0 %v2222
    %2280 = vmatpush.msra.mxu0 %v2221
    %2281 = vmatpush.msra.mxu0 %v2220
    %2282 = vmatpush.msra.mxu0 %v2219
    %2283 = vmatpush.msra.mxu0 %v2218
    %2284 = vmatpush.msra.mxu0 %v2217
    %2285 = vmatpush.msra.mxu0 %v2216
    %2286 = vmatpush.msra.mxu0 %v2215
    %2287 = vmatpush.msra.mxu0 %v2214
    %2288 = vmatpush.msra.mxu0 %v2213
    %2289 = vmatpush.msra.mxu0 %v2212
    %2290 = vmatpush.msra.mxu0 %v2211
    %2291 = vmatpush.msra.mxu0 %v2210
    %2292 = vmatpush.msra.mxu0 %v2209
    %2293 = vmatpush.msra.mxu0 %v2208
    %2294 = vmatpush.msra.mxu0 %v2207
    %2295 = vmatmul.f32.gmra.mxu0 %v2173
    %v2296 = vpop.f32.mrf.mxu0
    %v2297 = vadd.f32 %v2277, %v2296
    %2298 = vdwg.mxu0
    %2299 = vmatpush.msra.mxu0 %v2238
    %2300 = vmatpush.msra.mxu0 %v2237
    %2301 = vmatpush.msra.mxu0 %v2236
    %2302 = vmatpush.msra.mxu0 %v2235
    %2303 = vmatpush.msra.mxu0 %v2234
    %2304 = vmatpush.msra.mxu0 %v2233
    %2305 = vmatpush.msra.mxu0 %v2232
    %2306 = vmatpush.msra.mxu0 %v2231
    %2307 = vmatpush.msra.mxu0 %v2230
    %2308 = vmatpush.msra.mxu0 %v2229
    %2309 = vmatpush.msra.mxu0 %v2228
    %2310 = vmatpush.msra.mxu0 %v2227
    %2311 = vmatpush.msra.mxu0 %v2226
    %2312 = vmatpush.msra.mxu0 %v2225
    %2313 = vmatpush.msra.mxu0 %v2224
    %2314 = vmatpush.msra.mxu0 %v2223
    %2315 = vmatmul.f32.gmra.mxu0 %v2174
    %v2316 = vpop.f32.mrf.mxu0
    %v2317 = vadd.f32 %v2297, %v2316
    %2318 = vdwg.mxu0
    %v2319 = vadd.f32 %v1311, 1.0
    %v2320 = vmul.f32 %v2317, %v2319
    %v2321 = vadd.f32 %v2320, %v1251
    %v2322 = vmax.f32 %v2321, 0.0
    %2324 = vrot.lane.b32.xlu0 %v2322, 32
    %v2325 = vpop.permute.xlu0 %2324
    %v2327 = vsel %vm949, %v2322, %v2325
    %2329 = vrot.lane.b32.xlu0 %v2327, 64
    %v2330 = vpop.permute.xlu0 %2329
    %v2332 = vsel %vm2169, %v2327, %v2330
    %v2333 = vmul.f32 %v1371, %v2332
    %v2334 = vmul.f32 %v1431, %v2332
    %v2335 = vmul.f32 %v1491, %v2332
    %v2336 = vmul.f32 %v1551, %v2332
    %v2337 = vmul.f32 %v1611, %v2332
    %v2338 = vmul.f32 %v1671, %v2332
    %v2339 = vmul.f32 %v1731, %v2332
    %v2340 = vmul.f32 %v1791, %v2332
    %v2341 = vld [vmem:[%s7] sm:$0xff]
    %v2342 = vld [vmem:[%s7 + $0x8] sm:$0xff]
    %v2343 = vld [vmem:[%s7 + $0x10] sm:$0xff]
    %v2344 = vld [vmem:[%s7 + $0x18] sm:$0xff]
    %v2345 = vld [vmem:[%s7 + $0x20] sm:$0xff]
    %v2346 = vld [vmem:[%s7 + $0x28] sm:$0xff]
    %v2347 = vld [vmem:[%s7 + $0x30] sm:$0xff]
    %v2348 = vld [vmem:[%s7 + $0x38] sm:$0xff]
    %v2349 = vld [vmem:[%s7 + $0x40] sm:$0xff]
    %v2350 = vld [vmem:[%s7 + $0x48] sm:$0xff]
    %v2351 = vld [vmem:[%s7 + $0x50] sm:$0xff]
    %v2352 = vld [vmem:[%s7 + $0x58] sm:$0xff]
    %v2353 = vld [vmem:[%s7 + $0x60] sm:$0xff]
    %v2354 = vld [vmem:[%s7 + $0x68] sm:$0xff]
    %v2355 = vld [vmem:[%s7 + $0x70] sm:$0xff]
    %v2356 = vld [vmem:[%s7 + $0x78] sm:$0xff]
    %v2357 = vld [vmem:[%s7 + $0x80] sm:$0xff]
    %v2358 = vld [vmem:[%s7 + $0x88] sm:$0xff]
    %v2359 = vld [vmem:[%s7 + $0x90] sm:$0xff]
    %v2360 = vld [vmem:[%s7 + $0x98] sm:$0xff]
    %v2361 = vld [vmem:[%s7 + $0xa0] sm:$0xff]
    %v2362 = vld [vmem:[%s7 + $0xa8] sm:$0xff]
    %v2363 = vld [vmem:[%s7 + $0xb0] sm:$0xff]
    %v2364 = vld [vmem:[%s7 + $0xb8] sm:$0xff]
    %v2365 = vld [vmem:[%s7 + $0xc0] sm:$0xff]
    %v2366 = vld [vmem:[%s7 + $0xc8] sm:$0xff]
    %v2367 = vld [vmem:[%s7 + $0xd0] sm:$0xff]
    %v2368 = vld [vmem:[%s7 + $0xd8] sm:$0xff]
    %v2369 = vld [vmem:[%s7 + $0xe0] sm:$0xff]
    %v2370 = vld [vmem:[%s7 + $0xe8] sm:$0xff]
    %v2371 = vld [vmem:[%s7 + $0xf0] sm:$0xff]
    %v2372 = vld [vmem:[%s7 + $0xf8] sm:$0xff]
    %v2373 = vld [vmem:[%s7 + $0x100] sm:$0xff]
    %v2374 = vld [vmem:[%s7 + $0x108] sm:$0xff]
    %v2375 = vld [vmem:[%s7 + $0x110] sm:$0xff]
    %v2376 = vld [vmem:[%s7 + $0x118] sm:$0xff]
    %v2377 = vld [vmem:[%s7 + $0x120] sm:$0xff]
    %v2378 = vld [vmem:[%s7 + $0x128] sm:$0xff]
    %v2379 = vld [vmem:[%s7 + $0x130] sm:$0xff]
    %v2380 = vld [vmem:[%s7 + $0x138] sm:$0xff]
    %v2381 = vld [vmem:[%s7 + $0x140] sm:$0xff]
    %v2382 = vld [vmem:[%s7 + $0x148] sm:$0xff]
    %v2383 = vld [vmem:[%s7 + $0x150] sm:$0xff]
    %v2384 = vld [vmem:[%s7 + $0x158] sm:$0xff]
    %v2385 = vld [vmem:[%s7 + $0x160] sm:$0xff]
    %v2386 = vld [vmem:[%s7 + $0x168] sm:$0xff]
    %v2387 = vld [vmem:[%s7 + $0x170] sm:$0xff]
    %v2388 = vld [vmem:[%s7 + $0x178] sm:$0xff]
    %v2389 = vld [vmem:[%s7 + $0x180] sm:$0xff]
    %v2390 = vld [vmem:[%s7 + $0x188] sm:$0xff]
    %v2391 = vld [vmem:[%s7 + $0x190] sm:$0xff]
    %v2392 = vld [vmem:[%s7 + $0x198] sm:$0xff]
    %v2393 = vld [vmem:[%s7 + $0x1a0] sm:$0xff]
    %v2394 = vld [vmem:[%s7 + $0x1a8] sm:$0xff]
    %v2395 = vld [vmem:[%s7 + $0x1b0] sm:$0xff]
    %v2396 = vld [vmem:[%s7 + $0x1b8] sm:$0xff]
    %v2397 = vld [vmem:[%s7 + $0x1c0] sm:$0xff]
    %v2398 = vld [vmem:[%s7 + $0x1c8] sm:$0xff]
    %v2399 = vld [vmem:[%s7 + $0x1d0] sm:$0xff]
    %v2400 = vld [vmem:[%s7 + $0x1d8] sm:$0xff]
    %v2401 = vld [vmem:[%s7 + $0x1e0] sm:$0xff]
    %v2402 = vld [vmem:[%s7 + $0x1e8] sm:$0xff]
    %v2403 = vld [vmem:[%s7 + $0x1f0] sm:$0xff]
    %v2404 = vld [vmem:[%s7 + $0x1f8] sm:$0xff]
    %v2405 = vld [vmem:[%s7 + $0x200] sm:$0xff]
    %v2406 = vld [vmem:[%s7 + $0x208] sm:$0xff]
    %v2407 = vld [vmem:[%s7 + $0x210] sm:$0xff]
    %v2408 = vld [vmem:[%s7 + $0x218] sm:$0xff]
    %v2409 = vld [vmem:[%s7 + $0x220] sm:$0xff]
    %v2410 = vld [vmem:[%s7 + $0x228] sm:$0xff]
    %v2411 = vld [vmem:[%s7 + $0x230] sm:$0xff]
    %v2412 = vld [vmem:[%s7 + $0x238] sm:$0xff]
    %v2413 = vld [vmem:[%s7 + $0x240] sm:$0xff]
    %v2414 = vld [vmem:[%s7 + $0x248] sm:$0xff]
    %v2415 = vld [vmem:[%s7 + $0x250] sm:$0xff]
    %v2416 = vld [vmem:[%s7 + $0x258] sm:$0xff]
    %v2417 = vld [vmem:[%s7 + $0x260] sm:$0xff]
    %v2418 = vld [vmem:[%s7 + $0x268] sm:$0xff]
    %v2419 = vld [vmem:[%s7 + $0x270] sm:$0xff]
    %v2420 = vld [vmem:[%s7 + $0x278] sm:$0xff]
    %v2421 = vld [vmem:[%s7 + $0x280] sm:$0xff]
    %v2422 = vld [vmem:[%s7 + $0x288] sm:$0xff]
    %v2423 = vld [vmem:[%s7 + $0x290] sm:$0xff]
    %v2424 = vld [vmem:[%s7 + $0x298] sm:$0xff]
    %v2425 = vld [vmem:[%s7 + $0x2a0] sm:$0xff]
    %v2426 = vld [vmem:[%s7 + $0x2a8] sm:$0xff]
    %v2427 = vld [vmem:[%s7 + $0x2b0] sm:$0xff]
    %v2428 = vld [vmem:[%s7 + $0x2b8] sm:$0xff]
    %v2429 = vld [vmem:[%s7 + $0x2c0] sm:$0xff]
    %v2430 = vld [vmem:[%s7 + $0x2c8] sm:$0xff]
    %v2431 = vld [vmem:[%s7 + $0x2d0] sm:$0xff]
    %v2432 = vld [vmem:[%s7 + $0x2d8] sm:$0xff]
    %v2433 = vld [vmem:[%s7 + $0x2e0] sm:$0xff]
    %v2434 = vld [vmem:[%s7 + $0x2e8] sm:$0xff]
    %v2435 = vld [vmem:[%s7 + $0x2f0] sm:$0xff]
    %v2436 = vld [vmem:[%s7 + $0x2f8] sm:$0xff]
    %v2437 = vld [vmem:[%s7 + $0x300] sm:$0xff]
    %v2438 = vld [vmem:[%s7 + $0x308] sm:$0xff]
    %v2439 = vld [vmem:[%s7 + $0x310] sm:$0xff]
    %v2440 = vld [vmem:[%s7 + $0x318] sm:$0xff]
    %v2441 = vld [vmem:[%s7 + $0x320] sm:$0xff]
    %v2442 = vld [vmem:[%s7 + $0x328] sm:$0xff]
    %v2443 = vld [vmem:[%s7 + $0x330] sm:$0xff]
    %v2444 = vld [vmem:[%s7 + $0x338] sm:$0xff]
    %v2445 = vld [vmem:[%s7 + $0x340] sm:$0xff]
    %v2446 = vld [vmem:[%s7 + $0x348] sm:$0xff]
    %v2447 = vld [vmem:[%s7 + $0x350] sm:$0xff]
    %v2448 = vld [vmem:[%s7 + $0x358] sm:$0xff]
    %v2449 = vld [vmem:[%s7 + $0x360] sm:$0xff]
    %v2450 = vld [vmem:[%s7 + $0x368] sm:$0xff]
    %v2451 = vld [vmem:[%s7 + $0x370] sm:$0xff]
    %v2452 = vld [vmem:[%s7 + $0x378] sm:$0xff]
    %v2453 = vld [vmem:[%s7 + $0x380] sm:$0xff]
    %v2454 = vld [vmem:[%s7 + $0x388] sm:$0xff]
    %v2455 = vld [vmem:[%s7 + $0x390] sm:$0xff]
    %v2456 = vld [vmem:[%s7 + $0x398] sm:$0xff]
    %v2457 = vld [vmem:[%s7 + $0x3a0] sm:$0xff]
    %v2458 = vld [vmem:[%s7 + $0x3a8] sm:$0xff]
    %v2459 = vld [vmem:[%s7 + $0x3b0] sm:$0xff]
    %v2460 = vld [vmem:[%s7 + $0x3b8] sm:$0xff]
    %v2461 = vld [vmem:[%s7 + $0x3c0] sm:$0xff]
    %v2462 = vld [vmem:[%s7 + $0x3c8] sm:$0xff]
    %v2463 = vld [vmem:[%s7 + $0x3d0] sm:$0xff]
    %v2464 = vld [vmem:[%s7 + $0x3d8] sm:$0xff]
    %v2465 = vld [vmem:[%s7 + $0x3e0] sm:$0xff]
    %v2466 = vld [vmem:[%s7 + $0x3e8] sm:$0xff]
    %v2467 = vld [vmem:[%s7 + $0x3f0] sm:$0xff]
    %v2468 = vld [vmem:[%s7 + $0x3f8] sm:$0xff]
    %2469 = vmatpush.msra.mxu0 %v2356
    %2470 = vmatpush.msra.mxu0 %v2355
    %2471 = vmatpush.msra.mxu0 %v2354
    %2472 = vmatpush.msra.mxu0 %v2353
    %2473 = vmatpush.msra.mxu0 %v2352
    %2474 = vmatpush.msra.mxu0 %v2351
    %2475 = vmatpush.msra.mxu0 %v2350
    %2476 = vmatpush.msra.mxu0 %v2349
    %2477 = vmatpush.msra.mxu0 %v2348
    %2478 = vmatpush.msra.mxu0 %v2347
    %2479 = vmatpush.msra.mxu0 %v2346
    %2480 = vmatpush.msra.mxu0 %v2345
    %2481 = vmatpush.msra.mxu0 %v2344
    %2482 = vmatpush.msra.mxu0 %v2343
    %2483 = vmatpush.msra.mxu0 %v2342
    %2484 = vmatpush.msra.mxu0 %v2341
    %2485 = vmatmul.f32.gmra.mxu0 %v2333
    %v2486 = vpop.f32.mrf.mxu0
    %v2487 = vadd.f32 0.0, %v2486
    %2488 = vdwg.mxu0
    %2489 = vmatpush.msra.mxu0 %v2372
    %2490 = vmatpush.msra.mxu0 %v2371
    %2491 = vmatpush.msra.mxu0 %v2370
    %2492 = vmatpush.msra.mxu0 %v2369
    %2493 = vmatpush.msra.mxu0 %v2368
    %2494 = vmatpush.msra.mxu0 %v2367
    %2495 = vmatpush.msra.mxu0 %v2366
    %2496 = vmatpush.msra.mxu0 %v2365
    %2497 = vmatpush.msra.mxu0 %v2364
    %2498 = vmatpush.msra.mxu0 %v2363
    %2499 = vmatpush.msra.mxu0 %v2362
    %2500 = vmatpush.msra.mxu0 %v2361
    %2501 = vmatpush.msra.mxu0 %v2360
    %2502 = vmatpush.msra.mxu0 %v2359
    %2503 = vmatpush.msra.mxu0 %v2358
    %2504 = vmatpush.msra.mxu0 %v2357
    %2505 = vmatmul.f32.gmra.mxu0 %v2334
    %v2506 = vpop.f32.mrf.mxu0
    %v2507 = vadd.f32 %v2487, %v2506
    %2508 = vdwg.mxu0
    %2509 = vmatpush.msra.mxu0 %v2388
    %2510 = vmatpush.msra.mxu0 %v2387
    %2511 = vmatpush.msra.mxu0 %v2386
    %2512 = vmatpush.msra.mxu0 %v2385
    %2513 = vmatpush.msra.mxu0 %v2384
    %2514 = vmatpush.msra.mxu0 %v2383
    %2515 = vmatpush.msra.mxu0 %v2382
    %2516 = vmatpush.msra.mxu0 %v2381
    %2517 = vmatpush.msra.mxu0 %v2380
    %2518 = vmatpush.msra.mxu0 %v2379
    %2519 = vmatpush.msra.mxu0 %v2378
    %2520 = vmatpush.msra.mxu0 %v2377
    %2521 = vmatpush.msra.mxu0 %v2376
    %2522 = vmatpush.msra.mxu0 %v2375
    %2523 = vmatpush.msra.mxu0 %v2374
    %2524 = vmatpush.msra.mxu0 %v2373
    %2525 = vmatmul.f32.gmra.mxu0 %v2335
    %v2526 = vpop.f32.mrf.mxu0
    %v2527 = vadd.f32 %v2507, %v2526
    %2528 = vdwg.mxu0
    %2529 = vmatpush.msra.mxu0 %v2404
    %2530 = vmatpush.msra.mxu0 %v2403
    %2531 = vmatpush.msra.mxu0 %v2402
    %2532 = vmatpush.msra.mxu0 %v2401
    %2533 = vmatpush.msra.mxu0 %v2400
    %2534 = vmatpush.msra.mxu0 %v2399
    %2535 = vmatpush.msra.mxu0 %v2398
    %2536 = vmatpush.msra.mxu0 %v2397
    %2537 = vmatpush.msra.mxu0 %v2396
    %2538 = vmatpush.msra.mxu0 %v2395
    %2539 = vmatpush.msra.mxu0 %v2394
    %2540 = vmatpush.msra.mxu0 %v2393
    %2541 = vmatpush.msra.mxu0 %v2392
    %2542 = vmatpush.msra.mxu0 %v2391
    %2543 = vmatpush.msra.mxu0 %v2390
    %2544 = vmatpush.msra.mxu0 %v2389
    %2545 = vmatmul.f32.gmra.mxu0 %v2336
    %v2546 = vpop.f32.mrf.mxu0
    %v2547 = vadd.f32 %v2527, %v2546
    %2548 = vdwg.mxu0
    %2549 = vmatpush.msra.mxu0 %v2420
    %2550 = vmatpush.msra.mxu0 %v2419
    %2551 = vmatpush.msra.mxu0 %v2418
    %2552 = vmatpush.msra.mxu0 %v2417
    %2553 = vmatpush.msra.mxu0 %v2416
    %2554 = vmatpush.msra.mxu0 %v2415
    %2555 = vmatpush.msra.mxu0 %v2414
    %2556 = vmatpush.msra.mxu0 %v2413
    %2557 = vmatpush.msra.mxu0 %v2412
    %2558 = vmatpush.msra.mxu0 %v2411
    %2559 = vmatpush.msra.mxu0 %v2410
    %2560 = vmatpush.msra.mxu0 %v2409
    %2561 = vmatpush.msra.mxu0 %v2408
    %2562 = vmatpush.msra.mxu0 %v2407
    %2563 = vmatpush.msra.mxu0 %v2406
    %2564 = vmatpush.msra.mxu0 %v2405
    %2565 = vmatmul.f32.gmra.mxu0 %v2337
    %v2566 = vpop.f32.mrf.mxu0
    %v2567 = vadd.f32 %v2547, %v2566
    %2568 = vdwg.mxu0
    %2569 = vmatpush.msra.mxu0 %v2436
    %2570 = vmatpush.msra.mxu0 %v2435
    %2571 = vmatpush.msra.mxu0 %v2434
    %2572 = vmatpush.msra.mxu0 %v2433
    %2573 = vmatpush.msra.mxu0 %v2432
    %2574 = vmatpush.msra.mxu0 %v2431
    %2575 = vmatpush.msra.mxu0 %v2430
    %2576 = vmatpush.msra.mxu0 %v2429
    %2577 = vmatpush.msra.mxu0 %v2428
    %2578 = vmatpush.msra.mxu0 %v2427
    %2579 = vmatpush.msra.mxu0 %v2426
    %2580 = vmatpush.msra.mxu0 %v2425
    %2581 = vmatpush.msra.mxu0 %v2424
    %2582 = vmatpush.msra.mxu0 %v2423
    %2583 = vmatpush.msra.mxu0 %v2422
    %2584 = vmatpush.msra.mxu0 %v2421
    %2585 = vmatmul.f32.gmra.mxu0 %v2338
    %v2586 = vpop.f32.mrf.mxu0
    %v2587 = vadd.f32 %v2567, %v2586
    %2588 = vdwg.mxu0
    %2589 = vmatpush.msra.mxu0 %v2452
    %2590 = vmatpush.msra.mxu0 %v2451
    %2591 = vmatpush.msra.mxu0 %v2450
    %2592 = vmatpush.msra.mxu0 %v2449
    %2593 = vmatpush.msra.mxu0 %v2448
    %2594 = vmatpush.msra.mxu0 %v2447
    %2595 = vmatpush.msra.mxu0 %v2446
    %2596 = vmatpush.msra.mxu0 %v2445
    %2597 = vmatpush.msra.mxu0 %v2444
    %2598 = vmatpush.msra.mxu0 %v2443
    %2599 = vmatpush.msra.mxu0 %v2442
    %2600 = vmatpush.msra.mxu0 %v2441
    %2601 = vmatpush.msra.mxu0 %v2440
    %2602 = vmatpush.msra.mxu0 %v2439
    %2603 = vmatpush.msra.mxu0 %v2438
    %2604 = vmatpush.msra.mxu0 %v2437
    %2605 = vmatmul.f32.gmra.mxu0 %v2339
    %v2606 = vpop.f32.mrf.mxu0
    %v2607 = vadd.f32 %v2587, %v2606
    %2608 = vdwg.mxu0
    %2609 = vmatpush.msra.mxu0 %v2468
    %2610 = vmatpush.msra.mxu0 %v2467
    %2611 = vmatpush.msra.mxu0 %v2466
    %2612 = vmatpush.msra.mxu0 %v2465
    %2613 = vmatpush.msra.mxu0 %v2464
    %2614 = vmatpush.msra.mxu0 %v2463
    %2615 = vmatpush.msra.mxu0 %v2462
    %2616 = vmatpush.msra.mxu0 %v2461
    %2617 = vmatpush.msra.mxu0 %v2460
    %2618 = vmatpush.msra.mxu0 %v2459
    %2619 = vmatpush.msra.mxu0 %v2458
    %2620 = vmatpush.msra.mxu0 %v2457
    %2621 = vmatpush.msra.mxu0 %v2456
    %2622 = vmatpush.msra.mxu0 %v2455
    %2623 = vmatpush.msra.mxu0 %v2454
    %2624 = vmatpush.msra.mxu0 %v2453
    %2625 = vmatmul.f32.gmra.mxu0 %v2340
    %v2626 = vpop.f32.mrf.mxu0
    %v2627 = vadd.f32 %v2607, %v2626
    %2628 = vdwg.mxu0
    %v2629 = vadd.f32 %v1911, 1.0
    %v2630 = vmul.f32 %v2627, %v2629
    %v2631 = vadd.f32 %v2630, %v1851
    %v2632 = vmax.f32 %v2631, 0.0
    %2634 = vrot.lane.b32.xlu0 %v2632, 32
    %v2635 = vpop.permute.xlu0 %2634
    %v2637 = vsel %vm949, %v2632, %v2635
    %2639 = vrot.lane.b32.xlu0 %v2637, 64
    %v2640 = vpop.permute.xlu0 %2639
    %v2642 = vsel %vm2169, %v2637, %v2640
    %v2643 = vmul.f32 %v1971, %v2642
    %v2644 = vmul.f32 %v2031, %v2642
    %v2645 = vld [vmem:[#allocation9] sm:$0xff]
    %v2646 = vld [vmem:[#allocation9 + $0x8] sm:$0xff]
    %v2647 = vld [vmem:[#allocation9 + $0x10] sm:$0xff]
    %v2648 = vld [vmem:[#allocation9 + $0x18] sm:$0xff]
    %v2649 = vld [vmem:[#allocation9 + $0x20] sm:$0xff]
    %v2650 = vld [vmem:[#allocation9 + $0x28] sm:$0xff]
    %v2651 = vld [vmem:[#allocation9 + $0x30] sm:$0xff]
    %v2652 = vld [vmem:[#allocation9 + $0x38] sm:$0xff]
    %v2653 = vld [vmem:[#allocation9 + $0x40] sm:$0xff]
    %v2654 = vld [vmem:[#allocation9 + $0x48] sm:$0xff]
    %v2655 = vld [vmem:[#allocation9 + $0x50] sm:$0xff]
    %v2656 = vld [vmem:[#allocation9 + $0x58] sm:$0xff]
    %v2657 = vld [vmem:[#allocation9 + $0x60] sm:$0xff]
    %v2658 = vld [vmem:[#allocation9 + $0x68] sm:$0xff]
    %v2659 = vld [vmem:[#allocation9 + $0x70] sm:$0xff]
    %v2660 = vld [vmem:[#allocation9 + $0x78] sm:$0xff]
    %v2661 = vld [vmem:[#allocation9 + $0x80] sm:$0xff]
    %v2662 = vld [vmem:[#allocation9 + $0x88] sm:$0xff]
    %v2663 = vld [vmem:[#allocation9 + $0x90] sm:$0xff]
    %v2664 = vld [vmem:[#allocation9 + $0x98] sm:$0xff]
    %v2665 = vld [vmem:[#allocation9 + $0xa0] sm:$0xff]
    %v2666 = vld [vmem:[#allocation9 + $0xa8] sm:$0xff]
    %v2667 = vld [vmem:[#allocation9 + $0xb0] sm:$0xff]
    %v2668 = vld [vmem:[#allocation9 + $0xb8] sm:$0xff]
    %v2669 = vld [vmem:[#allocation9 + $0xc0] sm:$0xff]
    %v2670 = vld [vmem:[#allocation9 + $0xc8] sm:$0xff]
    %v2671 = vld [vmem:[#allocation9 + $0xd0] sm:$0xff]
    %v2672 = vld [vmem:[#allocation9 + $0xd8] sm:$0xff]
    %v2673 = vld [vmem:[#allocation9 + $0xe0] sm:$0xff]
    %v2674 = vld [vmem:[#allocation9 + $0xe8] sm:$0xff]
    %v2675 = vld [vmem:[#allocation9 + $0xf0] sm:$0xff]
    %v2676 = vld [vmem:[#allocation9 + $0xf8] sm:$0xff]
    %2677 = vmatpush.msra.mxu0 %v2660
    %2678 = vmatpush.msra.mxu0 %v2659
    %2679 = vmatpush.msra.mxu0 %v2658
    %2680 = vmatpush.msra.mxu0 %v2657
    %2681 = vmatpush.msra.mxu0 %v2656
    %2682 = vmatpush.msra.mxu0 %v2655
    %2683 = vmatpush.msra.mxu0 %v2654
    %2684 = vmatpush.msra.mxu0 %v2653
    %2685 = vmatpush.msra.mxu0 %v2652
    %2686 = vmatpush.msra.mxu0 %v2651
    %2687 = vmatpush.msra.mxu0 %v2650
    %2688 = vmatpush.msra.mxu0 %v2649
    %2689 = vmatpush.msra.mxu0 %v2648
    %2690 = vmatpush.msra.mxu0 %v2647
    %2691 = vmatpush.msra.mxu0 %v2646
    %2692 = vmatpush.msra.mxu0 %v2645
    %2693 = vmatmul.f32.gmra.mxu0 %v2643
    %v2694 = vpop.f32.mrf.mxu0
    %v2695 = vadd.f32 0.0, %v2694
    %2696 = vdwg.mxu0
    %2697 = vmatpush.msra.mxu0 %v2676
    %2698 = vmatpush.msra.mxu0 %v2675
    %2699 = vmatpush.msra.mxu0 %v2674
    %2700 = vmatpush.msra.mxu0 %v2673
    %2701 = vmatpush.msra.mxu0 %v2672
    %2702 = vmatpush.msra.mxu0 %v2671
    %2703 = vmatpush.msra.mxu0 %v2670
    %2704 = vmatpush.msra.mxu0 %v2669
    %2705 = vmatpush.msra.mxu0 %v2668
    %2706 = vmatpush.msra.mxu0 %v2667
    %2707 = vmatpush.msra.mxu0 %v2666
    %2708 = vmatpush.msra.mxu0 %v2665
    %2709 = vmatpush.msra.mxu0 %v2664
    %2710 = vmatpush.msra.mxu0 %v2663
    %2711 = vmatpush.msra.mxu0 %v2662
    %2712 = vmatpush.msra.mxu0 %v2661
    %2713 = vmatmul.f32.gmra.mxu0 %v2644
    %v2714 = vpop.f32.mrf.mxu0
    %v2715 = vadd.f32 %v2695, %v2714
    %2716 = vdwg.mxu0
    %v2717 = vadd.f32 %v2151, 1.0
    %v2718 = vmul.f32 %v2715, %v2717
    %v2719 = vadd.f32 %v2718, %v2091
    %2720 = vst [vmem:[%s9] sm:$0xff] %v2719
    // Predicated region
    $region58: #{hypernet_forward.1} parent=1 // pred_check
      _
    $region59: #{hypernet_forward.1} parent=1 // pred_check_branch
      %2722 = sbr.rel (0) target = $region61
    $region60: #{hypernet_forward.1} parent=1 // pred_region
      _
    $region61: #{hypernet_forward.1} parent=1 // pred_fallthru
      _
    // Predicated region
    $region62: #{hypernet_forward.1} parent=1 // pred_check
      _
    $region63: #{hypernet_forward.1} parent=1 // pred_check_branch
      %2724 = sbr.rel (0) target = $region65
    $region64: #{hypernet_forward.1} parent=1 // pred_region
      _
    $region65: #{hypernet_forward.1} parent=1 // pred_fallthru
      _
    %2725 = vsyncpa [#allocation3], 1
    %2726 = vsyncpa [#allocation5], 1
    %2727 = vsyncpa [#allocation8], 1

</llo_original>
